<compile_context>
chip_gen: v5e
topology: v5e:2x2
jax: 0.10.0
libtpu: 0.0.40
codegen_flags: <defaults>
</compile_context>

<pallas_src>
import jax
import jax.numpy as jnp
from jax.experimental import pallas as pl
from jax.experimental.pallas import tpu as pltpu


# ---------------------------------------------------------------------------
# Pallas kernels
# ---------------------------------------------------------------------------

def _mm_stats_kernel(p_ref, w_ref, o_ref, s_ref, q_ref):
    """Lane-dense matmul tile + fused per-channel sum / sum-of-squares.

    p_ref: (tm, K) bf16 patches; w_ref: (K, Cpad) bf16 weight (VMEM resident);
    o_ref: (tm, Cpad) f32 conv output; s_ref/q_ref: (1, 8, Cpad) per-tile
    column statistics (all 8 sublane rows carry the same value).
    """
    acc = jnp.dot(p_ref[...], w_ref[...], preferred_element_type=jnp.float32)
    o_ref[...] = acc
    cs = jnp.sum(acc, axis=0, keepdims=True)           # (1, Cpad)
    cq = jnp.sum(acc * acc, axis=0, keepdims=True)     # (1, Cpad)
    s_ref[...] = jnp.broadcast_to(cs[None], s_ref.shape)
    q_ref[...] = jnp.broadcast_to(cq[None], q_ref.shape)


def _mm_tanh_kernel(p_ref, w_ref, o_ref):
    """Final layer: matmul tile with tanh fused into the store path."""
    acc = jnp.dot(p_ref[...], w_ref[...], preferred_element_type=jnp.float32)
    o_ref[...] = jnp.tanh(acc)


def _affine_relu_kernel(x_ref, s_ref, b_ref, o_ref):
    """y = relu(x * scale + shift); scale/shift fold BN gamma/beta/stats."""
    o_ref[...] = jnp.maximum(x_ref[...] * s_ref[...] + b_ref[...], 0.0)


# ---------------------------------------------------------------------------
# Pallas wrappers
# ---------------------------------------------------------------------------

def _round_up(x, m):
    return ((x + m - 1) // m) * m


def _pick_tm(m, cap=512):
    """Largest multiple-of-8 divisor of m that is <= cap (or m itself)."""
    if m <= cap:
        return m
    for t in range(cap, 7, -8):
        if m % t == 0:
            return t
    return m


def _conv_matmul(patches, w_mat, cpad, *, with_stats):
    """One Pallas matmul: patches (M, K) @ w_mat (K, cpad).

    with_stats=True  -> (out, col_sum, col_sumsq)   (BatchNorm layers)
    with_stats=False -> tanh(out)                   (final layer)
    """
    M, K = patches.shape
    tm = _pick_tm(M)
    nt = M // tm
    p_spec = pl.BlockSpec((tm, K), lambda i: (i, 0))
    w_spec = pl.BlockSpec((K, cpad), lambda i: (0, 0))     # resident weight
    o_spec = pl.BlockSpec((tm, cpad), lambda i: (i, 0))    # lane-dense store
    cp = pltpu.CompilerParams(dimension_semantics=("parallel",))

    if not with_stats:
        return pl.pallas_call(
            _mm_tanh_kernel,
            out_shape=jax.ShapeDtypeStruct((M, cpad), jnp.float32),
            grid=(nt,),
            in_specs=[p_spec, w_spec],
            out_specs=o_spec,
            compiler_params=cp,
        )(patches, w_mat)

    stat_spec = pl.BlockSpec((1, 8, cpad), lambda i: (i, 0, 0))
    out, s, q = pl.pallas_call(
        _mm_stats_kernel,
        out_shape=(
            jax.ShapeDtypeStruct((M, cpad), jnp.float32),
            jax.ShapeDtypeStruct((nt, 8, cpad), jnp.float32),
            jax.ShapeDtypeStruct((nt, 8, cpad), jnp.float32),
        ),
        grid=(nt,),
        in_specs=[p_spec, w_spec],
        out_specs=(o_spec, stat_spec, stat_spec),
        compiler_params=cp,
    )(patches, w_mat)
    return out, s[:, 0, :].sum(axis=0), q[:, 0, :].sum(axis=0)


def _affine_relu(x2d, scale_row, shift_row):
    """x2d: (M, C) f32, scale/shift: (1, C) f32, C a multiple of 128."""
    M, C = x2d.shape
    tm = _pick_tm(M)
    return pl.pallas_call(
        _affine_relu_kernel,
        out_shape=jax.ShapeDtypeStruct((M, C), jnp.float32),
        grid=(M // tm,),
        in_specs=[pl.BlockSpec((tm, C), lambda i: (i, 0)),
                  pl.BlockSpec((1, C), lambda i: (0, 0)),
                  pl.BlockSpec((1, C), lambda i: (0, 0))],
        out_specs=pl.BlockSpec((tm, C), lambda i: (i, 0)),
        compiler_params=pltpu.CompilerParams(dimension_semantics=("parallel",)),
    )(x2d, scale_row, shift_row)


# ---------------------------------------------------------------------------
# Glue (pure data movement / tiny reductions in plain JAX)
# ---------------------------------------------------------------------------

def _stride2_patches(y):
    """(N, H, W, C) -> (N*H*W, 9*C): shared 3x3 window around each input pixel
    (covers the 2x2 tap subsets of all 4 output phases; no dilation zeros)."""
    N, H, W, C = y.shape
    yp = jnp.pad(y, ((0, 0), (1, 1), (1, 1), (0, 0)))
    cols = [yp[:, dy:dy + H, dx:dx + W, :] for dy in range(3) for dx in range(3)]
    return jnp.concatenate(cols, axis=-1).reshape(N * H * W, 9 * C)


def _phase_weight(w_t, cpad):
    """ConvTranspose2d(k=4, s=2, p=1) weight (Cin, Cout, 4, 4) ->
    (9*Cin, cpad) matrix mapping 3x3 window patches to the 4 output phases.

    Output (2y+py, 2x+px) uses padded input (y+dy, x+dx) with tap
    ky = py + 3 - 2*dy, kx = px + 3 - 2*dx (zero block when out of range).
    """
    Cin, Cout, k, _ = w_t.shape
    rows = []
    for dy in range(3):
        for dx in range(3):
            blocks = []
            for py in range(2):
                for px in range(2):
                    ky = py + 3 - 2 * dy
                    kx = px + 3 - 2 * dx
                    if 0 <= ky < k and 0 <= kx < k:
                        blocks.append(w_t[:, :, ky, kx])
                    else:
                        blocks.append(jnp.zeros((Cin, Cout), w_t.dtype))
            rows.append(jnp.concatenate(blocks, axis=1))    # (Cin, 4*Cout)
    w_mat = jnp.concatenate(rows, axis=0)                   # (9*Cin, 4*Cout)
    return jnp.pad(w_mat, ((0, 0), (0, cpad - 4 * Cout)))   # lane-dense pad


def _depth_to_space(y_flat, N, H, W, C):
    """(N*H*W, 4*C) with column layout (py, px, c) -> (N, 2H, 2W, C)."""
    y = y_flat.reshape(N, H, W, 2, 2, C)
    y = jnp.transpose(y, (0, 1, 3, 2, 4, 5))
    return y.reshape(N, 2 * H, 2 * W, C)


def _bn_scale_shift(col_sum, col_sumsq, gamma, beta, count, groups, cpad, eps):
    """Fold training-mode BatchNorm (biased batch var) into column scale/shift
    vectors matching the conv kernel's (group, channel) column layout."""
    C = gamma.shape[0]
    mean = col_sum[:groups * C].reshape(groups, C).sum(0) / count
    ex2 = col_sumsq[:groups * C].reshape(groups, C).sum(0) / count
    var = ex2 - mean * mean
    scale = gamma / jnp.sqrt(var + eps)
    shift = beta - mean * scale
    srow = jnp.pad(jnp.tile(scale, groups), (0, cpad - groups * C)).reshape(1, cpad)
    brow = jnp.pad(jnp.tile(shift, groups), (0, cpad - groups * C)).reshape(1, cpad)
    return srow, brow


# ---------------------------------------------------------------------------
# Generator forward
# ---------------------------------------------------------------------------

def init_generator_params(key, nz, ngf, nc):
    dims = [(nz, ngf * 8), (ngf * 8, ngf * 4), (ngf * 4, ngf * 2),
            (ngf * 2, ngf), (ngf, nc)]
    params = {}
    keys = jax.random.split(key, len(dims))
    for li, ((cin, cout), k) in enumerate(zip(dims, keys)):
        params[f"w{li}"] = 0.02 * jax.random.normal(k, (cin, cout, 4, 4), jnp.float32)
        if li < 4:  # BatchNorm affine params (default init: gamma=1, beta=0)
            params[f"gamma{li}"] = jnp.ones((cout,), jnp.float32)
            params[f"beta{li}"] = jnp.zeros((cout,), jnp.float32)
    return params


def generator_forward(x_nchw, params, eps=1e-5):
    """x_nchw: (N, nz, 1, 1) -> (N, nc, 64, 64); training-mode BatchNorm."""
    N, nz = x_nchw.shape[0], x_nchw.shape[1]

    # ---- layer 0: ConvTranspose(nz, 8*ngf, 4, 1, 0) == one matmul ----
    w0 = params["w0"]                                   # (nz, C0, 4, 4)
    C0 = w0.shape[1]
    cpad = _round_up(16 * C0, 128)
    w0_mat = jnp.pad(jnp.transpose(w0, (0, 2, 3, 1)).reshape(nz, 16 * C0),
                     ((0, 0), (0, cpad - 16 * C0)))
    x2 = x_nchw.reshape(N, nz).astype(jnp.bfloat16)
    out, s, q = _conv_matmul(x2, w0_mat.astype(jnp.bfloat16), cpad, with_stats=True)
    srow, brow = _bn_scale_shift(s, q, params["gamma0"], params["beta0"],
                                 count=N * 16, groups=16, cpad=cpad, eps=eps)
    act = _affine_relu(out, srow, brow)[:, :16 * C0].reshape(N, 4, 4, C0)

    # ---- layers 1-3: ConvTranspose(k=4, s=2, p=1) + BN + ReLU ----
    for li in range(1, 4):
        w = params[f"w{li}"]
        Cout = w.shape[1]
        Nb, H, Wd, _ = act.shape
        cpad = _round_up(4 * Cout, 128)
        patches = _stride2_patches(act.astype(jnp.bfloat16))
        w_mat = _phase_weight(w, cpad).astype(jnp.bfloat16)
        out, s, q = _conv_matmul(patches, w_mat, cpad, with_stats=True)
        srow, brow = _bn_scale_shift(s, q, params[f"gamma{li}"], params[f"beta{li}"],
                                     count=Nb * H * Wd * 4, groups=4,
                                     cpad=cpad, eps=eps)
        y = _affine_relu(out, srow, brow)[:, :4 * Cout]
        act = _depth_to_space(y, Nb, H, Wd, Cout)

    # ---- layer 4: ConvTranspose(k=4, s=2, p=1) + Tanh (fused in kernel) ----
    w = params["w4"]
    Cout = w.shape[1]
    Nb, H, Wd, _ = act.shape
    cpad = _round_up(4 * Cout, 128)
    patches = _stride2_patches(act.astype(jnp.bfloat16))
    w_mat = _phase_weight(w, cpad).astype(jnp.bfloat16)
    out = _conv_matmul(patches, w_mat, cpad, with_stats=False)
    img = _depth_to_space(out[:, :4 * Cout], Nb, H, Wd, Cout)   # NHWC
    return jnp.transpose(img, (0, 3, 1, 2))                     # -> NCHW


if __name__ == "__main__":
    nz, ngf, nc, batch = 8, 8, 3, 2

    key = jax.random.PRNGKey(0)
    k_params, k_x = jax.random.split(key)
    params = init_generator_params(k_params, nz, ngf, nc)
    x = jax.random.normal(k_x, (batch, nz, 1, 1), jnp.float32)

    fwd = jax.jit(generator_forward)
    out = jax.block_until_ready(fwd(x, params))

    assert out.shape == (batch, nc, 64, 64), out.shape
    assert out.dtype == jnp.float32
    assert bool(jnp.all(jnp.isfinite(out)))
    assert bool(jnp.all(jnp.abs(out) <= 1.0))        # tanh output range
    print("KERNEL_OK")
</pallas_src>

<mosaic_0001>
module attributes {stable_mosaic.version = 11 : i64} {
  func.func @_mm_stats_kernel(%arg0: i32, %arg1: memref<2x8xbf16, #tpu.memory_space<vmem>>, %arg2: memref<8x1024xbf16, #tpu.memory_space<vmem>>, %arg3: memref<2x1024xf32, #tpu.memory_space<vmem>>, %arg4: memref<1x8x1024xf32, #tpu.memory_space<vmem>>, %arg5: memref<1x8x1024xf32, #tpu.memory_space<vmem>>) attributes {dimension_semantics = [#tpu.dimension_semantics<parallel>], iteration_bounds = array<i64: 1>, scalar_prefetch = 0 : i64, scratch_operands = 0 : i64, tpu.core_type = #tpu.core_type<tc>, window_params = [{transform_indices = @transform_0, window_bounds = array<i64: 2, 8>}, {pipeline_mode = #tpu.pipeline_mode<synchronous>, transform_indices = @transform_1, window_bounds = array<i64: 8, 1024>}, {transform_indices = @transform_2, window_bounds = array<i64: 2, 1024>}, {transform_indices = @transform_3, window_bounds = array<i64: 1, 8, 1024>}, {transform_indices = @transform_4, window_bounds = array<i64: 1, 8, 1024>}]} {
    %c0 = arith.constant 0 : index
    %c0_0 = arith.constant 0 : index
    %0 = vector.load %arg1[%c0, %c0_0] : memref<2x8xbf16, #tpu.memory_space<vmem>>, vector<2x8xbf16>
    %c0_1 = arith.constant 0 : index
    %c0_2 = arith.constant 0 : index
    %1 = vector.load %arg2[%c0_1, %c0_2] : memref<8x1024xbf16, #tpu.memory_space<vmem>>, vector<8x1024xbf16>
    %cst = arith.constant dense<0.000000e+00> : vector<2x1024xf32>
    %2 = tpu.matmul %0, %1, %cst {dimension_numbers = #tpu.dot_dimension_numbers<[1], [0], [0], [1], [0, 0, 1, 1], [], []>} : vector<2x8xbf16>, vector<8x1024xbf16>, vector<2x1024xf32> -> vector<2x1024xf32>
    %c0_3 = arith.constant 0 : index
    %c0_4 = arith.constant 0 : index
    %3 = vector.load %arg3[%c0_3, %c0_4] : memref<2x1024xf32, #tpu.memory_space<vmem>>, vector<2x1024xf32>
    tpu.vector_store %arg3[%c0_3, %c0_4], %2 {strides = array<i32>} : memref<2x1024xf32, #tpu.memory_space<vmem>>, vector<2x1024xf32>,
    %cst_5 = arith.constant dense<0.000000e+00> : vector<1024xf32>
    %4 = vector.multi_reduction <add>, %2, %cst_5 [0] : vector<2x1024xf32> to vector<1024xf32>
    %5 = vector.shape_cast %4 : vector<1024xf32> to vector<1x1024xf32>
    %6 = arith.mulf %2, %2 : vector<2x1024xf32>
    %cst_6 = arith.constant dense<0.000000e+00> : vector<1024xf32>
    %7 = vector.multi_reduction <add>, %6, %cst_6 [0] : vector<2x1024xf32> to vector<1024xf32>
    %8 = vector.shape_cast %7 : vector<1024xf32> to vector<1x1024xf32>
    %9 = vector.shape_cast %5 : vector<1x1024xf32> to vector<1x1x1024xf32>
    %10 = vector.shape_cast %9 : vector<1x1x1024xf32> to vector<1x1x1024xf32>
    %11 = vector.broadcast %10 : vector<1x1x1024xf32> to vector<1x8x1024xf32>
    %c0_7 = arith.constant 0 : index
    %c0_8 = arith.constant 0 : index
    %c0_9 = arith.constant 0 : index
    %12 = vector.load %arg4[%c0_7, %c0_8, %c0_9] : memref<1x8x1024xf32, #tpu.memory_space<vmem>>, vector<1x8x1024xf32>
    tpu.vector_store %arg4[%c0_7, %c0_8, %c0_9], %11 {strides = array<i32>} : memref<1x8x1024xf32, #tpu.memory_space<vmem>>, vector<1x8x1024xf32>,
    %13 = vector.shape_cast %8 : vector<1x1024xf32> to vector<1x1x1024xf32>
    %14 = vector.shape_cast %13 : vector<1x1x1024xf32> to vector<1x1x1024xf32>
    %15 = vector.broadcast %14 : vector<1x1x1024xf32> to vector<1x8x1024xf32>
    %c0_10 = arith.constant 0 : index
    %c0_11 = arith.constant 0 : index
    %c0_12 = arith.constant 0 : index
    %16 = vector.load %arg5[%c0_10, %c0_11, %c0_12] : memref<1x8x1024xf32, #tpu.memory_space<vmem>>, vector<1x8x1024xf32>
    tpu.vector_store %arg5[%c0_10, %c0_11, %c0_12], %15 {strides = array<i32>} : memref<1x8x1024xf32, #tpu.memory_space<vmem>>, vector<1x8x1024xf32>,
    return
  }
  func.func @transform_0(%arg0: i32) -> (i32, i32) {
    %c0_i32 = arith.constant 0 : i32
    %c0_i32_0 = arith.constant 0 : i32
    return %arg0, %c0_i32 : i32, i32
  }
  func.func @transform_1(%arg0: i32) -> (i32, i32) {
    %c0_i32 = arith.constant 0 : i32
    %c0_i32_0 = arith.constant 0 : i32
    %c0_i32_1 = arith.constant 0 : i32
    return %c0_i32, %c0_i32_0 : i32, i32
  }
  func.func @transform_2(%arg0: i32) -> (i32, i32) {
    %c0_i32 = arith.constant 0 : i32
    %c0_i32_0 = arith.constant 0 : i32
    return %arg0, %c0_i32 : i32, i32
  }
  func.func @transform_3(%arg0: i32) -> (i32, i32, i32) {
    %c0_i32 = arith.constant 0 : i32
    %c0_i32_0 = arith.constant 0 : i32
    %c0_i32_1 = arith.constant 0 : i32
    return %arg0, %c0_i32, %c0_i32_0 : i32, i32, i32
  }
  func.func @transform_4(%arg0: i32) -> (i32, i32, i32) {
    %c0_i32 = arith.constant 0 : i32
    %c0_i32_0 = arith.constant 0 : i32
    %c0_i32_1 = arith.constant 0 : i32
    return %arg0, %c0_i32, %c0_i32_0 : i32, i32, i32
  }
}

module attributes {stable_mosaic.version = 11 : i64} {
  func.func @_affine_relu_kernel(%arg0: i32, %arg1: memref<2x1024xf32, #tpu.memory_space<vmem>>, %arg2: memref<1x1024xf32, #tpu.memory_space<vmem>>, %arg3: memref<1x1024xf32, #tpu.memory_space<vmem>>, %arg4: memref<2x1024xf32, #tpu.memory_space<vmem>>) attributes {dimension_semantics = [#tpu.dimension_semantics<parallel>], iteration_bounds = array<i64: 1>, scalar_prefetch = 0 : i64, scratch_operands = 0 : i64, tpu.core_type = #tpu.core_type<tc>, window_params = [{transform_indices = @transform_0, window_bounds = array<i64: 2, 1024>}, {pipeline_mode = #tpu.pipeline_mode<synchronous>, transform_indices = @transform_1, window_bounds = array<i64: 1, 1024>}, {pipeline_mode = #tpu.pipeline_mode<synchronous>, transform_indices = @transform_2, window_bounds = array<i64: 1, 1024>}, {transform_indices = @transform_3, window_bounds = array<i64: 2, 1024>}]} {
    %c0 = arith.constant 0 : index
    %c0_0 = arith.constant 0 : index
    %0 = vector.load %arg1[%c0, %c0_0] : memref<2x1024xf32, #tpu.memory_space<vmem>>, vector<2x1024xf32>
    %c0_1 = arith.constant 0 : index
    %c0_2 = arith.constant 0 : index
    %1 = vector.load %arg2[%c0_1, %c0_2] : memref<1x1024xf32, #tpu.memory_space<vmem>>, vector<1x1024xf32>
    %2 = vector.broadcast %1 : vector<1x1024xf32> to vector<2x1024xf32>
    %3 = arith.mulf %0, %2 : vector<2x1024xf32>
    %c0_3 = arith.constant 0 : index
    %c0_4 = arith.constant 0 : index
    %4 = vector.load %arg3[%c0_3, %c0_4] : memref<1x1024xf32, #tpu.memory_space<vmem>>, vector<1x1024xf32>
    %5 = vector.broadcast %4 : vector<1x1024xf32> to vector<2x1024xf32>
    %6 = arith.addf %3, %5 : vector<2x1024xf32>
    %cst = arith.constant 0.000000e+00 : f32
    %7 = vector.broadcast %cst : f32 to vector<2x1024xf32>
    %8 = arith.maximumf %6, %7 : vector<2x1024xf32>
    %c0_5 = arith.constant 0 : index
    %c0_6 = arith.constant 0 : index
    %9 = vector.load %arg4[%c0_5, %c0_6] : memref<2x1024xf32, #tpu.memory_space<vmem>>, vector<2x1024xf32>
    tpu.vector_store %arg4[%c0_5, %c0_6], %8 {strides = array<i32>} : memref<2x1024xf32, #tpu.memory_space<vmem>>, vector<2x1024xf32>,
    return
  }
  func.func @transform_0(%arg0: i32) -> (i32, i32) {
    %c0_i32 = arith.constant 0 : i32
    %c0_i32_0 = arith.constant 0 : i32
    return %arg0, %c0_i32 : i32, i32
  }
  func.func @transform_1(%arg0: i32) -> (i32, i32) {
    %c0_i32 = arith.constant 0 : i32
    %c0_i32_0 = arith.constant 0 : i32
    %c0_i32_1 = arith.constant 0 : i32
    return %c0_i32, %c0_i32_0 : i32, i32
  }
  func.func @transform_2(%arg0: i32) -> (i32, i32) {
    %c0_i32 = arith.constant 0 : i32
    %c0_i32_0 = arith.constant 0 : i32
    %c0_i32_1 = arith.constant 0 : i32
    return %c0_i32, %c0_i32_0 : i32, i32
  }
  func.func @transform_3(%arg0: i32) -> (i32, i32) {
    %c0_i32 = arith.constant 0 : i32
    %c0_i32_0 = arith.constant 0 : i32
    return %arg0, %c0_i32 : i32, i32
  }
}

module attributes {stable_mosaic.version = 11 : i64} {
  func.func @_mm_stats_kernel(%arg0: i32, %arg1: memref<32x576xbf16, #tpu.memory_space<vmem>>, %arg2: memref<576x128xbf16, #tpu.memory_space<vmem>>, %arg3: memref<32x128xf32, #tpu.memory_space<vmem>>, %arg4: memref<1x8x128xf32, #tpu.memory_space<vmem>>, %arg5: memref<1x8x128xf32, #tpu.memory_space<vmem>>) attributes {dimension_semantics = [#tpu.dimension_semantics<parallel>], iteration_bounds = array<i64: 1>, scalar_prefetch = 0 : i64, scratch_operands = 0 : i64, tpu.core_type = #tpu.core_type<tc>, window_params = [{transform_indices = @transform_0, window_bounds = array<i64: 32, 576>}, {pipeline_mode = #tpu.pipeline_mode<synchronous>, transform_indices = @transform_1, window_bounds = array<i64: 576, 128>}, {transform_indices = @transform_2, window_bounds = array<i64: 32, 128>}, {transform_indices = @transform_3, window_bounds = array<i64: 1, 8, 128>}, {transform_indices = @transform_4, window_bounds = array<i64: 1, 8, 128>}]} {
    %c0 = arith.constant 0 : index
    %c0_0 = arith.constant 0 : index
    %0 = vector.load %arg1[%c0, %c0_0] : memref<32x576xbf16, #tpu.memory_space<vmem>>, vector<32x576xbf16>
    %c0_1 = arith.constant 0 : index
    %c0_2 = arith.constant 0 : index
    %1 = vector.load %arg2[%c0_1, %c0_2] : memref<576x128xbf16, #tpu.memory_space<vmem>>, vector<576x128xbf16>
    %cst = arith.constant dense<0.000000e+00> : vector<32x128xf32>
    %2 = tpu.matmul %0, %1, %cst {dimension_numbers = #tpu.dot_dimension_numbers<[1], [0], [0], [1], [0, 0, 1, 1], [], []>} : vector<32x576xbf16>, vector<576x128xbf16>, vector<32x128xf32> -> vector<32x128xf32>
    %c0_3 = arith.constant 0 : index
    %c0_4 = arith.constant 0 : index
    %3 = vector.load %arg3[%c0_3, %c0_4] : memref<32x128xf32, #tpu.memory_space<vmem>>, vector<32x128xf32>
    tpu.vector_store %arg3[%c0_3, %c0_4], %2 {strides = array<i32>} : memref<32x128xf32, #tpu.memory_space<vmem>>, vector<32x128xf32>,
    %cst_5 = arith.constant dense<0.000000e+00> : vector<128xf32>
    %4 = vector.multi_reduction <add>, %2, %cst_5 [0] : vector<32x128xf32> to vector<128xf32>
    %5 = vector.shape_cast %4 : vector<128xf32> to vector<1x128xf32>
    %6 = arith.mulf %2, %2 : vector<32x128xf32>
    %cst_6 = arith.constant dense<0.000000e+00> : vector<128xf32>
    %7 = vector.multi_reduction <add>, %6, %cst_6 [0] : vector<32x128xf32> to vector<128xf32>
    %8 = vector.shape_cast %7 : vector<128xf32> to vector<1x128xf32>
    %9 = vector.shape_cast %5 : vector<1x128xf32> to vector<1x1x128xf32>
    %10 = vector.shape_cast %9 : vector<1x1x128xf32> to vector<1x1x128xf32>
    %11 = vector.broadcast %10 : vector<1x1x128xf32> to vector<1x8x128xf32>
    %c0_7 = arith.constant 0 : index
    %c0_8 = arith.constant 0 : index
    %c0_9 = arith.constant 0 : index
    %12 = vector.load %arg4[%c0_7, %c0_8, %c0_9] : memref<1x8x128xf32, #tpu.memory_space<vmem>>, vector<1x8x128xf32>
    tpu.vector_store %arg4[%c0_7, %c0_8, %c0_9], %11 {strides = array<i32>} : memref<1x8x128xf32, #tpu.memory_space<vmem>>, vector<1x8x128xf32>,
    %13 = vector.shape_cast %8 : vector<1x128xf32> to vector<1x1x128xf32>
    %14 = vector.shape_cast %13 : vector<1x1x128xf32> to vector<1x1x128xf32>
    %15 = vector.broadcast %14 : vector<1x1x128xf32> to vector<1x8x128xf32>
    %c0_10 = arith.constant 0 : index
    %c0_11 = arith.constant 0 : index
    %c0_12 = arith.constant 0 : index
    %16 = vector.load %arg5[%c0_10, %c0_11, %c0_12] : memref<1x8x128xf32, #tpu.memory_space<vmem>>, vector<1x8x128xf32>
    tpu.vector_store %arg5[%c0_10, %c0_11, %c0_12], %15 {strides = array<i32>} : memref<1x8x128xf32, #tpu.memory_space<vmem>>, vector<1x8x128xf32>,
    return
  }
  func.func @transform_0(%arg0: i32) -> (i32, i32) {
    %c0_i32 = arith.constant 0 : i32
    %c0_i32_0 = arith.constant 0 : i32
    return %arg0, %c0_i32 : i32, i32
  }
  func.func @transform_1(%arg0: i32) -> (i32, i32) {
    %c0_i32 = arith.constant 0 : i32
    %c0_i32_0 = arith.constant 0 : i32
    %c0_i32_1 = arith.constant 0 : i32
    return %c0_i32, %c0_i32_0 : i32, i32
  }
  func.func @transform_2(%arg0: i32) -> (i32, i32) {
    %c0_i32 = arith.constant 0 : i32
    %c0_i32_0 = arith.constant 0 : i32
    return %arg0, %c0_i32 : i32, i32
  }
  func.func @transform_3(%arg0: i32) -> (i32, i32, i32) {
    %c0_i32 = arith.constant 0 : i32
    %c0_i32_0 = arith.constant 0 : i32
    %c0_i32_1 = arith.constant 0 : i32
    return %arg0, %c0_i32, %c0_i32_0 : i32, i32, i32
  }
  func.func @transform_4(%arg0: i32) -> (i32, i32, i32) {
    %c0_i32 = arith.constant 0 : i32
    %c0_i32_0 = arith.constant 0 : i32
    %c0_i32_1 = arith.constant 0 : i32
    return %arg0, %c0_i32, %c0_i32_0 : i32, i32, i32
  }
}

module attributes {stable_mosaic.version = 11 : i64} {
  func.func @_affine_relu_kernel(%arg0: i32, %arg1: memref<32x128xf32, #tpu.memory_space<vmem>>, %arg2: memref<1x128xf32, #tpu.memory_space<vmem>>, %arg3: memref<1x128xf32, #tpu.memory_space<vmem>>, %arg4: memref<32x128xf32, #tpu.memory_space<vmem>>) attributes {dimension_semantics = [#tpu.dimension_semantics<parallel>], iteration_bounds = array<i64: 1>, scalar_prefetch = 0 : i64, scratch_operands = 0 : i64, tpu.core_type = #tpu.core_type<tc>, window_params = [{transform_indices = @transform_0, window_bounds = array<i64: 32, 128>}, {pipeline_mode = #tpu.pipeline_mode<synchronous>, transform_indices = @transform_1, window_bounds = array<i64: 1, 128>}, {pipeline_mode = #tpu.pipeline_mode<synchronous>, transform_indices = @transform_2, window_bounds = array<i64: 1, 128>}, {transform_indices = @transform_3, window_bounds = array<i64: 32, 128>}]} {
    %c0 = arith.constant 0 : index
    %c0_0 = arith.constant 0 : index
    %0 = vector.load %arg1[%c0, %c0_0] : memref<32x128xf32, #tpu.memory_space<vmem>>, vector<32x128xf32>
    %c0_1 = arith.constant 0 : index
    %c0_2 = arith.constant 0 : index
    %1 = vector.load %arg2[%c0_1, %c0_2] : memref<1x128xf32, #tpu.memory_space<vmem>>, vector<1x128xf32>
    %2 = vector.broadcast %1 : vector<1x128xf32> to vector<32x128xf32>
    %3 = arith.mulf %0, %2 : vector<32x128xf32>
    %c0_3 = arith.constant 0 : index
    %c0_4 = arith.constant 0 : index
    %4 = vector.load %arg3[%c0_3, %c0_4] : memref<1x128xf32, #tpu.memory_space<vmem>>, vector<1x128xf32>
    %5 = vector.broadcast %4 : vector<1x128xf32> to vector<32x128xf32>
    %6 = arith.addf %3, %5 : vector<32x128xf32>
    %cst = arith.constant 0.000000e+00 : f32
    %7 = vector.broadcast %cst : f32 to vector<32x128xf32>
    %8 = arith.maximumf %6, %7 : vector<32x128xf32>
    %c0_5 = arith.constant 0 : index
    %c0_6 = arith.constant 0 : index
    %9 = vector.load %arg4[%c0_5, %c0_6] : memref<32x128xf32, #tpu.memory_space<vmem>>, vector<32x128xf32>
    tpu.vector_store %arg4[%c0_5, %c0_6], %8 {strides = array<i32>} : memref<32x128xf32, #tpu.memory_space<vmem>>, vector<32x128xf32>,
    return
  }
  func.func @transform_0(%arg0: i32) -> (i32, i32) {
    %c0_i32 = arith.constant 0 : i32
    %c0_i32_0 = arith.constant 0 : i32
    return %arg0, %c0_i32 : i32, i32
  }
  func.func @transform_1(%arg0: i32) -> (i32, i32) {
    %c0_i32 = arith.constant 0 : i32
    %c0_i32_0 = arith.constant 0 : i32
    %c0_i32_1 = arith.constant 0 : i32
    return %c0_i32, %c0_i32_0 : i32, i32
  }
  func.func @transform_2(%arg0: i32) -> (i32, i32) {
    %c0_i32 = arith.constant 0 : i32
    %c0_i32_0 = arith.constant 0 : i32
    %c0_i32_1 = arith.constant 0 : i32
    return %c0_i32, %c0_i32_0 : i32, i32
  }
  func.func @transform_3(%arg0: i32) -> (i32, i32) {
    %c0_i32 = arith.constant 0 : i32
    %c0_i32_0 = arith.constant 0 : i32
    return %arg0, %c0_i32 : i32, i32
  }
}

module attributes {stable_mosaic.version = 11 : i64} {
  func.func @_mm_stats_kernel(%arg0: i32, %arg1: memref<128x288xbf16, #tpu.memory_space<vmem>>, %arg2: memref<288x128xbf16, #tpu.memory_space<vmem>>, %arg3: memref<128x128xf32, #tpu.memory_space<vmem>>, %arg4: memref<1x8x128xf32, #tpu.memory_space<vmem>>, %arg5: memref<1x8x128xf32, #tpu.memory_space<vmem>>) attributes {dimension_semantics = [#tpu.dimension_semantics<parallel>], iteration_bounds = array<i64: 1>, scalar_prefetch = 0 : i64, scratch_operands = 0 : i64, tpu.core_type = #tpu.core_type<tc>, window_params = [{transform_indices = @transform_0, window_bounds = array<i64: 128, 288>}, {pipeline_mode = #tpu.pipeline_mode<synchronous>, transform_indices = @transform_1, window_bounds = array<i64: 288, 128>}, {transform_indices = @transform_2, window_bounds = array<i64: 128, 128>}, {transform_indices = @transform_3, window_bounds = array<i64: 1, 8, 128>}, {transform_indices = @transform_4, window_bounds = array<i64: 1, 8, 128>}]} {
    %c0 = arith.constant 0 : index
    %c0_0 = arith.constant 0 : index
    %0 = vector.load %arg1[%c0, %c0_0] : memref<128x288xbf16, #tpu.memory_space<vmem>>, vector<128x288xbf16>
    %c0_1 = arith.constant 0 : index
    %c0_2 = arith.constant 0 : index
    %1 = vector.load %arg2[%c0_1, %c0_2] : memref<288x128xbf16, #tpu.memory_space<vmem>>, vector<288x128xbf16>
    %cst = arith.constant dense<0.000000e+00> : vector<128x128xf32>
    %2 = tpu.matmul %0, %1, %cst {dimension_numbers = #tpu.dot_dimension_numbers<[1], [0], [0], [1], [0, 0, 1, 1], [], []>} : vector<128x288xbf16>, vector<288x128xbf16>, vector<128x128xf32> -> vector<128x128xf32>
    %c0_3 = arith.constant 0 : index
    %c0_4 = arith.constant 0 : index
    %3 = vector.load %arg3[%c0_3, %c0_4] : memref<128x128xf32, #tpu.memory_space<vmem>>, vector<128x128xf32>
    tpu.vector_store %arg3[%c0_3, %c0_4], %2 {strides = array<i32>} : memref<128x128xf32, #tpu.memory_space<vmem>>, vector<128x128xf32>,
    %cst_5 = arith.constant dense<0.000000e+00> : vector<128xf32>
    %4 = vector.multi_reduction <add>, %2, %cst_5 [0] : vector<128x128xf32> to vector<128xf32>
    %5 = vector.shape_cast %4 : vector<128xf32> to vector<1x128xf32>
    %6 = arith.mulf %2, %2 : vector<128x128xf32>
    %cst_6 = arith.constant dense<0.000000e+00> : vector<128xf32>
    %7 = vector.multi_reduction <add>, %6, %cst_6 [0] : vector<128x128xf32> to vector<128xf32>
    %8 = vector.shape_cast %7 : vector<128xf32> to vector<1x128xf32>
    %9 = vector.shape_cast %5 : vector<1x128xf32> to vector<1x1x128xf32>
    %10 = vector.shape_cast %9 : vector<1x1x128xf32> to vector<1x1x128xf32>
    %11 = vector.broadcast %10 : vector<1x1x128xf32> to vector<1x8x128xf32>
    %c0_7 = arith.constant 0 : index
    %c0_8 = arith.constant 0 : index
    %c0_9 = arith.constant 0 : index
    %12 = vector.load %arg4[%c0_7, %c0_8, %c0_9] : memref<1x8x128xf32, #tpu.memory_space<vmem>>, vector<1x8x128xf32>
    tpu.vector_store %arg4[%c0_7, %c0_8, %c0_9], %11 {strides = array<i32>} : memref<1x8x128xf32, #tpu.memory_space<vmem>>, vector<1x8x128xf32>,
    %13 = vector.shape_cast %8 : vector<1x128xf32> to vector<1x1x128xf32>
    %14 = vector.shape_cast %13 : vector<1x1x128xf32> to vector<1x1x128xf32>
    %15 = vector.broadcast %14 : vector<1x1x128xf32> to vector<1x8x128xf32>
    %c0_10 = arith.constant 0 : index
    %c0_11 = arith.constant 0 : index
    %c0_12 = arith.constant 0 : index
    %16 = vector.load %arg5[%c0_10, %c0_11, %c0_12] : memref<1x8x128xf32, #tpu.memory_space<vmem>>, vector<1x8x128xf32>
    tpu.vector_store %arg5[%c0_10, %c0_11, %c0_12], %15 {strides = array<i32>} : memref<1x8x128xf32, #tpu.memory_space<vmem>>, vector<1x8x128xf32>,
    return
  }
  func.func @transform_0(%arg0: i32) -> (i32, i32) {
    %c0_i32 = arith.constant 0 : i32
    %c0_i32_0 = arith.constant 0 : i32
    return %arg0, %c0_i32 : i32, i32
  }
  func.func @transform_1(%arg0: i32) -> (i32, i32) {
    %c0_i32 = arith.constant 0 : i32
    %c0_i32_0 = arith.constant 0 : i32
    %c0_i32_1 = arith.constant 0 : i32
    return %c0_i32, %c0_i32_0 : i32, i32
  }
  func.func @transform_2(%arg0: i32) -> (i32, i32) {
    %c0_i32 = arith.constant 0 : i32
    %c0_i32_0 = arith.constant 0 : i32
    return %arg0, %c0_i32 : i32, i32
  }
  func.func @transform_3(%arg0: i32) -> (i32, i32, i32) {
    %c0_i32 = arith.constant 0 : i32
    %c0_i32_0 = arith.constant 0 : i32
    %c0_i32_1 = arith.constant 0 : i32
    return %arg0, %c0_i32, %c0_i32_0 : i32, i32, i32
  }
  func.func @transform_4(%arg0: i32) -> (i32, i32, i32) {
    %c0_i32 = arith.constant 0 : i32
    %c0_i32_0 = arith.constant 0 : i32
    %c0_i32_1 = arith.constant 0 : i32
    return %arg0, %c0_i32, %c0_i32_0 : i32, i32, i32
  }
}

module attributes {stable_mosaic.version = 11 : i64} {
  func.func @_affine_relu_kernel(%arg0: i32, %arg1: memref<128x128xf32, #tpu.memory_space<vmem>>, %arg2: memref<1x128xf32, #tpu.memory_space<vmem>>, %arg3: memref<1x128xf32, #tpu.memory_space<vmem>>, %arg4: memref<128x128xf32, #tpu.memory_space<vmem>>) attributes {dimension_semantics = [#tpu.dimension_semantics<parallel>], iteration_bounds = array<i64: 1>, scalar_prefetch = 0 : i64, scratch_operands = 0 : i64, tpu.core_type = #tpu.core_type<tc>, window_params = [{transform_indices = @transform_0, window_bounds = array<i64: 128, 128>}, {pipeline_mode = #tpu.pipeline_mode<synchronous>, transform_indices = @transform_1, window_bounds = array<i64: 1, 128>}, {pipeline_mode = #tpu.pipeline_mode<synchronous>, transform_indices = @transform_2, window_bounds = array<i64: 1, 128>}, {transform_indices = @transform_3, window_bounds = array<i64: 128, 128>}]} {
    %c0 = arith.constant 0 : index
    %c0_0 = arith.constant 0 : index
    %0 = vector.load %arg1[%c0, %c0_0] : memref<128x128xf32, #tpu.memory_space<vmem>>, vector<128x128xf32>
    %c0_1 = arith.constant 0 : index
    %c0_2 = arith.constant 0 : index
    %1 = vector.load %arg2[%c0_1, %c0_2] : memref<1x128xf32, #tpu.memory_space<vmem>>, vector<1x128xf32>
    %2 = vector.broadcast %1 : vector<1x128xf32> to vector<128x128xf32>
    %3 = arith.mulf %0, %2 : vector<128x128xf32>
    %c0_3 = arith.constant 0 : index
    %c0_4 = arith.constant 0 : index
    %4 = vector.load %arg3[%c0_3, %c0_4] : memref<1x128xf32, #tpu.memory_space<vmem>>, vector<1x128xf32>
    %5 = vector.broadcast %4 : vector<1x128xf32> to vector<128x128xf32>
    %6 = arith.addf %3, %5 : vector<128x128xf32>
    %cst = arith.constant 0.000000e+00 : f32
    %7 = vector.broadcast %cst : f32 to vector<128x128xf32>
    %8 = arith.maximumf %6, %7 : vector<128x128xf32>
    %c0_5 = arith.constant 0 : index
    %c0_6 = arith.constant 0 : index
    %9 = vector.load %arg4[%c0_5, %c0_6] : memref<128x128xf32, #tpu.memory_space<vmem>>, vector<128x128xf32>
    tpu.vector_store %arg4[%c0_5, %c0_6], %8 {strides = array<i32>} : memref<128x128xf32, #tpu.memory_space<vmem>>, vector<128x128xf32>,
    return
  }
  func.func @transform_0(%arg0: i32) -> (i32, i32) {
    %c0_i32 = arith.constant 0 : i32
    %c0_i32_0 = arith.constant 0 : i32
    return %arg0, %c0_i32 : i32, i32
  }
  func.func @transform_1(%arg0: i32) -> (i32, i32) {
    %c0_i32 = arith.constant 0 : i32
    %c0_i32_0 = arith.constant 0 : i32
    %c0_i32_1 = arith.constant 0 : i32
    return %c0_i32, %c0_i32_0 : i32, i32
  }
  func.func @transform_2(%arg0: i32) -> (i32, i32) {
    %c0_i32 = arith.constant 0 : i32
    %c0_i32_0 = arith.constant 0 : i32
    %c0_i32_1 = arith.constant 0 : i32
    return %c0_i32, %c0_i32_0 : i32, i32
  }
  func.func @transform_3(%arg0: i32) -> (i32, i32) {
    %c0_i32 = arith.constant 0 : i32
    %c0_i32_0 = arith.constant 0 : i32
    return %arg0, %c0_i32 : i32, i32
  }
}

module attributes {stable_mosaic.version = 11 : i64} {
  func.func @_mm_stats_kernel(%arg0: i32, %arg1: memref<512x144xbf16, #tpu.memory_space<vmem>>, %arg2: memref<144x128xbf16, #tpu.memory_space<vmem>>, %arg3: memref<512x128xf32, #tpu.memory_space<vmem>>, %arg4: memref<1x8x128xf32, #tpu.memory_space<vmem>>, %arg5: memref<1x8x128xf32, #tpu.memory_space<vmem>>) attributes {dimension_semantics = [#tpu.dimension_semantics<parallel>], iteration_bounds = array<i64: 1>, scalar_prefetch = 0 : i64, scratch_operands = 0 : i64, tpu.core_type = #tpu.core_type<tc>, window_params = [{transform_indices = @transform_0, window_bounds = array<i64: 512, 144>}, {pipeline_mode = #tpu.pipeline_mode<synchronous>, transform_indices = @transform_1, window_bounds = array<i64: 144, 128>}, {transform_indices = @transform_2, window_bounds = array<i64: 512, 128>}, {transform_indices = @transform_3, window_bounds = array<i64: 1, 8, 128>}, {transform_indices = @transform_4, window_bounds = array<i64: 1, 8, 128>}]} {
    %c0 = arith.constant 0 : index
    %c0_0 = arith.constant 0 : index
    %0 = vector.load %arg1[%c0, %c0_0] : memref<512x144xbf16, #tpu.memory_space<vmem>>, vector<512x144xbf16>
    %c0_1 = arith.constant 0 : index
    %c0_2 = arith.constant 0 : index
    %1 = vector.load %arg2[%c0_1, %c0_2] : memref<144x128xbf16, #tpu.memory_space<vmem>>, vector<144x128xbf16>
    %cst = arith.constant dense<0.000000e+00> : vector<512x128xf32>
    %2 = tpu.matmul %0, %1, %cst {dimension_numbers = #tpu.dot_dimension_numbers<[1], [0], [0], [1], [0, 0, 1, 1], [], []>} : vector<512x144xbf16>, vector<144x128xbf16>, vector<512x128xf32> -> vector<512x128xf32>
    %c0_3 = arith.constant 0 : index
    %c0_4 = arith.constant 0 : index
    %3 = vector.load %arg3[%c0_3, %c0_4] : memref<512x128xf32, #tpu.memory_space<vmem>>, vector<512x128xf32>
    tpu.vector_store %arg3[%c0_3, %c0_4], %2 {strides = array<i32>} : memref<512x128xf32, #tpu.memory_space<vmem>>, vector<512x128xf32>,
    %cst_5 = arith.constant dense<0.000000e+00> : vector<128xf32>
    %4 = vector.multi_reduction <add>, %2, %cst_5 [0] : vector<512x128xf32> to vector<128xf32>
    %5 = vector.shape_cast %4 : vector<128xf32> to vector<1x128xf32>
    %6 = arith.mulf %2, %2 : vector<512x128xf32>
    %cst_6 = arith.constant dense<0.000000e+00> : vector<128xf32>
    %7 = vector.multi_reduction <add>, %6, %cst_6 [0] : vector<512x128xf32> to vector<128xf32>
    %8 = vector.shape_cast %7 : vector<128xf32> to vector<1x128xf32>
    %9 = vector.shape_cast %5 : vector<1x128xf32> to vector<1x1x128xf32>
    %10 = vector.shape_cast %9 : vector<1x1x128xf32> to vector<1x1x128xf32>
    %11 = vector.broadcast %10 : vector<1x1x128xf32> to vector<1x8x128xf32>
    %c0_7 = arith.constant 0 : index
    %c0_8 = arith.constant 0 : index
    %c0_9 = arith.constant 0 : index
    %12 = vector.load %arg4[%c0_7, %c0_8, %c0_9] : memref<1x8x128xf32, #tpu.memory_space<vmem>>, vector<1x8x128xf32>
    tpu.vector_store %arg4[%c0_7, %c0_8, %c0_9], %11 {strides = array<i32>} : memref<1x8x128xf32, #tpu.memory_space<vmem>>, vector<1x8x128xf32>,
    %13 = vector.shape_cast %8 : vector<1x128xf32> to vector<1x1x128xf32>
    %14 = vector.shape_cast %13 : vector<1x1x128xf32> to vector<1x1x128xf32>
    %15 = vector.broadcast %14 : vector<1x1x128xf32> to vector<1x8x128xf32>
    %c0_10 = arith.constant 0 : index
    %c0_11 = arith.constant 0 : index
    %c0_12 = arith.constant 0 : index
    %16 = vector.load %arg5[%c0_10, %c0_11, %c0_12] : memref<1x8x128xf32, #tpu.memory_space<vmem>>, vector<1x8x128xf32>
    tpu.vector_store %arg5[%c0_10, %c0_11, %c0_12], %15 {strides = array<i32>} : memref<1x8x128xf32, #tpu.memory_space<vmem>>, vector<1x8x128xf32>,
    return
  }
  func.func @transform_0(%arg0: i32) -> (i32, i32) {
    %c0_i32 = arith.constant 0 : i32
    %c0_i32_0 = arith.constant 0 : i32
    return %arg0, %c0_i32 : i32, i32
  }
  func.func @transform_1(%arg0: i32) -> (i32, i32) {
    %c0_i32 = arith.constant 0 : i32
    %c0_i32_0 = arith.constant 0 : i32
    %c0_i32_1 = arith.constant 0 : i32
    return %c0_i32, %c0_i32_0 : i32, i32
  }
  func.func @transform_2(%arg0: i32) -> (i32, i32) {
    %c0_i32 = arith.constant 0 : i32
    %c0_i32_0 = arith.constant 0 : i32
    return %arg0, %c0_i32 : i32, i32
  }
  func.func @transform_3(%arg0: i32) -> (i32, i32, i32) {
    %c0_i32 = arith.constant 0 : i32
    %c0_i32_0 = arith.constant 0 : i32
    %c0_i32_1 = arith.constant 0 : i32
    return %arg0, %c0_i32, %c0_i32_0 : i32, i32, i32
  }
  func.func @transform_4(%arg0: i32) -> (i32, i32, i32) {
    %c0_i32 = arith.constant 0 : i32
    %c0_i32_0 = arith.constant 0 : i32
    %c0_i32_1 = arith.constant 0 : i32
    return %arg0, %c0_i32, %c0_i32_0 : i32, i32, i32
  }
}

module attributes {stable_mosaic.version = 11 : i64} {
  func.func @_affine_relu_kernel(%arg0: i32, %arg1: memref<512x128xf32, #tpu.memory_space<vmem>>, %arg2: memref<1x128xf32, #tpu.memory_space<vmem>>, %arg3: memref<1x128xf32, #tpu.memory_space<vmem>>, %arg4: memref<512x128xf32, #tpu.memory_space<vmem>>) attributes {dimension_semantics = [#tpu.dimension_semantics<parallel>], iteration_bounds = array<i64: 1>, scalar_prefetch = 0 : i64, scratch_operands = 0 : i64, tpu.core_type = #tpu.core_type<tc>, window_params = [{transform_indices = @transform_0, window_bounds = array<i64: 512, 128>}, {pipeline_mode = #tpu.pipeline_mode<synchronous>, transform_indices = @transform_1, window_bounds = array<i64: 1, 128>}, {pipeline_mode = #tpu.pipeline_mode<synchronous>, transform_indices = @transform_2, window_bounds = array<i64: 1, 128>}, {transform_indices = @transform_3, window_bounds = array<i64: 512, 128>}]} {
    %c0 = arith.constant 0 : index
    %c0_0 = arith.constant 0 : index
    %0 = vector.load %arg1[%c0, %c0_0] : memref<512x128xf32, #tpu.memory_space<vmem>>, vector<512x128xf32>
    %c0_1 = arith.constant 0 : index
    %c0_2 = arith.constant 0 : index
    %1 = vector.load %arg2[%c0_1, %c0_2] : memref<1x128xf32, #tpu.memory_space<vmem>>, vector<1x128xf32>
    %2 = vector.broadcast %1 : vector<1x128xf32> to vector<512x128xf32>
    %3 = arith.mulf %0, %2 : vector<512x128xf32>
    %c0_3 = arith.constant 0 : index
    %c0_4 = arith.constant 0 : index
    %4 = vector.load %arg3[%c0_3, %c0_4] : memref<1x128xf32, #tpu.memory_space<vmem>>, vector<1x128xf32>
    %5 = vector.broadcast %4 : vector<1x128xf32> to vector<512x128xf32>
    %6 = arith.addf %3, %5 : vector<512x128xf32>
    %cst = arith.constant 0.000000e+00 : f32
    %7 = vector.broadcast %cst : f32 to vector<512x128xf32>
    %8 = arith.maximumf %6, %7 : vector<512x128xf32>
    %c0_5 = arith.constant 0 : index
    %c0_6 = arith.constant 0 : index
    %9 = vector.load %arg4[%c0_5, %c0_6] : memref<512x128xf32, #tpu.memory_space<vmem>>, vector<512x128xf32>
    tpu.vector_store %arg4[%c0_5, %c0_6], %8 {strides = array<i32>} : memref<512x128xf32, #tpu.memory_space<vmem>>, vector<512x128xf32>,
    return
  }
  func.func @transform_0(%arg0: i32) -> (i32, i32) {
    %c0_i32 = arith.constant 0 : i32
    %c0_i32_0 = arith.constant 0 : i32
    return %arg0, %c0_i32 : i32, i32
  }
  func.func @transform_1(%arg0: i32) -> (i32, i32) {
    %c0_i32 = arith.constant 0 : i32
    %c0_i32_0 = arith.constant 0 : i32
    %c0_i32_1 = arith.constant 0 : i32
    return %c0_i32, %c0_i32_0 : i32, i32
  }
  func.func @transform_2(%arg0: i32) -> (i32, i32) {
    %c0_i32 = arith.constant 0 : i32
    %c0_i32_0 = arith.constant 0 : i32
    %c0_i32_1 = arith.constant 0 : i32
    return %c0_i32, %c0_i32_0 : i32, i32
  }
  func.func @transform_3(%arg0: i32) -> (i32, i32) {
    %c0_i32 = arith.constant 0 : i32
    %c0_i32_0 = arith.constant 0 : i32
    return %arg0, %c0_i32 : i32, i32
  }
}

module attributes {stable_mosaic.version = 11 : i64} {
  func.func @_mm_tanh_kernel(%arg0: i32, %arg1: memref<512x72xbf16, #tpu.memory_space<vmem>>, %arg2: memref<72x128xbf16, #tpu.memory_space<vmem>>, %arg3: memref<512x128xf32, #tpu.memory_space<vmem>>) attributes {dimension_semantics = [#tpu.dimension_semantics<parallel>], iteration_bounds = array<i64: 4>, scalar_prefetch = 0 : i64, scratch_operands = 0 : i64, tpu.core_type = #tpu.core_type<tc>, window_params = [{transform_indices = @transform_0, window_bounds = array<i64: 512, 72>}, {pipeline_mode = #tpu.pipeline_mode<synchronous>, transform_indices = @transform_1, window_bounds = array<i64: 72, 128>}, {transform_indices = @transform_2, window_bounds = array<i64: 512, 128>}]} {
    %c0 = arith.constant 0 : index
    %c0_0 = arith.constant 0 : index
    %0 = vector.load %arg1[%c0, %c0_0] : memref<512x72xbf16, #tpu.memory_space<vmem>>, vector<512x72xbf16>
    %c0_1 = arith.constant 0 : index
    %c0_2 = arith.constant 0 : index
    %1 = vector.load %arg2[%c0_1, %c0_2] : memref<72x128xbf16, #tpu.memory_space<vmem>>, vector<72x128xbf16>
    %cst = arith.constant dense<0.000000e+00> : vector<512x128xf32>
    %2 = tpu.matmul %0, %1, %cst {dimension_numbers = #tpu.dot_dimension_numbers<[1], [0], [0], [1], [0, 0, 1, 1], [], []>} : vector<512x72xbf16>, vector<72x128xbf16>, vector<512x128xf32> -> vector<512x128xf32>
    %3 = math.tanh %2 : vector<512x128xf32>
    %c0_3 = arith.constant 0 : index
    %c0_4 = arith.constant 0 : index
    %4 = vector.load %arg3[%c0_3, %c0_4] : memref<512x128xf32, #tpu.memory_space<vmem>>, vector<512x128xf32>
    tpu.vector_store %arg3[%c0_3, %c0_4], %3 {strides = array<i32>} : memref<512x128xf32, #tpu.memory_space<vmem>>, vector<512x128xf32>,
    return
  }
  func.func @transform_0(%arg0: i32) -> (i32, i32) {
    %c0_i32 = arith.constant 0 : i32
    %c0_i32_0 = arith.constant 0 : i32
    return %arg0, %c0_i32 : i32, i32
  }
  func.func @transform_1(%arg0: i32) -> (i32, i32) {
    %c0_i32 = arith.constant 0 : i32
    %c0_i32_0 = arith.constant 0 : i32
    %c0_i32_1 = arith.constant 0 : i32
    return %c0_i32, %c0_i32_0 : i32, i32
  }
  func.func @transform_2(%arg0: i32) -> (i32, i32) {
    %c0_i32 = arith.constant 0 : i32
    %c0_i32_0 = arith.constant 0 : i32
    return %arg0, %c0_i32 : i32, i32
  }
}

</mosaic_0001>

<llo_original>
// kernel: tile.48
$region0: #{tile.48}
  #allocation0 [shape = 's32[1]{0}', space=sflag, size = 0x4, scoped, tag = 'scoped memory for tile.48']
  %s0 = inlined_call_operand.vmem [shape: f32[64], index: 0, kind: input, shape index: {}]
  %s1 = inlined_call_operand.vmem [shape: f32[16,64], index: 1, kind: output, shape index: {}]
  // Predicated region
  $region2: #{tile.48} parent=0 // pred_check
    _
  $region3: #{tile.48} parent=0 // pred_check_branch
    %3 = sbr.rel (0) target = $region5
  $region4: #{tile.48} parent=0 // pred_region
    _
  $region5: #{tile.48} parent=0 // pred_fallthru
    _
  %v4 = vld [vmem:[%s0] ss:$0 sm:$0xff]
  %5 = vst [vmem:[%s1] sm:$0xff] %v4
  %s6 = scalar_lea.vmem %s1, 8
  %7 = vst [vmem:[%s6] sm:$0xff] %v4

// kernel: generator_forward.10
$region0: #{generator_forward.10}
  #allocation0 [shape = 'u32[]', space=smem, size = 0x4, offset = 0x4, fixed_abs, tag = 'smem constant byte address 0x4 - core index']
  #allocation1 [shape = 'u32[72,128]{1,0:T(1,128)}', space=vmem, size = 0x9000, scoped, tag = 'internal scratch']
  %s0 = inlined_call_operand.vmem [shape: f32[2,1024], index: 0, kind: input, shape index: {}]
  %s1 = inlined_call_operand.vmem [shape: f32[1,1024], index: 1, kind: input, shape index: {}]
  %s2 = inlined_call_operand.vmem [shape: f32[1,1024], index: 2, kind: input, shape index: {}]
  %s3 = inlined_call_operand.vmem [shape: f32[2,1024], index: 3, kind: output, shape index: {}]
  %s4 = sld [smem:[#allocation0]]
  $region22: #{generator_forward.10} parent=0
    _
  %s6 = ssub.s32 1, %s4
  %s7 = scalar_select 0, %s6, %s4
  // Predicated region
  $region2: #{generator_forward.10} parent=0 // pred_check
    _
  $region3: #{generator_forward.10} parent=0 // pred_check_branch
    %9 = sbr.rel (0) target = $region5
  $region4: #{generator_forward.10} parent=0 // pred_region
    _
  $region5: #{generator_forward.10} parent=0 // pred_fallthru
    _
  // Predicated region
  $region6: #{generator_forward.10} parent=0 // pred_check
    _
  $region7: #{generator_forward.10} parent=0 // pred_check_branch
    %11 = sbr.rel (0) target = $region9
  $region8: #{generator_forward.10} parent=0 // pred_region
    _
  $region9: #{generator_forward.10} parent=0 // pred_fallthru
    _
  // Predicated region
  $region10: #{generator_forward.10} parent=0 // pred_check
    _
  $region11: #{generator_forward.10} parent=0 // pred_check_branch
    %13 = sbr.rel (0) target = $region13
  $region12: #{generator_forward.10} parent=0 // pred_region
    _
  $region13: #{generator_forward.10} parent=0 // pred_fallthru
    _
  %v14 = vld [vmem:[%s0] sm:$0xff]
  %v15 = vld [vmem:[%s0 + $0x8] sm:$0xff]
  %v16 = vld [vmem:[%s1] sm:$0xff]
  %v18 = vperm.slane %v16, 0
  %v19 = vperm.slane %v16, 1
  %v20 = vperm.slane %v16, 2
  %v21 = vperm.slane %v16, 3
  %v22 = vperm.slane %v16, 4
  %v23 = vperm.slane %v16, 5
  %v24 = vperm.slane %v16, 6
  %v25 = vperm.slane %v16, 7
  %v26 = vrot.slane %v19, 6
  %v27 = vrot.slane %v20, 4
  %v28 = vrot.slane %v21, 2
  %v29 = vrot.slane %v23, 6
  %v30 = vrot.slane %v24, 4
  %v31 = vrot.slane %v25, 2
  %vm32 = vcmask 1041408
  %v33 = vsel %vm32, %v18, %v26
  %vm34 = vcmask 1045508
  %v35 = vsel %vm34, %v27, %v28
  %vm36 = vcmask 1043456
  %v37 = vsel %vm36, %v33, %v35
  %v38 = vsel %vm32, %v22, %v29
  %v39 = vsel %vm34, %v30, %v31
  %v40 = vsel %vm36, %v38, %v39
  %v43 = vmul.f32 %v14, %v37
  %v44 = vmul.f32 %v15, %v40
  %v45 = vld [vmem:[%s2] sm:$0xff]
  %v47 = vperm.slane %v45, 0
  %v48 = vperm.slane %v45, 1
  %v49 = vperm.slane %v45, 2
  %v50 = vperm.slane %v45, 3
  %v51 = vperm.slane %v45, 4
  %v52 = vperm.slane %v45, 5
  %v53 = vperm.slane %v45, 6
  %v54 = vperm.slane %v45, 7
  %v55 = vrot.slane %v48, 6
  %v56 = vrot.slane %v49, 4
  %v57 = vrot.slane %v50, 2
  %v58 = vrot.slane %v52, 6
  %v59 = vrot.slane %v53, 4
  %v60 = vrot.slane %v54, 2
  %v61 = vsel %vm32, %v47, %v55
  %v62 = vsel %vm34, %v56, %v57
  %v63 = vsel %vm36, %v61, %v62
  %v64 = vsel %vm32, %v51, %v58
  %v65 = vsel %vm34, %v59, %v60
  %v66 = vsel %vm36, %v64, %v65
  %v69 = vadd.f32 %v43, %v63
  %v70 = vadd.f32 %v44, %v66
  %v71 = vmax.f32 %v69, 0.0
  %v72 = vmax.f32 %v70, 0.0
  %73 = vst [vmem:[%s3] sm:$0xff] %v71
  %74 = vst [vmem:[%s3 + $0x8] sm:$0xff] %v72
  // Predicated region
  $region14: #{generator_forward.10} parent=0 // pred_check
    _
  $region15: #{generator_forward.10} parent=0 // pred_check_branch
    %76 = sbr.rel (0) target = $region17
  $region16: #{generator_forward.10} parent=0 // pred_region
    _
  $region17: #{generator_forward.10} parent=0 // pred_fallthru
    _
  // Predicated region
  $region18: #{generator_forward.10} parent=0 // pred_check
    _
  $region19: #{generator_forward.10} parent=0 // pred_check_branch
    %78 = sbr.rel (0) target = $region21
  $region20: #{generator_forward.10} parent=0 // pred_region
    _
  $region21: #{generator_forward.10} parent=0 // pred_fallthru
    _

// kernel: generator_forward.9
$region0: #{generator_forward.9}
  #allocation0 [shape = 'u32[]', space=smem, size = 0x4, offset = 0x4, fixed_abs, tag = 'smem constant byte address 0x4 - core index']
  #allocation1 [shape = 'u32[72,128]{1,0:T(1,128)}', space=vmem, size = 0x9000, scoped, tag = 'internal scratch']
  %s0 = inlined_call_operand.vmem [shape: bf16[2,8], index: 0, kind: input, shape index: {}]
  %s1 = inlined_call_operand.vmem [shape: bf16[8,1024], index: 1, kind: input, shape index: {}]
  %s2 = inlined_call_operand.vmem [shape: f32[2,1024], index: 2, kind: output, shape index: {0}]
  %s3 = inlined_call_operand.vmem [shape: f32[1,8,1024], index: 3, kind: output, shape index: {1}]
  %s4 = inlined_call_operand.vmem [shape: f32[1,8,1024], index: 4, kind: output, shape index: {2}]
  %5 = xla_tuple %s2, %s3, %s4
  %s6 = sld [smem:[#allocation0]]
  $region34: #{generator_forward.9} parent=0
    _
  %s8 = ssub.s32 1, %s6
  %s9 = scalar_select 0, %s8, %s6
  // Predicated region
  $region2: #{generator_forward.9} parent=0 // pred_check
    _
  $region3: #{generator_forward.9} parent=0 // pred_check_branch
    %11 = sbr.rel (0) target = $region5
  $region4: #{generator_forward.9} parent=0 // pred_region
    _
  $region5: #{generator_forward.9} parent=0 // pred_fallthru
    _
  // Predicated region
  $region6: #{generator_forward.9} parent=0 // pred_check
    _
  $region7: #{generator_forward.9} parent=0 // pred_check_branch
    %13 = sbr.rel (0) target = $region9
  $region8: #{generator_forward.9} parent=0 // pred_region
    _
  $region9: #{generator_forward.9} parent=0 // pred_fallthru
    _
  %v15 = vld [vmem:[%s0] sm:$0x1]
  %v16 = vld [vmem:[%s1] sm:$0xff]
  %v17 = vld [vmem:[%s1 + $0x8] sm:$0xff]
  %v18 = vld [vmem:[%s1 + $0x10] sm:$0xff]
  %v19 = vld [vmem:[%s1 + $0x18] sm:$0xff]
  %v24 = vunpack.c.l.b16 %v16
  %v25 = vunpack.c.h.b16 %v16
  %v26 = vunpack.c.l.b16 %v17
  %v27 = vunpack.c.h.b16 %v17
  %v28 = vunpack.c.l.b16 %v18
  %v29 = vunpack.c.h.b16 %v18
  %v30 = vunpack.c.l.b16 %v19
  %v31 = vunpack.c.h.b16 %v19
  %v32 = vpack.c.b16 %v24, %v24
  %v33 = vpack.c.b16 %v25, %v25
  %v34 = vpack.c.b16 %v26, %v26
  %v35 = vpack.c.b16 %v27, %v27
  %v36 = vpack.c.b16 %v28, %v28
  %v37 = vpack.c.b16 %v29, %v29
  %v38 = vpack.c.b16 %v30, %v30
  %v39 = vpack.c.b16 %v31, %v31
  %vm40 = vcmask 64512
  %v42 = vsel %vm40, %v15, 0
  %vm44 = vcmask 1043456
  %v46 = vsel %vm44, %v32, 0
  %v49 = vsel %vm44, %v33, 0
  %v52 = vsel %vm44, %v34, 0
  %v55 = vsel %vm44, %v35, 0
  %v58 = vsel %vm44, %v36, 0
  %v61 = vsel %vm44, %v37, 0
  %v64 = vsel %vm44, %v38, 0
  %v67 = vsel %vm44, %v39, 0
  %69 = vmatpush.bf16.msra.mxu0 0
  %70 = vmatpush.bf16.msra.mxu0 0
  %71 = vmatpush.bf16.msra.mxu0 0
  %72 = vmatpush.bf16.msra.mxu0 0
  %73 = vmatpush.bf16.msra.mxu0 0
  %74 = vmatpush.bf16.msra.mxu0 0
  %75 = vmatpush.bf16.msra.mxu0 0
  %76 = vmatpush.bf16.msra.mxu0 %v46
  %77 = vmatmul.bf16.gmra.mxu0 %v42
  %v78 = vpop.f32.mrf.mxu0
  %v79 = vadd.f32 0.0, %v78
  %v80 = vpop.f32.mrf.mxu0
  %81 = vdwg.mxu0
  %82 = vmatpush.bf16.msra.mxu0 0
  %83 = vmatpush.bf16.msra.mxu0 0
  %84 = vmatpush.bf16.msra.mxu0 0
  %85 = vmatpush.bf16.msra.mxu0 0
  %86 = vmatpush.bf16.msra.mxu0 0
  %87 = vmatpush.bf16.msra.mxu0 0
  %88 = vmatpush.bf16.msra.mxu0 0
  %89 = vmatpush.bf16.msra.mxu0 %v49
  %90 = vmatmul.bf16.gmra.mxu0 %v42
  %v91 = vpop.f32.mrf.mxu0
  %v92 = vadd.f32 0.0, %v91
  %v93 = vpop.f32.mrf.mxu0
  %94 = vdwg.mxu0
  %95 = vmatpush.bf16.msra.mxu0 0
  %96 = vmatpush.bf16.msra.mxu0 0
  %97 = vmatpush.bf16.msra.mxu0 0
  %98 = vmatpush.bf16.msra.mxu0 0
  %99 = vmatpush.bf16.msra.mxu0 0
  %100 = vmatpush.bf16.msra.mxu0 0
  %101 = vmatpush.bf16.msra.mxu0 0
  %102 = vmatpush.bf16.msra.mxu0 %v52
  %103 = vmatmul.bf16.gmra.mxu0 %v42
  %v104 = vpop.f32.mrf.mxu0
  %v105 = vadd.f32 0.0, %v104
  %v106 = vpop.f32.mrf.mxu0
  %107 = vdwg.mxu0
  %108 = vmatpush.bf16.msra.mxu0 0
  %109 = vmatpush.bf16.msra.mxu0 0
  %110 = vmatpush.bf16.msra.mxu0 0
  %111 = vmatpush.bf16.msra.mxu0 0
  %112 = vmatpush.bf16.msra.mxu0 0
  %113 = vmatpush.bf16.msra.mxu0 0
  %114 = vmatpush.bf16.msra.mxu0 0
  %115 = vmatpush.bf16.msra.mxu0 %v55
  %116 = vmatmul.bf16.gmra.mxu0 %v42
  %v117 = vpop.f32.mrf.mxu0
  %v118 = vadd.f32 0.0, %v117
  %v119 = vpop.f32.mrf.mxu0
  %120 = vdwg.mxu0
  %121 = vmatpush.bf16.msra.mxu0 0
  %122 = vmatpush.bf16.msra.mxu0 0
  %123 = vmatpush.bf16.msra.mxu0 0
  %124 = vmatpush.bf16.msra.mxu0 0
  %125 = vmatpush.bf16.msra.mxu0 0
  %126 = vmatpush.bf16.msra.mxu0 0
  %127 = vmatpush.bf16.msra.mxu0 0
  %128 = vmatpush.bf16.msra.mxu0 %v58
  %129 = vmatmul.bf16.gmra.mxu0 %v42
  %v130 = vpop.f32.mrf.mxu0
  %v131 = vadd.f32 0.0, %v130
  %v132 = vpop.f32.mrf.mxu0
  %133 = vdwg.mxu0
  %134 = vmatpush.bf16.msra.mxu0 0
  %135 = vmatpush.bf16.msra.mxu0 0
  %136 = vmatpush.bf16.msra.mxu0 0
  %137 = vmatpush.bf16.msra.mxu0 0
  %138 = vmatpush.bf16.msra.mxu0 0
  %139 = vmatpush.bf16.msra.mxu0 0
  %140 = vmatpush.bf16.msra.mxu0 0
  %141 = vmatpush.bf16.msra.mxu0 %v61
  %142 = vmatmul.bf16.gmra.mxu0 %v42
  %v143 = vpop.f32.mrf.mxu0
  %v144 = vadd.f32 0.0, %v143
  %v145 = vpop.f32.mrf.mxu0
  %146 = vdwg.mxu0
  %147 = vmatpush.bf16.msra.mxu0 0
  %148 = vmatpush.bf16.msra.mxu0 0
  %149 = vmatpush.bf16.msra.mxu0 0
  %150 = vmatpush.bf16.msra.mxu0 0
  %151 = vmatpush.bf16.msra.mxu0 0
  %152 = vmatpush.bf16.msra.mxu0 0
  %153 = vmatpush.bf16.msra.mxu0 0
  %154 = vmatpush.bf16.msra.mxu0 %v64
  %155 = vmatmul.bf16.gmra.mxu0 %v42
  %v156 = vpop.f32.mrf.mxu0
  %v157 = vadd.f32 0.0, %v156
  %v158 = vpop.f32.mrf.mxu0
  %159 = vdwg.mxu0
  %160 = vmatpush.bf16.msra.mxu0 0
  %161 = vmatpush.bf16.msra.mxu0 0
  %162 = vmatpush.bf16.msra.mxu0 0
  %163 = vmatpush.bf16.msra.mxu0 0
  %164 = vmatpush.bf16.msra.mxu0 0
  %165 = vmatpush.bf16.msra.mxu0 0
  %166 = vmatpush.bf16.msra.mxu0 0
  %167 = vmatpush.bf16.msra.mxu0 %v67
  %168 = vmatmul.bf16.gmra.mxu0 %v42
  %v169 = vpop.f32.mrf.mxu0
  %v170 = vadd.f32 0.0, %v169
  %v171 = vpop.f32.mrf.mxu0
  %172 = vdwg.mxu0
  %v181 = vrot.slane %v92, 6
  %v182 = vrot.slane %v105, 4
  %v183 = vrot.slane %v118, 2
  %v184 = vrot.slane %v144, 6
  %v185 = vrot.slane %v157, 4
  %v186 = vrot.slane %v170, 2
  %vm187 = vcmask 1041408
  %v188 = vsel %vm187, %v79, %v181
  %vm189 = vcmask 1045508
  %v190 = vsel %vm189, %v182, %v183
  %v191 = vsel %vm44, %v188, %v190
  %v192 = vsel %vm187, %v131, %v184
  %v193 = vsel %vm189, %v185, %v186
  %v194 = vsel %vm44, %v192, %v193
  %197 = vst [vmem:[%s2] sm:$0xff] %v191
  %198 = vst [vmem:[%s2 + $0x8] sm:$0xff] %v194
  %v199 = vsel %vm187, %v79, 0.0
  %v200 = vrot.slane %v199, 4
  %v201 = vadd.f32 %v199, %v200
  %v202 = vrot.slane %v201, 2
  %v203 = vadd.f32 %v201, %v202
  %v204 = vrot.slane %v203, 1
  %v205 = vadd.f32 %v203, %v204
  %v206 = vsel %vm187, %v92, 0.0
  %v207 = vrot.slane %v206, 4
  %v208 = vadd.f32 %v206, %v207
  %v209 = vrot.slane %v208, 2
  %v210 = vadd.f32 %v208, %v209
  %v211 = vrot.slane %v210, 1
  %v212 = vadd.f32 %v210, %v211
  %v213 = vsel %vm187, %v105, 0.0
  %v214 = vrot.slane %v213, 4
  %v215 = vadd.f32 %v213, %v214
  %v216 = vrot.slane %v215, 2
  %v217 = vadd.f32 %v215, %v216
  %v218 = vrot.slane %v217, 1
  %v219 = vadd.f32 %v217, %v218
  %v220 = vsel %vm187, %v118, 0.0
  %v221 = vrot.slane %v220, 4
  %v222 = vadd.f32 %v220, %v221
  %v223 = vrot.slane %v222, 2
  %v224 = vadd.f32 %v222, %v223
  %v225 = vrot.slane %v224, 1
  %v226 = vadd.f32 %v224, %v225
  %v227 = vsel %vm187, %v131, 0.0
  %v228 = vrot.slane %v227, 4
  %v229 = vadd.f32 %v227, %v228
  %v230 = vrot.slane %v229, 2
  %v231 = vadd.f32 %v229, %v230
  %v232 = vrot.slane %v231, 1
  %v233 = vadd.f32 %v231, %v232
  %v234 = vsel %vm187, %v144, 0.0
  %v235 = vrot.slane %v234, 4
  %v236 = vadd.f32 %v234, %v235
  %v237 = vrot.slane %v236, 2
  %v238 = vadd.f32 %v236, %v237
  %v239 = vrot.slane %v238, 1
  %v240 = vadd.f32 %v238, %v239
  %v241 = vsel %vm187, %v157, 0.0
  %v242 = vrot.slane %v241, 4
  %v243 = vadd.f32 %v241, %v242
  %v244 = vrot.slane %v243, 2
  %v245 = vadd.f32 %v243, %v244
  %v246 = vrot.slane %v245, 1
  %v247 = vadd.f32 %v245, %v246
  %v248 = vsel %vm187, %v170, 0.0
  %v249 = vrot.slane %v248, 4
  %v250 = vadd.f32 %v248, %v249
  %v251 = vrot.slane %v250, 2
  %v252 = vadd.f32 %v250, %v251
  %v253 = vrot.slane %v252, 1
  %v254 = vadd.f32 %v252, %v253
  %v255 = vmul.f32 %v79, %v79
  %v256 = vmul.f32 %v92, %v92
  %v257 = vmul.f32 %v105, %v105
  %v258 = vmul.f32 %v118, %v118
  %v259 = vmul.f32 %v131, %v131
  %v260 = vmul.f32 %v144, %v144
  %v261 = vmul.f32 %v157, %v157
  %v262 = vmul.f32 %v170, %v170
  %v263 = vsel %vm187, %v255, 0.0
  %v264 = vrot.slane %v263, 4
  %v265 = vadd.f32 %v263, %v264
  %v266 = vrot.slane %v265, 2
  %v267 = vadd.f32 %v265, %v266
  %v268 = vrot.slane %v267, 1
  %v269 = vadd.f32 %v267, %v268
  %v270 = vsel %vm187, %v256, 0.0
  %v271 = vrot.slane %v270, 4
  %v272 = vadd.f32 %v270, %v271
  %v273 = vrot.slane %v272, 2
  %v274 = vadd.f32 %v272, %v273
  %v275 = vrot.slane %v274, 1
  %v276 = vadd.f32 %v274, %v275
  %v277 = vsel %vm187, %v257, 0.0
  %v278 = vrot.slane %v277, 4
  %v279 = vadd.f32 %v277, %v278
  %v280 = vrot.slane %v279, 2
  %v281 = vadd.f32 %v279, %v280
  %v282 = vrot.slane %v281, 1
  %v283 = vadd.f32 %v281, %v282
  %v284 = vsel %vm187, %v258, 0.0
  %v285 = vrot.slane %v284, 4
  %v286 = vadd.f32 %v284, %v285
  %v287 = vrot.slane %v286, 2
  %v288 = vadd.f32 %v286, %v287
  %v289 = vrot.slane %v288, 1
  %v290 = vadd.f32 %v288, %v289
  %v291 = vsel %vm187, %v259, 0.0
  %v292 = vrot.slane %v291, 4
  %v293 = vadd.f32 %v291, %v292
  %v294 = vrot.slane %v293, 2
  %v295 = vadd.f32 %v293, %v294
  %v296 = vrot.slane %v295, 1
  %v297 = vadd.f32 %v295, %v296
  %v298 = vsel %vm187, %v260, 0.0
  %v299 = vrot.slane %v298, 4
  %v300 = vadd.f32 %v298, %v299
  %v301 = vrot.slane %v300, 2
  %v302 = vadd.f32 %v300, %v301
  %v303 = vrot.slane %v302, 1
  %v304 = vadd.f32 %v302, %v303
  %v305 = vsel %vm187, %v261, 0.0
  %v306 = vrot.slane %v305, 4
  %v307 = vadd.f32 %v305, %v306
  %v308 = vrot.slane %v307, 2
  %v309 = vadd.f32 %v307, %v308
  %v310 = vrot.slane %v309, 1
  %v311 = vadd.f32 %v309, %v310
  %v312 = vsel %vm187, %v262, 0.0
  %v313 = vrot.slane %v312, 4
  %v314 = vadd.f32 %v312, %v313
  %v315 = vrot.slane %v314, 2
  %v316 = vadd.f32 %v314, %v315
  %v317 = vrot.slane %v316, 1
  %v318 = vadd.f32 %v316, %v317
  %319 = vst [vmem:[%s3] sm:$0xff] %v205
  %320 = vst [vmem:[%s3 + $0x8] sm:$0xff] %v212
  %321 = vst [vmem:[%s3 + $0x10] sm:$0xff] %v219
  %322 = vst [vmem:[%s3 + $0x18] sm:$0xff] %v226
  %323 = vst [vmem:[%s3 + $0x20] sm:$0xff] %v233
  %324 = vst [vmem:[%s3 + $0x28] sm:$0xff] %v240
  %325 = vst [vmem:[%s3 + $0x30] sm:$0xff] %v247
  %326 = vst [vmem:[%s3 + $0x38] sm:$0xff] %v254
  %327 = vst [vmem:[%s4] sm:$0xff] %v269
  %328 = vst [vmem:[%s4 + $0x8] sm:$0xff] %v276
  %329 = vst [vmem:[%s4 + $0x10] sm:$0xff] %v283
  %330 = vst [vmem:[%s4 + $0x18] sm:$0xff] %v290
  %331 = vst [vmem:[%s4 + $0x20] sm:$0xff] %v297
  %332 = vst [vmem:[%s4 + $0x28] sm:$0xff] %v304
  %333 = vst [vmem:[%s4 + $0x30] sm:$0xff] %v311
  %334 = vst [vmem:[%s4 + $0x38] sm:$0xff] %v318
  // Predicated region
  $region10: #{generator_forward.9} parent=0 // pred_check
    _
  $region11: #{generator_forward.9} parent=0 // pred_check_branch
    %336 = sbr.rel (0) target = $region13
  $region12: #{generator_forward.9} parent=0 // pred_region
    _
  $region13: #{generator_forward.9} parent=0 // pred_fallthru
    _
  // Predicated region
  $region14: #{generator_forward.9} parent=0 // pred_check
    _
  $region15: #{generator_forward.9} parent=0 // pred_check_branch
    %338 = sbr.rel (0) target = $region17
  $region16: #{generator_forward.9} parent=0 // pred_region
    _
  $region17: #{generator_forward.9} parent=0 // pred_fallthru
    _
  // Predicated region
  $region18: #{generator_forward.9} parent=0 // pred_check
    _
  $region19: #{generator_forward.9} parent=0 // pred_check_branch
    %340 = sbr.rel (0) target = $region21
  $region20: #{generator_forward.9} parent=0 // pred_region
    _
  $region21: #{generator_forward.9} parent=0 // pred_fallthru
    _
  // Predicated region
  $region22: #{generator_forward.9} parent=0 // pred_check
    _
  $region23: #{generator_forward.9} parent=0 // pred_check_branch
    %342 = sbr.rel (0) target = $region25
  $region24: #{generator_forward.9} parent=0 // pred_region
    _
  $region25: #{generator_forward.9} parent=0 // pred_fallthru
    _
  // Predicated region
  $region26: #{generator_forward.9} parent=0 // pred_check
    _
  $region27: #{generator_forward.9} parent=0 // pred_check_branch
    %344 = sbr.rel (0) target = $region29
  $region28: #{generator_forward.9} parent=0 // pred_region
    _
  $region29: #{generator_forward.9} parent=0 // pred_fallthru
    _
  // Predicated region
  $region30: #{generator_forward.9} parent=0 // pred_check
    _
  $region31: #{generator_forward.9} parent=0 // pred_check_branch
    %346 = sbr.rel (0) target = $region33
  $region32: #{generator_forward.9} parent=0 // pred_region
    _
  $region33: #{generator_forward.9} parent=0 // pred_fallthru
    _

// kernel: tile.58
$region0: #{tile.58}
  #allocation0 [shape = 's32[1]{0}', space=sflag, size = 0x4, scoped, tag = 'scoped memory for tile.58']
  %s0 = inlined_call_operand.vmem [shape: f32[32], index: 0, kind: input, shape index: {}]
  %s1 = inlined_call_operand.vmem [shape: f32[4,32], index: 1, kind: output, shape index: {}]
  // Predicated region
  $region2: #{tile.58} parent=0 // pred_check
    _
  $region3: #{tile.58} parent=0 // pred_check_branch
    %3 = sbr.rel (0) target = $region5
  $region4: #{tile.58} parent=0 // pred_region
    _
  $region5: #{tile.58} parent=0 // pred_fallthru
    _
  %v4 = vld [vmem:[%s0] ss:$0 sm:$0xff]
  %5 = vst [vmem:[%s1] sm:$0xf] %v4

// kernel: generator_forward.12
$region0: #{generator_forward.12}
  #allocation0 [shape = 'u32[]', space=smem, size = 0x4, offset = 0x4, fixed_abs, tag = 'smem constant byte address 0x4 - core index']
  #allocation1 [shape = 'u32[72,128]{1,0:T(1,128)}', space=vmem, size = 0x9000, scoped, tag = 'internal scratch']
  %s0 = inlined_call_operand.vmem [shape: f32[32,128], index: 0, kind: input, shape index: {}]
  %s1 = inlined_call_operand.vmem [shape: f32[1,128], index: 1, kind: input, shape index: {}]
  %s2 = inlined_call_operand.vmem [shape: f32[1,128], index: 2, kind: input, shape index: {}]
  %s3 = inlined_call_operand.vmem [shape: f32[32,128], index: 3, kind: output, shape index: {}]
  %s4 = sld [smem:[#allocation0]]
  $region22: #{generator_forward.12} parent=0
    _
  %s6 = ssub.s32 1, %s4
  %s7 = scalar_select 0, %s6, %s4
  // Predicated region
  $region2: #{generator_forward.12} parent=0 // pred_check
    _
  $region3: #{generator_forward.12} parent=0 // pred_check_branch
    %9 = sbr.rel (0) target = $region5
  $region4: #{generator_forward.12} parent=0 // pred_region
    _
  $region5: #{generator_forward.12} parent=0 // pred_fallthru
    _
  // Predicated region
  $region6: #{generator_forward.12} parent=0 // pred_check
    _
  $region7: #{generator_forward.12} parent=0 // pred_check_branch
    %11 = sbr.rel (0) target = $region9
  $region8: #{generator_forward.12} parent=0 // pred_region
    _
  $region9: #{generator_forward.12} parent=0 // pred_fallthru
    _
  // Predicated region
  $region10: #{generator_forward.12} parent=0 // pred_check
    _
  $region11: #{generator_forward.12} parent=0 // pred_check_branch
    %13 = sbr.rel (0) target = $region13
  $region12: #{generator_forward.12} parent=0 // pred_region
    _
  $region13: #{generator_forward.12} parent=0 // pred_fallthru
    _
  %v14 = vld [vmem:[%s0] sm:$0xff]
  %v15 = vld [vmem:[%s0 + $0x8] sm:$0xff]
  %v16 = vld [vmem:[%s0 + $0x10] sm:$0xff]
  %v17 = vld [vmem:[%s0 + $0x18] sm:$0xff]
  %v18 = vld [vmem:[%s1] sm:$0x1]
  %v20 = vperm.slane %v18, 0
  %v22 = vmul.f32 %v14, %v20
  %v23 = vmul.f32 %v15, %v20
  %v24 = vmul.f32 %v16, %v20
  %v25 = vmul.f32 %v17, %v20
  %v26 = vld [vmem:[%s2] sm:$0x1]
  %v28 = vperm.slane %v26, 0
  %v30 = vadd.f32 %v22, %v28
  %v31 = vadd.f32 %v23, %v28
  %v32 = vadd.f32 %v24, %v28
  %v33 = vadd.f32 %v25, %v28
  %v34 = vmax.f32 %v30, 0.0
  %v35 = vmax.f32 %v31, 0.0
  %v36 = vmax.f32 %v32, 0.0
  %v37 = vmax.f32 %v33, 0.0
  %38 = vst [vmem:[%s3] sm:$0xff] %v34
  %39 = vst [vmem:[%s3 + $0x8] sm:$0xff] %v35
  %40 = vst [vmem:[%s3 + $0x10] sm:$0xff] %v36
  %41 = vst [vmem:[%s3 + $0x18] sm:$0xff] %v37
  // Predicated region
  $region14: #{generator_forward.12} parent=0 // pred_check
    _
  $region15: #{generator_forward.12} parent=0 // pred_check_branch
    %43 = sbr.rel (0) target = $region17
  $region16: #{generator_forward.12} parent=0 // pred_region
    _
  $region17: #{generator_forward.12} parent=0 // pred_fallthru
    _
  // Predicated region
  $region18: #{generator_forward.12} parent=0 // pred_check
    _
  $region19: #{generator_forward.12} parent=0 // pred_check_branch
    %45 = sbr.rel (0) target = $region21
  $region20: #{generator_forward.12} parent=0 // pred_region
    _
  $region21: #{generator_forward.12} parent=0 // pred_fallthru
    _

// kernel: generator_forward.11
$region0: #{generator_forward.11}
  #allocation0 [shape = 'u32[]', space=smem, size = 0x4, offset = 0x4, fixed_abs, tag = 'smem constant byte address 0x4 - core index']
  #allocation1 [shape = 'u32[72,128]{1,0:T(1,128)}', space=vmem, size = 0x9000, scoped, tag = 'internal scratch']
  %s0 = inlined_call_operand.vmem [shape: bf16[32,576], index: 0, kind: input, shape index: {}]
  %s1 = inlined_call_operand.vmem [shape: bf16[576,128], index: 1, kind: input, shape index: {}]
  %s2 = inlined_call_operand.vmem [shape: f32[32,128], index: 2, kind: output, shape index: {0}]
  %s3 = inlined_call_operand.vmem [shape: f32[1,8,128], index: 3, kind: output, shape index: {1}]
  %s4 = inlined_call_operand.vmem [shape: f32[1,8,128], index: 4, kind: output, shape index: {2}]
  %5 = xla_tuple %s2, %s3, %s4
  %s6 = sld [smem:[#allocation0]]
  $region34: #{generator_forward.11} parent=0
    _
  %s8 = ssub.s32 1, %s6
  %s9 = scalar_select 0, %s8, %s6
  // Predicated region
  $region2: #{generator_forward.11} parent=0 // pred_check
    _
  $region3: #{generator_forward.11} parent=0 // pred_check_branch
    %11 = sbr.rel (0) target = $region5
  $region4: #{generator_forward.11} parent=0 // pred_region
    _
  $region5: #{generator_forward.11} parent=0 // pred_fallthru
    _
  // Predicated region
  $region6: #{generator_forward.11} parent=0 // pred_check
    _
  $region7: #{generator_forward.11} parent=0 // pred_check_branch
    %13 = sbr.rel (0) target = $region9
  $region8: #{generator_forward.11} parent=0 // pred_region
    _
  $region9: #{generator_forward.11} parent=0 // pred_fallthru
    _
  %v15 = vld [vmem:[%s0] sm:$0xff]
  %v16 = vld [vmem:[%s0 + $0x8] sm:$0xff]
  %v17 = vld [vmem:[%s0 + $0x10] sm:$0xf]
  %v18 = vld [vmem:[%s0 + $0x14] sm:$0xff]
  %v19 = vld [vmem:[%s0 + $0x1c] sm:$0xff]
  %v20 = vld [vmem:[%s0 + $0x24] sm:$0xf]
  %v21 = vld [vmem:[%s0 + $0x28] sm:$0xff]
  %v22 = vld [vmem:[%s0 + $0x30] sm:$0xff]
  %v23 = vld [vmem:[%s0 + $0x38] sm:$0xf]
  %v24 = vld [vmem:[%s0 + $0x3c] sm:$0xff]
  %v25 = vld [vmem:[%s0 + $0x44] sm:$0xff]
  %v26 = vld [vmem:[%s0 + $0x4c] sm:$0xf]
  %v27 = vld [vmem:[%s1] sm:$0xf]
  %v28 = vld [vmem:[%s1 + $0x4] sm:$0xf]
  %v29 = vld [vmem:[%s1 + $0x8] sm:$0xf]
  %v30 = vld [vmem:[%s1 + $0xc] sm:$0xf]
  %v31 = vld [vmem:[%s1 + $0x10] sm:$0xf]
  %v32 = vld [vmem:[%s1 + $0x14] sm:$0xf]
  %v33 = vld [vmem:[%s1 + $0x18] sm:$0xf]
  %v34 = vld [vmem:[%s1 + $0x1c] sm:$0xf]
  %v35 = vld [vmem:[%s1 + $0x20] sm:$0xf]
  %v36 = vld [vmem:[%s1 + $0x24] sm:$0xf]
  %v37 = vld [vmem:[%s1 + $0x28] sm:$0xf]
  %v38 = vld [vmem:[%s1 + $0x2c] sm:$0xf]
  %v39 = vld [vmem:[%s1 + $0x30] sm:$0xf]
  %v40 = vld [vmem:[%s1 + $0x34] sm:$0xf]
  %v41 = vld [vmem:[%s1 + $0x38] sm:$0xf]
  %v42 = vld [vmem:[%s1 + $0x3c] sm:$0xf]
  %v43 = vld [vmem:[%s1 + $0x40] sm:$0xf]
  %v44 = vld [vmem:[%s1 + $0x44] sm:$0xf]
  %v45 = vld [vmem:[%s1 + $0x48] sm:$0xf]
  %v46 = vld [vmem:[%s1 + $0x4c] sm:$0xf]
  %v47 = vld [vmem:[%s1 + $0x50] sm:$0xf]
  %v48 = vld [vmem:[%s1 + $0x54] sm:$0xf]
  %v49 = vld [vmem:[%s1 + $0x58] sm:$0xf]
  %v50 = vld [vmem:[%s1 + $0x5c] sm:$0xf]
  %v51 = vld [vmem:[%s1 + $0x60] sm:$0xf]
  %v52 = vld [vmem:[%s1 + $0x64] sm:$0xf]
  %v53 = vld [vmem:[%s1 + $0x68] sm:$0xf]
  %v54 = vld [vmem:[%s1 + $0x6c] sm:$0xf]
  %v55 = vld [vmem:[%s1 + $0x70] sm:$0xf]
  %v56 = vld [vmem:[%s1 + $0x74] sm:$0xf]
  %v57 = vld [vmem:[%s1 + $0x78] sm:$0xf]
  %v58 = vld [vmem:[%s1 + $0x7c] sm:$0xf]
  %v59 = vld [vmem:[%s1 + $0x80] sm:$0xf]
  %v60 = vld [vmem:[%s1 + $0x84] sm:$0xf]
  %v61 = vld [vmem:[%s1 + $0x88] sm:$0xf]
  %v62 = vld [vmem:[%s1 + $0x8c] sm:$0xf]
  %v63 = vld [vmem:[%s1 + $0x90] sm:$0xf]
  %v64 = vld [vmem:[%s1 + $0x94] sm:$0xf]
  %v65 = vld [vmem:[%s1 + $0x98] sm:$0xf]
  %v66 = vld [vmem:[%s1 + $0x9c] sm:$0xf]
  %v67 = vld [vmem:[%s1 + $0xa0] sm:$0xf]
  %v68 = vld [vmem:[%s1 + $0xa4] sm:$0xf]
  %v69 = vld [vmem:[%s1 + $0xa8] sm:$0xf]
  %v70 = vld [vmem:[%s1 + $0xac] sm:$0xf]
  %v71 = vld [vmem:[%s1 + $0xb0] sm:$0xf]
  %v72 = vld [vmem:[%s1 + $0xb4] sm:$0xf]
  %v73 = vld [vmem:[%s1 + $0xb8] sm:$0xf]
  %v74 = vld [vmem:[%s1 + $0xbc] sm:$0xf]
  %v75 = vld [vmem:[%s1 + $0xc0] sm:$0xf]
  %v76 = vld [vmem:[%s1 + $0xc4] sm:$0xf]
  %v77 = vld [vmem:[%s1 + $0xc8] sm:$0xf]
  %v78 = vld [vmem:[%s1 + $0xcc] sm:$0xf]
  %v79 = vld [vmem:[%s1 + $0xd0] sm:$0xf]
  %v80 = vld [vmem:[%s1 + $0xd4] sm:$0xf]
  %v81 = vld [vmem:[%s1 + $0xd8] sm:$0xf]
  %v82 = vld [vmem:[%s1 + $0xdc] sm:$0xf]
  %v83 = vld [vmem:[%s1 + $0xe0] sm:$0xf]
  %v84 = vld [vmem:[%s1 + $0xe4] sm:$0xf]
  %v85 = vld [vmem:[%s1 + $0xe8] sm:$0xf]
  %v86 = vld [vmem:[%s1 + $0xec] sm:$0xf]
  %v87 = vld [vmem:[%s1 + $0xf0] sm:$0xf]
  %v88 = vld [vmem:[%s1 + $0xf4] sm:$0xf]
  %v89 = vld [vmem:[%s1 + $0xf8] sm:$0xf]
  %v90 = vld [vmem:[%s1 + $0xfc] sm:$0xf]
  %v91 = vld [vmem:[%s1 + $0x100] sm:$0xf]
  %v92 = vld [vmem:[%s1 + $0x104] sm:$0xf]
  %v93 = vld [vmem:[%s1 + $0x108] sm:$0xf]
  %v94 = vld [vmem:[%s1 + $0x10c] sm:$0xf]
  %v95 = vld [vmem:[%s1 + $0x110] sm:$0xf]
  %v96 = vld [vmem:[%s1 + $0x114] sm:$0xf]
  %v97 = vld [vmem:[%s1 + $0x118] sm:$0xf]
  %v98 = vld [vmem:[%s1 + $0x11c] sm:$0xf]
  %v111 = vunpack.c.l.b16 %v15
  %v112 = vunpack.c.h.b16 %v15
  %v113 = vunpack.c.l.b16 %v16
  %v114 = vunpack.c.h.b16 %v16
  %v115 = vunpack.c.l.b16 %v17
  %v116 = vunpack.c.l.b16 %v18
  %v117 = vunpack.c.h.b16 %v18
  %v118 = vunpack.c.l.b16 %v19
  %v119 = vunpack.c.h.b16 %v19
  %v120 = vunpack.c.l.b16 %v20
  %v121 = vunpack.c.l.b16 %v21
  %v122 = vunpack.c.h.b16 %v21
  %v123 = vunpack.c.l.b16 %v22
  %v124 = vunpack.c.h.b16 %v22
  %v125 = vunpack.c.l.b16 %v23
  %v126 = vunpack.c.l.b16 %v24
  %v127 = vunpack.c.h.b16 %v24
  %v128 = vunpack.c.l.b16 %v25
  %v129 = vunpack.c.h.b16 %v25
  %v130 = vunpack.c.l.b16 %v26
  %v131 = vpack.c.b16 %v116, %v111
  %v132 = vpack.c.b16 %v117, %v112
  %v133 = vpack.c.b16 %v118, %v113
  %v134 = vpack.c.b16 %v119, %v114
  %v135 = vpack.c.b16 %v120, %v115
  %v136 = vpack.c.b16 %v126, %v121
  %v137 = vpack.c.b16 %v127, %v122
  %v138 = vpack.c.b16 %v128, %v123
  %v139 = vpack.c.b16 %v129, %v124
  %v140 = vpack.c.b16 %v130, %v125
  %v221 = vunpack.c.l.b16 %v27
  %v222 = vunpack.c.l.b16 %v28
  %v223 = vunpack.c.l.b16 %v29
  %v224 = vunpack.c.l.b16 %v30
  %v225 = vunpack.c.l.b16 %v31
  %v226 = vunpack.c.l.b16 %v32
  %v227 = vunpack.c.l.b16 %v33
  %v228 = vunpack.c.l.b16 %v34
  %v229 = vunpack.c.l.b16 %v35
  %v230 = vunpack.c.l.b16 %v36
  %v231 = vunpack.c.l.b16 %v37
  %v232 = vunpack.c.l.b16 %v38
  %v233 = vunpack.c.l.b16 %v39
  %v234 = vunpack.c.l.b16 %v40
  %v235 = vunpack.c.l.b16 %v41
  %v236 = vunpack.c.l.b16 %v42
  %v237 = vunpack.c.l.b16 %v43
  %v238 = vunpack.c.l.b16 %v44
  %v239 = vunpack.c.l.b16 %v45
  %v240 = vunpack.c.l.b16 %v46
  %v241 = vunpack.c.l.b16 %v47
  %v242 = vunpack.c.l.b16 %v48
  %v243 = vunpack.c.l.b16 %v49
  %v244 = vunpack.c.l.b16 %v50
  %v245 = vunpack.c.l.b16 %v51
  %v246 = vunpack.c.l.b16 %v52
  %v247 = vunpack.c.l.b16 %v53
  %v248 = vunpack.c.l.b16 %v54
  %v249 = vunpack.c.l.b16 %v55
  %v250 = vunpack.c.l.b16 %v56
  %v251 = vunpack.c.l.b16 %v57
  %v252 = vunpack.c.l.b16 %v58
  %v253 = vunpack.c.l.b16 %v59
  %v254 = vunpack.c.l.b16 %v60
  %v255 = vunpack.c.l.b16 %v61
  %v256 = vunpack.c.l.b16 %v62
  %v257 = vunpack.c.l.b16 %v63
  %v258 = vunpack.c.l.b16 %v64
  %v259 = vunpack.c.l.b16 %v65
  %v260 = vunpack.c.l.b16 %v66
  %v261 = vunpack.c.l.b16 %v67
  %v262 = vunpack.c.l.b16 %v68
  %v263 = vunpack.c.l.b16 %v69
  %v264 = vunpack.c.l.b16 %v70
  %v265 = vunpack.c.l.b16 %v71
  %v266 = vunpack.c.l.b16 %v72
  %v267 = vunpack.c.l.b16 %v73
  %v268 = vunpack.c.l.b16 %v74
  %v269 = vunpack.c.l.b16 %v75
  %v270 = vunpack.c.l.b16 %v76
  %v271 = vunpack.c.l.b16 %v77
  %v272 = vunpack.c.l.b16 %v78
  %v273 = vunpack.c.l.b16 %v79
  %v274 = vunpack.c.l.b16 %v80
  %v275 = vunpack.c.l.b16 %v81
  %v276 = vunpack.c.l.b16 %v82
  %v277 = vunpack.c.l.b16 %v83
  %v278 = vunpack.c.l.b16 %v84
  %v279 = vunpack.c.l.b16 %v85
  %v280 = vunpack.c.l.b16 %v86
  %v281 = vunpack.c.l.b16 %v87
  %v282 = vunpack.c.l.b16 %v88
  %v283 = vunpack.c.l.b16 %v89
  %v284 = vunpack.c.l.b16 %v90
  %v285 = vunpack.c.l.b16 %v91
  %v286 = vunpack.c.l.b16 %v92
  %v287 = vunpack.c.l.b16 %v93
  %v288 = vunpack.c.l.b16 %v94
  %v289 = vunpack.c.l.b16 %v95
  %v290 = vunpack.c.l.b16 %v96
  %v291 = vunpack.c.l.b16 %v97
  %v292 = vunpack.c.l.b16 %v98
  %v293 = vpack.c.b16 %v222, %v221
  %v294 = vpack.c.b16 %v224, %v223
  %v295 = vpack.c.b16 %v226, %v225
  %v296 = vpack.c.b16 %v228, %v227
  %v297 = vpack.c.b16 %v230, %v229
  %v298 = vpack.c.b16 %v232, %v231
  %v299 = vpack.c.b16 %v234, %v233
  %v300 = vpack.c.b16 %v236, %v235
  %v301 = vpack.c.b16 %v238, %v237
  %v302 = vpack.c.b16 %v240, %v239
  %v303 = vpack.c.b16 %v242, %v241
  %v304 = vpack.c.b16 %v244, %v243
  %v305 = vpack.c.b16 %v246, %v245
  %v306 = vpack.c.b16 %v248, %v247
  %v307 = vpack.c.b16 %v250, %v249
  %v308 = vpack.c.b16 %v252, %v251
  %v309 = vpack.c.b16 %v254, %v253
  %v310 = vpack.c.b16 %v256, %v255
  %v311 = vpack.c.b16 %v258, %v257
  %v312 = vpack.c.b16 %v260, %v259
  %v313 = vpack.c.b16 %v262, %v261
  %v314 = vpack.c.b16 %v264, %v263
  %v315 = vpack.c.b16 %v266, %v265
  %v316 = vpack.c.b16 %v268, %v267
  %v317 = vpack.c.b16 %v270, %v269
  %v318 = vpack.c.b16 %v272, %v271
  %v319 = vpack.c.b16 %v274, %v273
  %v320 = vpack.c.b16 %v276, %v275
  %v321 = vpack.c.b16 %v278, %v277
  %v322 = vpack.c.b16 %v280, %v279
  %v323 = vpack.c.b16 %v282, %v281
  %v324 = vpack.c.b16 %v284, %v283
  %v325 = vpack.c.b16 %v286, %v285
  %v326 = vpack.c.b16 %v288, %v287
  %v327 = vpack.c.b16 %v290, %v289
  %v328 = vpack.c.b16 %v292, %v291
  %vm365 = vcmask 523264
  %v367 = vsel %vm365, %v135, 0
  %v370 = vsel %vm365, %v140, 0
  %372 = vmatpush.bf16.msra.mxu0 %v300
  %373 = vmatpush.bf16.msra.mxu0 %v299
  %374 = vmatpush.bf16.msra.mxu0 %v298
  %375 = vmatpush.bf16.msra.mxu0 %v297
  %376 = vmatpush.bf16.msra.mxu0 %v296
  %377 = vmatpush.bf16.msra.mxu0 %v295
  %378 = vmatpush.bf16.msra.mxu0 %v294
  %379 = vmatpush.bf16.msra.mxu0 %v293
  %380 = vmatmul.bf16.gmra.mxu0 %v131
  %v381 = vpop.f32.mrf.mxu0
  %v382 = vadd.f32 0.0, %v381
  %v383 = vpop.f32.mrf.mxu0
  %v384 = vadd.f32 0.0, %v383
  %385 = vmatmul.bf16.gmra.mxu0 %v136
  %v386 = vpop.f32.mrf.mxu0
  %v387 = vadd.f32 0.0, %v386
  %v388 = vpop.f32.mrf.mxu0
  %v389 = vadd.f32 0.0, %v388
  %390 = vdwg.mxu0
  %391 = vmatpush.bf16.msra.mxu0 %v308
  %392 = vmatpush.bf16.msra.mxu0 %v307
  %393 = vmatpush.bf16.msra.mxu0 %v306
  %394 = vmatpush.bf16.msra.mxu0 %v305
  %395 = vmatpush.bf16.msra.mxu0 %v304
  %396 = vmatpush.bf16.msra.mxu0 %v303
  %397 = vmatpush.bf16.msra.mxu0 %v302
  %398 = vmatpush.bf16.msra.mxu0 %v301
  %399 = vmatmul.bf16.gmra.mxu0 %v132
  %v400 = vpop.f32.mrf.mxu0
  %v401 = vadd.f32 %v382, %v400
  %v402 = vpop.f32.mrf.mxu0
  %v403 = vadd.f32 %v384, %v402
  %404 = vmatmul.bf16.gmra.mxu0 %v137
  %v405 = vpop.f32.mrf.mxu0
  %v406 = vadd.f32 %v387, %v405
  %v407 = vpop.f32.mrf.mxu0
  %v408 = vadd.f32 %v389, %v407
  %409 = vdwg.mxu0
  %410 = vmatpush.bf16.msra.mxu0 %v316
  %411 = vmatpush.bf16.msra.mxu0 %v315
  %412 = vmatpush.bf16.msra.mxu0 %v314
  %413 = vmatpush.bf16.msra.mxu0 %v313
  %414 = vmatpush.bf16.msra.mxu0 %v312
  %415 = vmatpush.bf16.msra.mxu0 %v311
  %416 = vmatpush.bf16.msra.mxu0 %v310
  %417 = vmatpush.bf16.msra.mxu0 %v309
  %418 = vmatmul.bf16.gmra.mxu0 %v133
  %v419 = vpop.f32.mrf.mxu0
  %v420 = vadd.f32 %v401, %v419
  %v421 = vpop.f32.mrf.mxu0
  %v422 = vadd.f32 %v403, %v421
  %423 = vmatmul.bf16.gmra.mxu0 %v138
  %v424 = vpop.f32.mrf.mxu0
  %v425 = vadd.f32 %v406, %v424
  %v426 = vpop.f32.mrf.mxu0
  %v427 = vadd.f32 %v408, %v426
  %428 = vdwg.mxu0
  %429 = vmatpush.bf16.msra.mxu0 %v324
  %430 = vmatpush.bf16.msra.mxu0 %v323
  %431 = vmatpush.bf16.msra.mxu0 %v322
  %432 = vmatpush.bf16.msra.mxu0 %v321
  %433 = vmatpush.bf16.msra.mxu0 %v320
  %434 = vmatpush.bf16.msra.mxu0 %v319
  %435 = vmatpush.bf16.msra.mxu0 %v318
  %436 = vmatpush.bf16.msra.mxu0 %v317
  %437 = vmatmul.bf16.gmra.mxu0 %v134
  %v438 = vpop.f32.mrf.mxu0
  %v439 = vadd.f32 %v420, %v438
  %v440 = vpop.f32.mrf.mxu0
  %v441 = vadd.f32 %v422, %v440
  %442 = vmatmul.bf16.gmra.mxu0 %v139
  %v443 = vpop.f32.mrf.mxu0
  %v444 = vadd.f32 %v425, %v443
  %v445 = vpop.f32.mrf.mxu0
  %v446 = vadd.f32 %v427, %v445
  %447 = vdwg.mxu0
  %448 = vmatpush.bf16.msra.mxu0 0
  %449 = vmatpush.bf16.msra.mxu0 0
  %450 = vmatpush.bf16.msra.mxu0 0
  %451 = vmatpush.bf16.msra.mxu0 0
  %452 = vmatpush.bf16.msra.mxu0 %v328
  %453 = vmatpush.bf16.msra.mxu0 %v327
  %454 = vmatpush.bf16.msra.mxu0 %v326
  %455 = vmatpush.bf16.msra.mxu0 %v325
  %456 = vmatmul.bf16.gmra.mxu0 %v367
  %v457 = vpop.f32.mrf.mxu0
  %v458 = vadd.f32 %v439, %v457
  %v459 = vpop.f32.mrf.mxu0
  %v460 = vadd.f32 %v441, %v459
  %461 = vmatmul.bf16.gmra.mxu0 %v370
  %v462 = vpop.f32.mrf.mxu0
  %v463 = vadd.f32 %v444, %v462
  %v464 = vpop.f32.mrf.mxu0
  %v465 = vadd.f32 %v446, %v464
  %466 = vdwg.mxu0
  %467 = vst [vmem:[%s2] sm:$0xff] %v458
  %468 = vst [vmem:[%s2 + $0x8] sm:$0xff] %v460
  %469 = vst [vmem:[%s2 + $0x10] sm:$0xff] %v463
  %470 = vst [vmem:[%s2 + $0x18] sm:$0xff] %v465
  %v471 = vadd.f32 %v458, %v460
  %v472 = vadd.f32 %v471, %v463
  %v473 = vadd.f32 %v472, %v465
  %v474 = vrot.slane %v473, 4
  %v475 = vadd.f32 %v473, %v474
  %v476 = vrot.slane %v475, 2
  %v477 = vadd.f32 %v475, %v476
  %v478 = vrot.slane %v477, 1
  %v479 = vadd.f32 %v477, %v478
  %v480 = vmul.f32 %v458, %v458
  %v481 = vmul.f32 %v460, %v460
  %v482 = vmul.f32 %v463, %v463
  %v483 = vmul.f32 %v465, %v465
  %v484 = vadd.f32 %v480, %v481
  %v485 = vadd.f32 %v484, %v482
  %v486 = vadd.f32 %v485, %v483
  %v487 = vrot.slane %v486, 4
  %v488 = vadd.f32 %v486, %v487
  %v489 = vrot.slane %v488, 2
  %v490 = vadd.f32 %v488, %v489
  %v491 = vrot.slane %v490, 1
  %v492 = vadd.f32 %v490, %v491
  %493 = vst [vmem:[%s3] sm:$0xff] %v479
  %494 = vst [vmem:[%s4] sm:$0xff] %v492
  // Predicated region
  $region10: #{generator_forward.11} parent=0 // pred_check
    _
  $region11: #{generator_forward.11} parent=0 // pred_check_branch
    %496 = sbr.rel (0) target = $region13
  $region12: #{generator_forward.11} parent=0 // pred_region
    _
  $region13: #{generator_forward.11} parent=0 // pred_fallthru
    _
  // Predicated region
  $region14: #{generator_forward.11} parent=0 // pred_check
    _
  $region15: #{generator_forward.11} parent=0 // pred_check_branch
    %498 = sbr.rel (0) target = $region17
  $region16: #{generator_forward.11} parent=0 // pred_region
    _
  $region17: #{generator_forward.11} parent=0 // pred_fallthru
    _
  // Predicated region
  $region18: #{generator_forward.11} parent=0 // pred_check
    _
  $region19: #{generator_forward.11} parent=0 // pred_check_branch
    %500 = sbr.rel (0) target = $region21
  $region20: #{generator_forward.11} parent=0 // pred_region
    _
  $region21: #{generator_forward.11} parent=0 // pred_fallthru
    _
  // Predicated region
  $region22: #{generator_forward.11} parent=0 // pred_check
    _
  $region23: #{generator_forward.11} parent=0 // pred_check_branch
    %502 = sbr.rel (0) target = $region25
  $region24: #{generator_forward.11} parent=0 // pred_region
    _
  $region25: #{generator_forward.11} parent=0 // pred_fallthru
    _
  // Predicated region
  $region26: #{generator_forward.11} parent=0 // pred_check
    _
  $region27: #{generator_forward.11} parent=0 // pred_check_branch
    %504 = sbr.rel (0) target = $region29
  $region28: #{generator_forward.11} parent=0 // pred_region
    _
  $region29: #{generator_forward.11} parent=0 // pred_fallthru
    _
  // Predicated region
  $region30: #{generator_forward.11} parent=0 // pred_check
    _
  $region31: #{generator_forward.11} parent=0 // pred_check_branch
    %506 = sbr.rel (0) target = $region33
  $region32: #{generator_forward.11} parent=0 // pred_region
    _
  $region33: #{generator_forward.11} parent=0 // pred_fallthru
    _

// kernel: tile.68
$region0: #{tile.68}
  #allocation0 [shape = 's32[1]{0}', space=sflag, size = 0x4, scoped, tag = 'scoped memory for tile.68']
  %s0 = inlined_call_operand.vmem [shape: f32[16], index: 0, kind: input, shape index: {}]
  %s1 = inlined_call_operand.vmem [shape: f32[4,16], index: 1, kind: output, shape index: {}]
  // Predicated region
  $region2: #{tile.68} parent=0 // pred_check
    _
  $region3: #{tile.68} parent=0 // pred_check_branch
    %3 = sbr.rel (0) target = $region5
  $region4: #{tile.68} parent=0 // pred_region
    _
  $region5: #{tile.68} parent=0 // pred_fallthru
    _
  %v4 = vld [vmem:[%s0] ss:$0 sm:$0xff]
  %5 = vst [vmem:[%s1] sm:$0xf] %v4

// kernel: tile.69
$region0: #{tile.69}
  %s0 = inlined_call_operand.vmem [shape: f32[4,16], index: 0, kind: input, shape index: {}]
  %s1 = inlined_call_operand.vmem [shape: f32[64], index: 1, kind: output, shape index: {}]
  $region1: #{tile.69} parent=0
    #allocation0 [shape = 'u8[4096]{0}', space=vmem, size = 0x1000, scoped, tag = 'scoped mem for output reshape']
    #allocation1 [shape = 'u8[4096]{0}', space=vmem, size = 0x1000, scoped, tag = 'scoped mem for input reshape']
    %s3 = ssub.s32 16, 1
    %v4 = vld [vmem:[%s0] sm:%s3]
    %5 = vst [vmem:[#allocation1] sm:%s3] %v4
    %v6 = vld [vmem:[#allocation1] sm:$0x1]
    %vm7 = vcmask 130048
    %8 = vst.msk [vmem:[#allocation0] sm:$0x1] %vm7, %v6
    %s9 = scalar_lea.vmem [#allocation1], 3
    %v10 = vld [vmem:[%s9] sm:$0x1]
    %11 = vrot.lane.b32.xlu0 %v10, 48
    %v12 = vpop.permute.xlu0 %11
    %vm13 = vcmask 523648
    %14 = vst.msk [vmem:[#allocation0] sm:$0x1] %vm13, %v12
    %s15 = scalar_lea.vmem [#allocation1], 2
    %v16 = vld [vmem:[%s15] sm:$0x1]
    %17 = vrot.lane.b32.xlu0 %v16, 32
    %v18 = vpop.permute.xlu0 %17
    %vm19 = vcmask 392448
    %20 = vst.msk [vmem:[#allocation0] sm:$0x1] %vm19, %v18
    %s21 = scalar_lea.vmem [#allocation1], 1
    %v22 = vld [vmem:[%s21] sm:$0x1]
    %23 = vrot.lane.b32.xlu0 %v22, 16
    %v24 = vpop.permute.xlu0 %23
    %vm25 = vcmask 261248
    %26 = vst.msk [vmem:[#allocation0] sm:$0x1] %vm25, %v24
    %s28 = ssub.s32 2, 1
    %v29 = vld [vmem:[#allocation0] sm:%s28]
    %s31 = ssub.s32 2, 1
    %32 = vst [vmem:[%s1] sm:%s31] %v29

// kernel: generator_forward.13
$region0: #{generator_forward.13}
  #allocation0 [shape = 'u32[]', space=smem, size = 0x4, offset = 0x4, fixed_abs, tag = 'smem constant byte address 0x4 - core index']
  #allocation1 [shape = 'u32[72,128]{1,0:T(1,128)}', space=vmem, size = 0x9000, scoped, tag = 'internal scratch']
  %s0 = inlined_call_operand.vmem [shape: bf16[128,288], index: 0, kind: input, shape index: {}]
  %s1 = inlined_call_operand.vmem [shape: bf16[288,128], index: 1, kind: input, shape index: {}]
  %s2 = inlined_call_operand.vmem [shape: f32[128,128], index: 2, kind: output, shape index: {0}]
  %s3 = inlined_call_operand.vmem [shape: f32[1,8,128], index: 3, kind: output, shape index: {1}]
  %s4 = inlined_call_operand.vmem [shape: f32[1,8,128], index: 4, kind: output, shape index: {2}]
  %5 = xla_tuple %s2, %s3, %s4
  %s6 = sld [smem:[#allocation0]]
  $region34: #{generator_forward.13} parent=0
    _
  %s8 = ssub.s32 1, %s6
  %s9 = scalar_select 0, %s8, %s6
  // Predicated region
  $region2: #{generator_forward.13} parent=0 // pred_check
    _
  $region3: #{generator_forward.13} parent=0 // pred_check_branch
    %11 = sbr.rel (0) target = $region5
  $region4: #{generator_forward.13} parent=0 // pred_region
    _
  $region5: #{generator_forward.13} parent=0 // pred_fallthru
    _
  // Predicated region
  $region6: #{generator_forward.13} parent=0 // pred_check
    _
  $region7: #{generator_forward.13} parent=0 // pred_check_branch
    %13 = sbr.rel (0) target = $region9
  $region8: #{generator_forward.13} parent=0 // pred_region
    _
  $region9: #{generator_forward.13} parent=0 // pred_fallthru
    _
  %v15 = vld [vmem:[%s0] sm:$0xff]
  %v16 = vld [vmem:[%s0 + $0x8] sm:$0xf]
  %v17 = vld [vmem:[%s0 + $0xc] sm:$0xff]
  %v18 = vld [vmem:[%s0 + $0x14] sm:$0xf]
  %v19 = vld [vmem:[%s0 + $0x18] sm:$0xff]
  %v20 = vld [vmem:[%s0 + $0x20] sm:$0xf]
  %v21 = vld [vmem:[%s0 + $0x24] sm:$0xff]
  %v22 = vld [vmem:[%s0 + $0x2c] sm:$0xf]
  %v23 = vld [vmem:[%s0 + $0x30] sm:$0xff]
  %v24 = vld [vmem:[%s0 + $0x38] sm:$0xf]
  %v25 = vld [vmem:[%s0 + $0x3c] sm:$0xff]
  %v26 = vld [vmem:[%s0 + $0x44] sm:$0xf]
  %v27 = vld [vmem:[%s0 + $0x48] sm:$0xff]
  %v28 = vld [vmem:[%s0 + $0x50] sm:$0xf]
  %v29 = vld [vmem:[%s0 + $0x54] sm:$0xff]
  %v30 = vld [vmem:[%s0 + $0x5c] sm:$0xf]
  %v31 = vld [vmem:[%s0 + $0x60] sm:$0xff]
  %v32 = vld [vmem:[%s0 + $0x68] sm:$0xf]
  %v33 = vld [vmem:[%s0 + $0x6c] sm:$0xff]
  %v34 = vld [vmem:[%s0 + $0x74] sm:$0xf]
  %v35 = vld [vmem:[%s0 + $0x78] sm:$0xff]
  %v36 = vld [vmem:[%s0 + $0x80] sm:$0xf]
  %v37 = vld [vmem:[%s0 + $0x84] sm:$0xff]
  %v38 = vld [vmem:[%s0 + $0x8c] sm:$0xf]
  %v39 = vld [vmem:[%s0 + $0x90] sm:$0xff]
  %v40 = vld [vmem:[%s0 + $0x98] sm:$0xf]
  %v41 = vld [vmem:[%s0 + $0x9c] sm:$0xff]
  %v42 = vld [vmem:[%s0 + $0xa4] sm:$0xf]
  %v43 = vld [vmem:[%s0 + $0xa8] sm:$0xff]
  %v44 = vld [vmem:[%s0 + $0xb0] sm:$0xf]
  %v45 = vld [vmem:[%s0 + $0xb4] sm:$0xff]
  %v46 = vld [vmem:[%s0 + $0xbc] sm:$0xf]
  %v47 = vld [vmem:[%s1] sm:$0xf]
  %v48 = vld [vmem:[%s1 + $0x4] sm:$0xf]
  %v49 = vld [vmem:[%s1 + $0x8] sm:$0xf]
  %v50 = vld [vmem:[%s1 + $0xc] sm:$0xf]
  %v51 = vld [vmem:[%s1 + $0x10] sm:$0xf]
  %v52 = vld [vmem:[%s1 + $0x14] sm:$0xf]
  %v53 = vld [vmem:[%s1 + $0x18] sm:$0xf]
  %v54 = vld [vmem:[%s1 + $0x1c] sm:$0xf]
  %v55 = vld [vmem:[%s1 + $0x20] sm:$0xf]
  %v56 = vld [vmem:[%s1 + $0x24] sm:$0xf]
  %v57 = vld [vmem:[%s1 + $0x28] sm:$0xf]
  %v58 = vld [vmem:[%s1 + $0x2c] sm:$0xf]
  %v59 = vld [vmem:[%s1 + $0x30] sm:$0xf]
  %v60 = vld [vmem:[%s1 + $0x34] sm:$0xf]
  %v61 = vld [vmem:[%s1 + $0x38] sm:$0xf]
  %v62 = vld [vmem:[%s1 + $0x3c] sm:$0xf]
  %v63 = vld [vmem:[%s1 + $0x40] sm:$0xf]
  %v64 = vld [vmem:[%s1 + $0x44] sm:$0xf]
  %v65 = vld [vmem:[%s1 + $0x48] sm:$0xf]
  %v66 = vld [vmem:[%s1 + $0x4c] sm:$0xf]
  %v67 = vld [vmem:[%s1 + $0x50] sm:$0xf]
  %v68 = vld [vmem:[%s1 + $0x54] sm:$0xf]
  %v69 = vld [vmem:[%s1 + $0x58] sm:$0xf]
  %v70 = vld [vmem:[%s1 + $0x5c] sm:$0xf]
  %v71 = vld [vmem:[%s1 + $0x60] sm:$0xf]
  %v72 = vld [vmem:[%s1 + $0x64] sm:$0xf]
  %v73 = vld [vmem:[%s1 + $0x68] sm:$0xf]
  %v74 = vld [vmem:[%s1 + $0x6c] sm:$0xf]
  %v75 = vld [vmem:[%s1 + $0x70] sm:$0xf]
  %v76 = vld [vmem:[%s1 + $0x74] sm:$0xf]
  %v77 = vld [vmem:[%s1 + $0x78] sm:$0xf]
  %v78 = vld [vmem:[%s1 + $0x7c] sm:$0xf]
  %v79 = vld [vmem:[%s1 + $0x80] sm:$0xf]
  %v80 = vld [vmem:[%s1 + $0x84] sm:$0xf]
  %v81 = vld [vmem:[%s1 + $0x88] sm:$0xf]
  %v82 = vld [vmem:[%s1 + $0x8c] sm:$0xf]
  %v115 = vunpack.c.l.b16 %v15
  %v116 = vunpack.c.h.b16 %v15
  %v117 = vunpack.c.l.b16 %v16
  %v118 = vunpack.c.l.b16 %v17
  %v119 = vunpack.c.h.b16 %v17
  %v120 = vunpack.c.l.b16 %v18
  %v121 = vunpack.c.l.b16 %v19
  %v122 = vunpack.c.h.b16 %v19
  %v123 = vunpack.c.l.b16 %v20
  %v124 = vunpack.c.l.b16 %v21
  %v125 = vunpack.c.h.b16 %v21
  %v126 = vunpack.c.l.b16 %v22
  %v127 = vunpack.c.l.b16 %v23
  %v128 = vunpack.c.h.b16 %v23
  %v129 = vunpack.c.l.b16 %v24
  %v130 = vunpack.c.l.b16 %v25
  %v131 = vunpack.c.h.b16 %v25
  %v132 = vunpack.c.l.b16 %v26
  %v133 = vunpack.c.l.b16 %v27
  %v134 = vunpack.c.h.b16 %v27
  %v135 = vunpack.c.l.b16 %v28
  %v136 = vunpack.c.l.b16 %v29
  %v137 = vunpack.c.h.b16 %v29
  %v138 = vunpack.c.l.b16 %v30
  %v139 = vunpack.c.l.b16 %v31
  %v140 = vunpack.c.h.b16 %v31
  %v141 = vunpack.c.l.b16 %v32
  %v142 = vunpack.c.l.b16 %v33
  %v143 = vunpack.c.h.b16 %v33
  %v144 = vunpack.c.l.b16 %v34
  %v145 = vunpack.c.l.b16 %v35
  %v146 = vunpack.c.h.b16 %v35
  %v147 = vunpack.c.l.b16 %v36
  %v148 = vunpack.c.l.b16 %v37
  %v149 = vunpack.c.h.b16 %v37
  %v150 = vunpack.c.l.b16 %v38
  %v151 = vunpack.c.l.b16 %v39
  %v152 = vunpack.c.h.b16 %v39
  %v153 = vunpack.c.l.b16 %v40
  %v154 = vunpack.c.l.b16 %v41
  %v155 = vunpack.c.h.b16 %v41
  %v156 = vunpack.c.l.b16 %v42
  %v157 = vunpack.c.l.b16 %v43
  %v158 = vunpack.c.h.b16 %v43
  %v159 = vunpack.c.l.b16 %v44
  %v160 = vunpack.c.l.b16 %v45
  %v161 = vunpack.c.h.b16 %v45
  %v162 = vunpack.c.l.b16 %v46
  %v163 = vpack.c.b16 %v118, %v115
  %v164 = vpack.c.b16 %v119, %v116
  %v165 = vpack.c.b16 %v120, %v117
  %v166 = vpack.c.b16 %v124, %v121
  %v167 = vpack.c.b16 %v125, %v122
  %v168 = vpack.c.b16 %v126, %v123
  %v169 = vpack.c.b16 %v130, %v127
  %v170 = vpack.c.b16 %v131, %v128
  %v171 = vpack.c.b16 %v132, %v129
  %v172 = vpack.c.b16 %v136, %v133
  %v173 = vpack.c.b16 %v137, %v134
  %v174 = vpack.c.b16 %v138, %v135
  %v175 = vpack.c.b16 %v142, %v139
  %v176 = vpack.c.b16 %v143, %v140
  %v177 = vpack.c.b16 %v144, %v141
  %v178 = vpack.c.b16 %v148, %v145
  %v179 = vpack.c.b16 %v149, %v146
  %v180 = vpack.c.b16 %v150, %v147
  %v181 = vpack.c.b16 %v154, %v151
  %v182 = vpack.c.b16 %v155, %v152
  %v183 = vpack.c.b16 %v156, %v153
  %v184 = vpack.c.b16 %v160, %v157
  %v185 = vpack.c.b16 %v161, %v158
  %v186 = vpack.c.b16 %v162, %v159
  %v239 = vunpack.c.l.b16 %v47
  %v240 = vunpack.c.l.b16 %v48
  %v241 = vunpack.c.l.b16 %v49
  %v242 = vunpack.c.l.b16 %v50
  %v243 = vunpack.c.l.b16 %v51
  %v244 = vunpack.c.l.b16 %v52
  %v245 = vunpack.c.l.b16 %v53
  %v246 = vunpack.c.l.b16 %v54
  %v247 = vunpack.c.l.b16 %v55
  %v248 = vunpack.c.l.b16 %v56
  %v249 = vunpack.c.l.b16 %v57
  %v250 = vunpack.c.l.b16 %v58
  %v251 = vunpack.c.l.b16 %v59
  %v252 = vunpack.c.l.b16 %v60
  %v253 = vunpack.c.l.b16 %v61
  %v254 = vunpack.c.l.b16 %v62
  %v255 = vunpack.c.l.b16 %v63
  %v256 = vunpack.c.l.b16 %v64
  %v257 = vunpack.c.l.b16 %v65
  %v258 = vunpack.c.l.b16 %v66
  %v259 = vunpack.c.l.b16 %v67
  %v260 = vunpack.c.l.b16 %v68
  %v261 = vunpack.c.l.b16 %v69
  %v262 = vunpack.c.l.b16 %v70
  %v263 = vunpack.c.l.b16 %v71
  %v264 = vunpack.c.l.b16 %v72
  %v265 = vunpack.c.l.b16 %v73
  %v266 = vunpack.c.l.b16 %v74
  %v267 = vunpack.c.l.b16 %v75
  %v268 = vunpack.c.l.b16 %v76
  %v269 = vunpack.c.l.b16 %v77
  %v270 = vunpack.c.l.b16 %v78
  %v271 = vunpack.c.l.b16 %v79
  %v272 = vunpack.c.l.b16 %v80
  %v273 = vunpack.c.l.b16 %v81
  %v274 = vunpack.c.l.b16 %v82
  %v275 = vpack.c.b16 %v240, %v239
  %v276 = vpack.c.b16 %v242, %v241
  %v277 = vpack.c.b16 %v244, %v243
  %v278 = vpack.c.b16 %v246, %v245
  %v279 = vpack.c.b16 %v248, %v247
  %v280 = vpack.c.b16 %v250, %v249
  %v281 = vpack.c.b16 %v252, %v251
  %v282 = vpack.c.b16 %v254, %v253
  %v283 = vpack.c.b16 %v256, %v255
  %v284 = vpack.c.b16 %v258, %v257
  %v285 = vpack.c.b16 %v260, %v259
  %v286 = vpack.c.b16 %v262, %v261
  %v287 = vpack.c.b16 %v264, %v263
  %v288 = vpack.c.b16 %v266, %v265
  %v289 = vpack.c.b16 %v268, %v267
  %v290 = vpack.c.b16 %v270, %v269
  %v291 = vpack.c.b16 %v272, %v271
  %v292 = vpack.c.b16 %v274, %v273
  %vm311 = vcmask 261120
  %v313 = vsel %vm311, %v165, 0
  %v316 = vsel %vm311, %v168, 0
  %v319 = vsel %vm311, %v171, 0
  %v322 = vsel %vm311, %v174, 0
  %v325 = vsel %vm311, %v177, 0
  %v328 = vsel %vm311, %v180, 0
  %v331 = vsel %vm311, %v183, 0
  %v334 = vsel %vm311, %v186, 0
  %336 = vmatpush.bf16.msra.mxu0 %v282
  %337 = vmatpush.bf16.msra.mxu0 %v281
  %338 = vmatpush.bf16.msra.mxu0 %v280
  %339 = vmatpush.bf16.msra.mxu0 %v279
  %340 = vmatpush.bf16.msra.mxu0 %v278
  %341 = vmatpush.bf16.msra.mxu0 %v277
  %342 = vmatpush.bf16.msra.mxu0 %v276
  %343 = vmatpush.bf16.msra.mxu0 %v275
  %344 = vmatmul.bf16.gmra.mxu0 %v163
  %v345 = vpop.f32.mrf.mxu0
  %v346 = vadd.f32 0.0, %v345
  %v347 = vpop.f32.mrf.mxu0
  %v348 = vadd.f32 0.0, %v347
  %349 = vmatmul.bf16.gmra.mxu0 %v166
  %v350 = vpop.f32.mrf.mxu0
  %v351 = vadd.f32 0.0, %v350
  %v352 = vpop.f32.mrf.mxu0
  %v353 = vadd.f32 0.0, %v352
  %354 = vmatmul.bf16.gmra.mxu0 %v169
  %v355 = vpop.f32.mrf.mxu0
  %v356 = vadd.f32 0.0, %v355
  %v357 = vpop.f32.mrf.mxu0
  %v358 = vadd.f32 0.0, %v357
  %359 = vmatmul.bf16.gmra.mxu0 %v172
  %v360 = vpop.f32.mrf.mxu0
  %v361 = vadd.f32 0.0, %v360
  %v362 = vpop.f32.mrf.mxu0
  %v363 = vadd.f32 0.0, %v362
  %364 = vmatmul.bf16.gmra.mxu0 %v175
  %v365 = vpop.f32.mrf.mxu0
  %v366 = vadd.f32 0.0, %v365
  %v367 = vpop.f32.mrf.mxu0
  %v368 = vadd.f32 0.0, %v367
  %369 = vmatmul.bf16.gmra.mxu0 %v178
  %v370 = vpop.f32.mrf.mxu0
  %v371 = vadd.f32 0.0, %v370
  %v372 = vpop.f32.mrf.mxu0
  %v373 = vadd.f32 0.0, %v372
  %374 = vmatmul.bf16.gmra.mxu0 %v181
  %v375 = vpop.f32.mrf.mxu0
  %v376 = vadd.f32 0.0, %v375
  %v377 = vpop.f32.mrf.mxu0
  %v378 = vadd.f32 0.0, %v377
  %379 = vmatmul.bf16.gmra.mxu0 %v184
  %v380 = vpop.f32.mrf.mxu0
  %v381 = vadd.f32 0.0, %v380
  %v382 = vpop.f32.mrf.mxu0
  %v383 = vadd.f32 0.0, %v382
  %384 = vdwg.mxu0
  %385 = vmatpush.bf16.msra.mxu0 %v290
  %386 = vmatpush.bf16.msra.mxu0 %v289
  %387 = vmatpush.bf16.msra.mxu0 %v288
  %388 = vmatpush.bf16.msra.mxu0 %v287
  %389 = vmatpush.bf16.msra.mxu0 %v286
  %390 = vmatpush.bf16.msra.mxu0 %v285
  %391 = vmatpush.bf16.msra.mxu0 %v284
  %392 = vmatpush.bf16.msra.mxu0 %v283
  %393 = vmatmul.bf16.gmra.mxu0 %v164
  %v394 = vpop.f32.mrf.mxu0
  %v395 = vadd.f32 %v346, %v394
  %v396 = vpop.f32.mrf.mxu0
  %v397 = vadd.f32 %v348, %v396
  %398 = vmatmul.bf16.gmra.mxu0 %v167
  %v399 = vpop.f32.mrf.mxu0
  %v400 = vadd.f32 %v351, %v399
  %v401 = vpop.f32.mrf.mxu0
  %v402 = vadd.f32 %v353, %v401
  %403 = vmatmul.bf16.gmra.mxu0 %v170
  %v404 = vpop.f32.mrf.mxu0
  %v405 = vadd.f32 %v356, %v404
  %v406 = vpop.f32.mrf.mxu0
  %v407 = vadd.f32 %v358, %v406
  %408 = vmatmul.bf16.gmra.mxu0 %v173
  %v409 = vpop.f32.mrf.mxu0
  %v410 = vadd.f32 %v361, %v409
  %v411 = vpop.f32.mrf.mxu0
  %v412 = vadd.f32 %v363, %v411
  %413 = vmatmul.bf16.gmra.mxu0 %v176
  %v414 = vpop.f32.mrf.mxu0
  %v415 = vadd.f32 %v366, %v414
  %v416 = vpop.f32.mrf.mxu0
  %v417 = vadd.f32 %v368, %v416
  %418 = vmatmul.bf16.gmra.mxu0 %v179
  %v419 = vpop.f32.mrf.mxu0
  %v420 = vadd.f32 %v371, %v419
  %v421 = vpop.f32.mrf.mxu0
  %v422 = vadd.f32 %v373, %v421
  %423 = vmatmul.bf16.gmra.mxu0 %v182
  %v424 = vpop.f32.mrf.mxu0
  %v425 = vadd.f32 %v376, %v424
  %v426 = vpop.f32.mrf.mxu0
  %v427 = vadd.f32 %v378, %v426
  %428 = vmatmul.bf16.gmra.mxu0 %v185
  %v429 = vpop.f32.mrf.mxu0
  %v430 = vadd.f32 %v381, %v429
  %v431 = vpop.f32.mrf.mxu0
  %v432 = vadd.f32 %v383, %v431
  %433 = vdwg.mxu0
  %434 = vmatpush.bf16.msra.mxu0 0
  %435 = vmatpush.bf16.msra.mxu0 0
  %436 = vmatpush.bf16.msra.mxu0 0
  %437 = vmatpush.bf16.msra.mxu0 0
  %438 = vmatpush.bf16.msra.mxu0 0
  %439 = vmatpush.bf16.msra.mxu0 0
  %440 = vmatpush.bf16.msra.mxu0 %v292
  %441 = vmatpush.bf16.msra.mxu0 %v291
  %442 = vmatmul.bf16.gmra.mxu0 %v313
  %v443 = vpop.f32.mrf.mxu0
  %v444 = vadd.f32 %v395, %v443
  %v445 = vpop.f32.mrf.mxu0
  %v446 = vadd.f32 %v397, %v445
  %447 = vmatmul.bf16.gmra.mxu0 %v316
  %v448 = vpop.f32.mrf.mxu0
  %v449 = vadd.f32 %v400, %v448
  %v450 = vpop.f32.mrf.mxu0
  %v451 = vadd.f32 %v402, %v450
  %452 = vmatmul.bf16.gmra.mxu0 %v319
  %v453 = vpop.f32.mrf.mxu0
  %v454 = vadd.f32 %v405, %v453
  %v455 = vpop.f32.mrf.mxu0
  %v456 = vadd.f32 %v407, %v455
  %457 = vmatmul.bf16.gmra.mxu0 %v322
  %v458 = vpop.f32.mrf.mxu0
  %v459 = vadd.f32 %v410, %v458
  %v460 = vpop.f32.mrf.mxu0
  %v461 = vadd.f32 %v412, %v460
  %462 = vmatmul.bf16.gmra.mxu0 %v325
  %v463 = vpop.f32.mrf.mxu0
  %v464 = vadd.f32 %v415, %v463
  %v465 = vpop.f32.mrf.mxu0
  %v466 = vadd.f32 %v417, %v465
  %467 = vmatmul.bf16.gmra.mxu0 %v328
  %v468 = vpop.f32.mrf.mxu0
  %v469 = vadd.f32 %v420, %v468
  %v470 = vpop.f32.mrf.mxu0
  %v471 = vadd.f32 %v422, %v470
  %472 = vmatmul.bf16.gmra.mxu0 %v331
  %v473 = vpop.f32.mrf.mxu0
  %v474 = vadd.f32 %v425, %v473
  %v475 = vpop.f32.mrf.mxu0
  %v476 = vadd.f32 %v427, %v475
  %477 = vmatmul.bf16.gmra.mxu0 %v334
  %v478 = vpop.f32.mrf.mxu0
  %v479 = vadd.f32 %v430, %v478
  %v480 = vpop.f32.mrf.mxu0
  %v481 = vadd.f32 %v432, %v480
  %482 = vdwg.mxu0
  %483 = vst [vmem:[%s2] sm:$0xff] %v444
  %484 = vst [vmem:[%s2 + $0x8] sm:$0xff] %v446
  %485 = vst [vmem:[%s2 + $0x10] sm:$0xff] %v449
  %486 = vst [vmem:[%s2 + $0x18] sm:$0xff] %v451
  %487 = vst [vmem:[%s2 + $0x20] sm:$0xff] %v454
  %488 = vst [vmem:[%s2 + $0x28] sm:$0xff] %v456
  %489 = vst [vmem:[%s2 + $0x30] sm:$0xff] %v459
  %490 = vst [vmem:[%s2 + $0x38] sm:$0xff] %v461
  %491 = vst [vmem:[%s2 + $0x40] sm:$0xff] %v464
  %492 = vst [vmem:[%s2 + $0x48] sm:$0xff] %v466
  %493 = vst [vmem:[%s2 + $0x50] sm:$0xff] %v469
  %494 = vst [vmem:[%s2 + $0x58] sm:$0xff] %v471
  %495 = vst [vmem:[%s2 + $0x60] sm:$0xff] %v474
  %496 = vst [vmem:[%s2 + $0x68] sm:$0xff] %v476
  %497 = vst [vmem:[%s2 + $0x70] sm:$0xff] %v479
  %498 = vst [vmem:[%s2 + $0x78] sm:$0xff] %v481
  %v499 = vadd.f32 %v444, %v446
  %v500 = vadd.f32 %v499, %v449
  %v501 = vadd.f32 %v500, %v451
  %v502 = vadd.f32 %v501, %v454
  %v503 = vadd.f32 %v502, %v456
  %v504 = vadd.f32 %v503, %v459
  %v505 = vadd.f32 %v504, %v461
  %v506 = vadd.f32 %v505, %v464
  %v507 = vadd.f32 %v506, %v466
  %v508 = vadd.f32 %v507, %v469
  %v509 = vadd.f32 %v508, %v471
  %v510 = vadd.f32 %v509, %v474
  %v511 = vadd.f32 %v510, %v476
  %v512 = vadd.f32 %v511, %v479
  %v513 = vadd.f32 %v512, %v481
  %v514 = vrot.slane %v513, 4
  %v515 = vadd.f32 %v513, %v514
  %v516 = vrot.slane %v515, 2
  %v517 = vadd.f32 %v515, %v516
  %v518 = vrot.slane %v517, 1
  %v519 = vadd.f32 %v517, %v518
  %v520 = vmul.f32 %v444, %v444
  %v521 = vmul.f32 %v446, %v446
  %v522 = vmul.f32 %v449, %v449
  %v523 = vmul.f32 %v451, %v451
  %v524 = vmul.f32 %v454, %v454
  %v525 = vmul.f32 %v456, %v456
  %v526 = vmul.f32 %v459, %v459
  %v527 = vmul.f32 %v461, %v461
  %v528 = vmul.f32 %v464, %v464
  %v529 = vmul.f32 %v466, %v466
  %v530 = vmul.f32 %v469, %v469
  %v531 = vmul.f32 %v471, %v471
  %v532 = vmul.f32 %v474, %v474
  %v533 = vmul.f32 %v476, %v476
  %v534 = vmul.f32 %v479, %v479
  %v535 = vmul.f32 %v481, %v481
  %v536 = vadd.f32 %v520, %v521
  %v537 = vadd.f32 %v536, %v522
  %v538 = vadd.f32 %v537, %v523
  %v539 = vadd.f32 %v538, %v524
  %v540 = vadd.f32 %v539, %v525
  %v541 = vadd.f32 %v540, %v526
  %v542 = vadd.f32 %v541, %v527
  %v543 = vadd.f32 %v542, %v528
  %v544 = vadd.f32 %v543, %v529
  %v545 = vadd.f32 %v544, %v530
  %v546 = vadd.f32 %v545, %v531
  %v547 = vadd.f32 %v546, %v532
  %v548 = vadd.f32 %v547, %v533
  %v549 = vadd.f32 %v548, %v534
  %v550 = vadd.f32 %v549, %v535
  %v551 = vrot.slane %v550, 4
  %v552 = vadd.f32 %v550, %v551
  %v553 = vrot.slane %v552, 2
  %v554 = vadd.f32 %v552, %v553
  %v555 = vrot.slane %v554, 1
  %v556 = vadd.f32 %v554, %v555
  %557 = vst [vmem:[%s3] sm:$0xff] %v519
  %558 = vst [vmem:[%s4] sm:$0xff] %v556
  // Predicated region
  $region10: #{generator_forward.13} parent=0 // pred_check
    _
  $region11: #{generator_forward.13} parent=0 // pred_check_branch
    %560 = sbr.rel (0) target = $region13
  $region12: #{generator_forward.13} parent=0 // pred_region
    _
  $region13: #{generator_forward.13} parent=0 // pred_fallthru
    _
  // Predicated region
  $region14: #{generator_forward.13} parent=0 // pred_check
    _
  $region15: #{generator_forward.13} parent=0 // pred_check_branch
    %562 = sbr.rel (0) target = $region17
  $region16: #{generator_forward.13} parent=0 // pred_region
    _
  $region17: #{generator_forward.13} parent=0 // pred_fallthru
    _
  // Predicated region
  $region18: #{generator_forward.13} parent=0 // pred_check
    _
  $region19: #{generator_forward.13} parent=0 // pred_check_branch
    %564 = sbr.rel (0) target = $region21
  $region20: #{generator_forward.13} parent=0 // pred_region
    _
  $region21: #{generator_forward.13} parent=0 // pred_fallthru
    _
  // Predicated region
  $region22: #{generator_forward.13} parent=0 // pred_check
    _
  $region23: #{generator_forward.13} parent=0 // pred_check_branch
    %566 = sbr.rel (0) target = $region25
  $region24: #{generator_forward.13} parent=0 // pred_region
    _
  $region25: #{generator_forward.13} parent=0 // pred_fallthru
    _
  // Predicated region
  $region26: #{generator_forward.13} parent=0 // pred_check
    _
  $region27: #{generator_forward.13} parent=0 // pred_check_branch
    %568 = sbr.rel (0) target = $region29
  $region28: #{generator_forward.13} parent=0 // pred_region
    _
  $region29: #{generator_forward.13} parent=0 // pred_fallthru
    _
  // Predicated region
  $region30: #{generator_forward.13} parent=0 // pred_check
    _
  $region31: #{generator_forward.13} parent=0 // pred_check_branch
    %570 = sbr.rel (0) target = $region33
  $region32: #{generator_forward.13} parent=0 // pred_region
    _
  $region33: #{generator_forward.13} parent=0 // pred_fallthru
    _

// kernel: generator_forward.14
$region0: #{generator_forward.14}
  #allocation0 [shape = 'u32[]', space=smem, size = 0x4, offset = 0x4, fixed_abs, tag = 'smem constant byte address 0x4 - core index']
  #allocation1 [shape = 'u32[72,128]{1,0:T(1,128)}', space=vmem, size = 0x9000, scoped, tag = 'internal scratch']
  %s0 = inlined_call_operand.vmem [shape: f32[128,128], index: 0, kind: input, shape index: {}]
  %s1 = inlined_call_operand.vmem [shape: f32[1,128], index: 1, kind: input, shape index: {}]
  %s2 = inlined_call_operand.vmem [shape: f32[1,128], index: 2, kind: input, shape index: {}]
  %s3 = inlined_call_operand.vmem [shape: f32[128,128], index: 3, kind: output, shape index: {}]
  %s4 = sld [smem:[#allocation0]]
  $region22: #{generator_forward.14} parent=0
    _
  %s6 = ssub.s32 1, %s4
  %s7 = scalar_select 0, %s6, %s4
  // Predicated region
  $region2: #{generator_forward.14} parent=0 // pred_check
    _
  $region3: #{generator_forward.14} parent=0 // pred_check_branch
    %9 = sbr.rel (0) target = $region5
  $region4: #{generator_forward.14} parent=0 // pred_region
    _
  $region5: #{generator_forward.14} parent=0 // pred_fallthru
    _
  // Predicated region
  $region6: #{generator_forward.14} parent=0 // pred_check
    _
  $region7: #{generator_forward.14} parent=0 // pred_check_branch
    %11 = sbr.rel (0) target = $region9
  $region8: #{generator_forward.14} parent=0 // pred_region
    _
  $region9: #{generator_forward.14} parent=0 // pred_fallthru
    _
  // Predicated region
  $region10: #{generator_forward.14} parent=0 // pred_check
    _
  $region11: #{generator_forward.14} parent=0 // pred_check_branch
    %13 = sbr.rel (0) target = $region13
  $region12: #{generator_forward.14} parent=0 // pred_region
    _
  $region13: #{generator_forward.14} parent=0 // pred_fallthru
    _
  %v14 = vld [vmem:[%s0] sm:$0xff]
  %v15 = vld [vmem:[%s0 + $0x8] sm:$0xff]
  %v16 = vld [vmem:[%s0 + $0x10] sm:$0xff]
  %v17 = vld [vmem:[%s0 + $0x18] sm:$0xff]
  %v18 = vld [vmem:[%s0 + $0x20] sm:$0xff]
  %v19 = vld [vmem:[%s0 + $0x28] sm:$0xff]
  %v20 = vld [vmem:[%s0 + $0x30] sm:$0xff]
  %v21 = vld [vmem:[%s0 + $0x38] sm:$0xff]
  %v22 = vld [vmem:[%s0 + $0x40] sm:$0xff]
  %v23 = vld [vmem:[%s0 + $0x48] sm:$0xff]
  %v24 = vld [vmem:[%s0 + $0x50] sm:$0xff]
  %v25 = vld [vmem:[%s0 + $0x58] sm:$0xff]
  %v26 = vld [vmem:[%s0 + $0x60] sm:$0xff]
  %v27 = vld [vmem:[%s0 + $0x68] sm:$0xff]
  %v28 = vld [vmem:[%s0 + $0x70] sm:$0xff]
  %v29 = vld [vmem:[%s0 + $0x78] sm:$0xff]
  %v30 = vld [vmem:[%s1] sm:$0x1]
  %v32 = vperm.slane %v30, 0
  %v34 = vmul.f32 %v14, %v32
  %v35 = vmul.f32 %v15, %v32
  %v36 = vmul.f32 %v16, %v32
  %v37 = vmul.f32 %v17, %v32
  %v38 = vmul.f32 %v18, %v32
  %v39 = vmul.f32 %v19, %v32
  %v40 = vmul.f32 %v20, %v32
  %v41 = vmul.f32 %v21, %v32
  %v42 = vmul.f32 %v22, %v32
  %v43 = vmul.f32 %v23, %v32
  %v44 = vmul.f32 %v24, %v32
  %v45 = vmul.f32 %v25, %v32
  %v46 = vmul.f32 %v26, %v32
  %v47 = vmul.f32 %v27, %v32
  %v48 = vmul.f32 %v28, %v32
  %v49 = vmul.f32 %v29, %v32
  %v50 = vld [vmem:[%s2] sm:$0x1]
  %v52 = vperm.slane %v50, 0
  %v54 = vadd.f32 %v34, %v52
  %v55 = vadd.f32 %v35, %v52
  %v56 = vadd.f32 %v36, %v52
  %v57 = vadd.f32 %v37, %v52
  %v58 = vadd.f32 %v38, %v52
  %v59 = vadd.f32 %v39, %v52
  %v60 = vadd.f32 %v40, %v52
  %v61 = vadd.f32 %v41, %v52
  %v62 = vadd.f32 %v42, %v52
  %v63 = vadd.f32 %v43, %v52
  %v64 = vadd.f32 %v44, %v52
  %v65 = vadd.f32 %v45, %v52
  %v66 = vadd.f32 %v46, %v52
  %v67 = vadd.f32 %v47, %v52
  %v68 = vadd.f32 %v48, %v52
  %v69 = vadd.f32 %v49, %v52
  %v70 = vmax.f32 %v54, 0.0
  %v71 = vmax.f32 %v55, 0.0
  %v72 = vmax.f32 %v56, 0.0
  %v73 = vmax.f32 %v57, 0.0
  %v74 = vmax.f32 %v58, 0.0
  %v75 = vmax.f32 %v59, 0.0
  %v76 = vmax.f32 %v60, 0.0
  %v77 = vmax.f32 %v61, 0.0
  %v78 = vmax.f32 %v62, 0.0
  %v79 = vmax.f32 %v63, 0.0
  %v80 = vmax.f32 %v64, 0.0
  %v81 = vmax.f32 %v65, 0.0
  %v82 = vmax.f32 %v66, 0.0
  %v83 = vmax.f32 %v67, 0.0
  %v84 = vmax.f32 %v68, 0.0
  %v85 = vmax.f32 %v69, 0.0
  %86 = vst [vmem:[%s3] sm:$0xff] %v70
  %87 = vst [vmem:[%s3 + $0x8] sm:$0xff] %v71
  %88 = vst [vmem:[%s3 + $0x10] sm:$0xff] %v72
  %89 = vst [vmem:[%s3 + $0x18] sm:$0xff] %v73
  %90 = vst [vmem:[%s3 + $0x20] sm:$0xff] %v74
  %91 = vst [vmem:[%s3 + $0x28] sm:$0xff] %v75
  %92 = vst [vmem:[%s3 + $0x30] sm:$0xff] %v76
  %93 = vst [vmem:[%s3 + $0x38] sm:$0xff] %v77
  %94 = vst [vmem:[%s3 + $0x40] sm:$0xff] %v78
  %95 = vst [vmem:[%s3 + $0x48] sm:$0xff] %v79
  %96 = vst [vmem:[%s3 + $0x50] sm:$0xff] %v80
  %97 = vst [vmem:[%s3 + $0x58] sm:$0xff] %v81
  %98 = vst [vmem:[%s3 + $0x60] sm:$0xff] %v82
  %99 = vst [vmem:[%s3 + $0x68] sm:$0xff] %v83
  %100 = vst [vmem:[%s3 + $0x70] sm:$0xff] %v84
  %101 = vst [vmem:[%s3 + $0x78] sm:$0xff] %v85
  // Predicated region
  $region14: #{generator_forward.14} parent=0 // pred_check
    _
  $region15: #{generator_forward.14} parent=0 // pred_check_branch
    %103 = sbr.rel (0) target = $region17
  $region16: #{generator_forward.14} parent=0 // pred_region
    _
  $region17: #{generator_forward.14} parent=0 // pred_fallthru
    _
  // Predicated region
  $region18: #{generator_forward.14} parent=0 // pred_check
    _
  $region19: #{generator_forward.14} parent=0 // pred_check_branch
    %105 = sbr.rel (0) target = $region21
  $region20: #{generator_forward.14} parent=0 // pred_region
    _
  $region21: #{generator_forward.14} parent=0 // pred_fallthru
    _

// kernel: tile.78
$region0: #{tile.78}
  #allocation0 [shape = 's32[1]{0}', space=sflag, size = 0x4, scoped, tag = 'scoped memory for tile.78']
  %s0 = inlined_call_operand.vmem [shape: f32[8], index: 0, kind: input, shape index: {}]
  %s1 = inlined_call_operand.vmem [shape: f32[4,8], index: 1, kind: output, shape index: {}]
  // Predicated region
  $region2: #{tile.78} parent=0 // pred_check
    _
  $region3: #{tile.78} parent=0 // pred_check_branch
    %3 = sbr.rel (0) target = $region5
  $region4: #{tile.78} parent=0 // pred_region
    _
  $region5: #{tile.78} parent=0 // pred_fallthru
    _
  %v4 = vld [vmem:[%s0] ss:$0 sm:$0xff]
  %5 = vst [vmem:[%s1] sm:$0xf] %v4

// kernel: tile.79
$region0: #{tile.79}
  %s0 = inlined_call_operand.vmem [shape: f32[4,8], index: 0, kind: input, shape index: {}]
  %s1 = inlined_call_operand.vmem [shape: f32[32], index: 1, kind: output, shape index: {}]
  $region1: #{tile.79} parent=0
    #allocation0 [shape = 'u8[4096]{0}', space=vmem, size = 0x1000, scoped, tag = 'scoped mem for output reshape']
    #allocation1 [shape = 'u8[4096]{0}', space=vmem, size = 0x1000, scoped, tag = 'scoped mem for input reshape']
    %s3 = ssub.s32 16, 1
    %v4 = vld [vmem:[%s0] sm:%s3]
    %5 = vst [vmem:[#allocation1] sm:%s3] %v4
    %v6 = vld [vmem:[#allocation1] sm:$0x1]
    %vm7 = vcmask 64512
    %8 = vst.msk [vmem:[#allocation0] sm:$0x1] %vm7, %v6
    %s9 = scalar_lea.vmem [#allocation1], 3
    %v10 = vld [vmem:[%s9] sm:$0x1]
    %11 = vrot.lane.b32.xlu0 %v10, 24
    %v12 = vpop.permute.xlu0 %11
    %vm13 = vcmask 261312
    %14 = vst.msk [vmem:[#allocation0] sm:$0x1] %vm13, %v12
    %s15 = scalar_lea.vmem [#allocation1], 2
    %v16 = vld [vmem:[%s15] sm:$0x1]
    %17 = vrot.lane.b32.xlu0 %v16, 16
    %v18 = vpop.permute.xlu0 %17
    %vm19 = vcmask 195712
    %20 = vst.msk [vmem:[#allocation0] sm:$0x1] %vm19, %v18
    %s21 = scalar_lea.vmem [#allocation1], 1
    %v22 = vld [vmem:[%s21] sm:$0x1]
    %23 = vrot.lane.b32.xlu0 %v22, 8
    %v24 = vpop.permute.xlu0 %23
    %vm25 = vcmask 130112
    %26 = vst.msk [vmem:[#allocation0] sm:$0x1] %vm25, %v24
    %s28 = ssub.s32 2, 1
    %v29 = vld [vmem:[#allocation0] sm:%s28]
    %s31 = ssub.s32 2, 1
    %32 = vst [vmem:[%s1] sm:%s31] %v29

// kernel: generator_forward.16
$region0: #{generator_forward.16}
  #allocation0 [shape = 'u32[]', space=smem, size = 0x4, offset = 0x4, fixed_abs, tag = 'smem constant byte address 0x4 - core index']
  #allocation1 [shape = 'u32[72,128]{1,0:T(1,128)}', space=vmem, size = 0x9000, scoped, tag = 'internal scratch']
  %s0 = inlined_call_operand.vmem [shape: f32[512,128], index: 0, kind: input, shape index: {}]
  %s1 = inlined_call_operand.vmem [shape: f32[1,128], index: 1, kind: input, shape index: {}]
  %s2 = inlined_call_operand.vmem [shape: f32[1,128], index: 2, kind: input, shape index: {}]
  %s3 = inlined_call_operand.vmem [shape: f32[512,128], index: 3, kind: output, shape index: {}]
  %s4 = sld [smem:[#allocation0]]
  $region22: #{generator_forward.16} parent=0
    _
  %s6 = ssub.s32 1, %s4
  %s7 = scalar_select 0, %s6, %s4
  // Predicated region
  $region2: #{generator_forward.16} parent=0 // pred_check
    _
  $region3: #{generator_forward.16} parent=0 // pred_check_branch
    %9 = sbr.rel (0) target = $region5
  $region4: #{generator_forward.16} parent=0 // pred_region
    _
  $region5: #{generator_forward.16} parent=0 // pred_fallthru
    _
  // Predicated region
  $region6: #{generator_forward.16} parent=0 // pred_check
    _
  $region7: #{generator_forward.16} parent=0 // pred_check_branch
    %11 = sbr.rel (0) target = $region9
  $region8: #{generator_forward.16} parent=0 // pred_region
    _
  $region9: #{generator_forward.16} parent=0 // pred_fallthru
    _
  // Predicated region
  $region10: #{generator_forward.16} parent=0 // pred_check
    _
  $region11: #{generator_forward.16} parent=0 // pred_check_branch
    %13 = sbr.rel (0) target = $region13
  $region12: #{generator_forward.16} parent=0 // pred_region
    _
  $region13: #{generator_forward.16} parent=0 // pred_fallthru
    _
  %v14 = vld [vmem:[%s0] sm:$0xff]
  %v15 = vld [vmem:[%s0 + $0x8] sm:$0xff]
  %v16 = vld [vmem:[%s0 + $0x10] sm:$0xff]
  %v17 = vld [vmem:[%s0 + $0x18] sm:$0xff]
  %v18 = vld [vmem:[%s0 + $0x20] sm:$0xff]
  %v19 = vld [vmem:[%s0 + $0x28] sm:$0xff]
  %v20 = vld [vmem:[%s0 + $0x30] sm:$0xff]
  %v21 = vld [vmem:[%s0 + $0x38] sm:$0xff]
  %v22 = vld [vmem:[%s0 + $0x40] sm:$0xff]
  %v23 = vld [vmem:[%s0 + $0x48] sm:$0xff]
  %v24 = vld [vmem:[%s0 + $0x50] sm:$0xff]
  %v25 = vld [vmem:[%s0 + $0x58] sm:$0xff]
  %v26 = vld [vmem:[%s0 + $0x60] sm:$0xff]
  %v27 = vld [vmem:[%s0 + $0x68] sm:$0xff]
  %v28 = vld [vmem:[%s0 + $0x70] sm:$0xff]
  %v29 = vld [vmem:[%s0 + $0x78] sm:$0xff]
  %v30 = vld [vmem:[%s0 + $0x80] sm:$0xff]
  %v31 = vld [vmem:[%s0 + $0x88] sm:$0xff]
  %v32 = vld [vmem:[%s0 + $0x90] sm:$0xff]
  %v33 = vld [vmem:[%s0 + $0x98] sm:$0xff]
  %v34 = vld [vmem:[%s0 + $0xa0] sm:$0xff]
  %v35 = vld [vmem:[%s0 + $0xa8] sm:$0xff]
  %v36 = vld [vmem:[%s0 + $0xb0] sm:$0xff]
  %v37 = vld [vmem:[%s0 + $0xb8] sm:$0xff]
  %v38 = vld [vmem:[%s0 + $0xc0] sm:$0xff]
  %v39 = vld [vmem:[%s0 + $0xc8] sm:$0xff]
  %v40 = vld [vmem:[%s0 + $0xd0] sm:$0xff]
  %v41 = vld [vmem:[%s0 + $0xd8] sm:$0xff]
  %v42 = vld [vmem:[%s0 + $0xe0] sm:$0xff]
  %v43 = vld [vmem:[%s0 + $0xe8] sm:$0xff]
  %v44 = vld [vmem:[%s0 + $0xf0] sm:$0xff]
  %v45 = vld [vmem:[%s0 + $0xf8] sm:$0xff]
  %v46 = vld [vmem:[%s0 + $0x100] sm:$0xff]
  %v47 = vld [vmem:[%s0 + $0x108] sm:$0xff]
  %v48 = vld [vmem:[%s0 + $0x110] sm:$0xff]
  %v49 = vld [vmem:[%s0 + $0x118] sm:$0xff]
  %v50 = vld [vmem:[%s0 + $0x120] sm:$0xff]
  %v51 = vld [vmem:[%s0 + $0x128] sm:$0xff]
  %v52 = vld [vmem:[%s0 + $0x130] sm:$0xff]
  %v53 = vld [vmem:[%s0 + $0x138] sm:$0xff]
  %v54 = vld [vmem:[%s0 + $0x140] sm:$0xff]
  %v55 = vld [vmem:[%s0 + $0x148] sm:$0xff]
  %v56 = vld [vmem:[%s0 + $0x150] sm:$0xff]
  %v57 = vld [vmem:[%s0 + $0x158] sm:$0xff]
  %v58 = vld [vmem:[%s0 + $0x160] sm:$0xff]
  %v59 = vld [vmem:[%s0 + $0x168] sm:$0xff]
  %v60 = vld [vmem:[%s0 + $0x170] sm:$0xff]
  %v61 = vld [vmem:[%s0 + $0x178] sm:$0xff]
  %v62 = vld [vmem:[%s0 + $0x180] sm:$0xff]
  %v63 = vld [vmem:[%s0 + $0x188] sm:$0xff]
  %v64 = vld [vmem:[%s0 + $0x190] sm:$0xff]
  %v65 = vld [vmem:[%s0 + $0x198] sm:$0xff]
  %v66 = vld [vmem:[%s0 + $0x1a0] sm:$0xff]
  %v67 = vld [vmem:[%s0 + $0x1a8] sm:$0xff]
  %v68 = vld [vmem:[%s0 + $0x1b0] sm:$0xff]
  %v69 = vld [vmem:[%s0 + $0x1b8] sm:$0xff]
  %v70 = vld [vmem:[%s0 + $0x1c0] sm:$0xff]
  %v71 = vld [vmem:[%s0 + $0x1c8] sm:$0xff]
  %v72 = vld [vmem:[%s0 + $0x1d0] sm:$0xff]
  %v73 = vld [vmem:[%s0 + $0x1d8] sm:$0xff]
  %v74 = vld [vmem:[%s0 + $0x1e0] sm:$0xff]
  %v75 = vld [vmem:[%s0 + $0x1e8] sm:$0xff]
  %v76 = vld [vmem:[%s0 + $0x1f0] sm:$0xff]
  %v77 = vld [vmem:[%s0 + $0x1f8] sm:$0xff]
  %v78 = vld [vmem:[%s1] sm:$0x1]
  %v80 = vperm.slane %v78, 0
  %v82 = vmul.f32 %v14, %v80
  %v83 = vmul.f32 %v15, %v80
  %v84 = vmul.f32 %v16, %v80
  %v85 = vmul.f32 %v17, %v80
  %v86 = vmul.f32 %v18, %v80
  %v87 = vmul.f32 %v19, %v80
  %v88 = vmul.f32 %v20, %v80
  %v89 = vmul.f32 %v21, %v80
  %v90 = vmul.f32 %v22, %v80
  %v91 = vmul.f32 %v23, %v80
  %v92 = vmul.f32 %v24, %v80
  %v93 = vmul.f32 %v25, %v80
  %v94 = vmul.f32 %v26, %v80
  %v95 = vmul.f32 %v27, %v80
  %v96 = vmul.f32 %v28, %v80
  %v97 = vmul.f32 %v29, %v80
  %v98 = vmul.f32 %v30, %v80
  %v99 = vmul.f32 %v31, %v80
  %v100 = vmul.f32 %v32, %v80
  %v101 = vmul.f32 %v33, %v80
  %v102 = vmul.f32 %v34, %v80
  %v103 = vmul.f32 %v35, %v80
  %v104 = vmul.f32 %v36, %v80
  %v105 = vmul.f32 %v37, %v80
  %v106 = vmul.f32 %v38, %v80
  %v107 = vmul.f32 %v39, %v80
  %v108 = vmul.f32 %v40, %v80
  %v109 = vmul.f32 %v41, %v80
  %v110 = vmul.f32 %v42, %v80
  %v111 = vmul.f32 %v43, %v80
  %v112 = vmul.f32 %v44, %v80
  %v113 = vmul.f32 %v45, %v80
  %v114 = vmul.f32 %v46, %v80
  %v115 = vmul.f32 %v47, %v80
  %v116 = vmul.f32 %v48, %v80
  %v117 = vmul.f32 %v49, %v80
  %v118 = vmul.f32 %v50, %v80
  %v119 = vmul.f32 %v51, %v80
  %v120 = vmul.f32 %v52, %v80
  %v121 = vmul.f32 %v53, %v80
  %v122 = vmul.f32 %v54, %v80
  %v123 = vmul.f32 %v55, %v80
  %v124 = vmul.f32 %v56, %v80
  %v125 = vmul.f32 %v57, %v80
  %v126 = vmul.f32 %v58, %v80
  %v127 = vmul.f32 %v59, %v80
  %v128 = vmul.f32 %v60, %v80
  %v129 = vmul.f32 %v61, %v80
  %v130 = vmul.f32 %v62, %v80
  %v131 = vmul.f32 %v63, %v80
  %v132 = vmul.f32 %v64, %v80
  %v133 = vmul.f32 %v65, %v80
  %v134 = vmul.f32 %v66, %v80
  %v135 = vmul.f32 %v67, %v80
  %v136 = vmul.f32 %v68, %v80
  %v137 = vmul.f32 %v69, %v80
  %v138 = vmul.f32 %v70, %v80
  %v139 = vmul.f32 %v71, %v80
  %v140 = vmul.f32 %v72, %v80
  %v141 = vmul.f32 %v73, %v80
  %v142 = vmul.f32 %v74, %v80
  %v143 = vmul.f32 %v75, %v80
  %v144 = vmul.f32 %v76, %v80
  %v145 = vmul.f32 %v77, %v80
  %v146 = vld [vmem:[%s2] sm:$0x1]
  %v148 = vperm.slane %v146, 0
  %v150 = vadd.f32 %v82, %v148
  %v151 = vadd.f32 %v83, %v148
  %v152 = vadd.f32 %v84, %v148
  %v153 = vadd.f32 %v85, %v148
  %v154 = vadd.f32 %v86, %v148
  %v155 = vadd.f32 %v87, %v148
  %v156 = vadd.f32 %v88, %v148
  %v157 = vadd.f32 %v89, %v148
  %v158 = vadd.f32 %v90, %v148
  %v159 = vadd.f32 %v91, %v148
  %v160 = vadd.f32 %v92, %v148
  %v161 = vadd.f32 %v93, %v148
  %v162 = vadd.f32 %v94, %v148
  %v163 = vadd.f32 %v95, %v148
  %v164 = vadd.f32 %v96, %v148
  %v165 = vadd.f32 %v97, %v148
  %v166 = vadd.f32 %v98, %v148
  %v167 = vadd.f32 %v99, %v148
  %v168 = vadd.f32 %v100, %v148
  %v169 = vadd.f32 %v101, %v148
  %v170 = vadd.f32 %v102, %v148
  %v171 = vadd.f32 %v103, %v148
  %v172 = vadd.f32 %v104, %v148
  %v173 = vadd.f32 %v105, %v148
  %v174 = vadd.f32 %v106, %v148
  %v175 = vadd.f32 %v107, %v148
  %v176 = vadd.f32 %v108, %v148
  %v177 = vadd.f32 %v109, %v148
  %v178 = vadd.f32 %v110, %v148
  %v179 = vadd.f32 %v111, %v148
  %v180 = vadd.f32 %v112, %v148
  %v181 = vadd.f32 %v113, %v148
  %v182 = vadd.f32 %v114, %v148
  %v183 = vadd.f32 %v115, %v148
  %v184 = vadd.f32 %v116, %v148
  %v185 = vadd.f32 %v117, %v148
  %v186 = vadd.f32 %v118, %v148
  %v187 = vadd.f32 %v119, %v148
  %v188 = vadd.f32 %v120, %v148
  %v189 = vadd.f32 %v121, %v148
  %v190 = vadd.f32 %v122, %v148
  %v191 = vadd.f32 %v123, %v148
  %v192 = vadd.f32 %v124, %v148
  %v193 = vadd.f32 %v125, %v148
  %v194 = vadd.f32 %v126, %v148
  %v195 = vadd.f32 %v127, %v148
  %v196 = vadd.f32 %v128, %v148
  %v197 = vadd.f32 %v129, %v148
  %v198 = vadd.f32 %v130, %v148
  %v199 = vadd.f32 %v131, %v148
  %v200 = vadd.f32 %v132, %v148
  %v201 = vadd.f32 %v133, %v148
  %v202 = vadd.f32 %v134, %v148
  %v203 = vadd.f32 %v135, %v148
  %v204 = vadd.f32 %v136, %v148
  %v205 = vadd.f32 %v137, %v148
  %v206 = vadd.f32 %v138, %v148
  %v207 = vadd.f32 %v139, %v148
  %v208 = vadd.f32 %v140, %v148
  %v209 = vadd.f32 %v141, %v148
  %v210 = vadd.f32 %v142, %v148
  %v211 = vadd.f32 %v143, %v148
  %v212 = vadd.f32 %v144, %v148
  %v213 = vadd.f32 %v145, %v148
  %v214 = vmax.f32 %v150, 0.0
  %v215 = vmax.f32 %v151, 0.0
  %v216 = vmax.f32 %v152, 0.0
  %v217 = vmax.f32 %v153, 0.0
  %v218 = vmax.f32 %v154, 0.0
  %v219 = vmax.f32 %v155, 0.0
  %v220 = vmax.f32 %v156, 0.0
  %v221 = vmax.f32 %v157, 0.0
  %v222 = vmax.f32 %v158, 0.0
  %v223 = vmax.f32 %v159, 0.0
  %v224 = vmax.f32 %v160, 0.0
  %v225 = vmax.f32 %v161, 0.0
  %v226 = vmax.f32 %v162, 0.0
  %v227 = vmax.f32 %v163, 0.0
  %v228 = vmax.f32 %v164, 0.0
  %v229 = vmax.f32 %v165, 0.0
  %v230 = vmax.f32 %v166, 0.0
  %v231 = vmax.f32 %v167, 0.0
  %v232 = vmax.f32 %v168, 0.0
  %v233 = vmax.f32 %v169, 0.0
  %v234 = vmax.f32 %v170, 0.0
  %v235 = vmax.f32 %v171, 0.0
  %v236 = vmax.f32 %v172, 0.0
  %v237 = vmax.f32 %v173, 0.0
  %v238 = vmax.f32 %v174, 0.0
  %v239 = vmax.f32 %v175, 0.0
  %v240 = vmax.f32 %v176, 0.0
  %v241 = vmax.f32 %v177, 0.0
  %v242 = vmax.f32 %v178, 0.0
  %v243 = vmax.f32 %v179, 0.0
  %v244 = vmax.f32 %v180, 0.0
  %v245 = vmax.f32 %v181, 0.0
  %v246 = vmax.f32 %v182, 0.0
  %v247 = vmax.f32 %v183, 0.0
  %v248 = vmax.f32 %v184, 0.0
  %v249 = vmax.f32 %v185, 0.0
  %v250 = vmax.f32 %v186, 0.0
  %v251 = vmax.f32 %v187, 0.0
  %v252 = vmax.f32 %v188, 0.0
  %v253 = vmax.f32 %v189, 0.0
  %v254 = vmax.f32 %v190, 0.0
  %v255 = vmax.f32 %v191, 0.0
  %v256 = vmax.f32 %v192, 0.0
  %v257 = vmax.f32 %v193, 0.0
  %v258 = vmax.f32 %v194, 0.0
  %v259 = vmax.f32 %v195, 0.0
  %v260 = vmax.f32 %v196, 0.0
  %v261 = vmax.f32 %v197, 0.0
  %v262 = vmax.f32 %v198, 0.0
  %v263 = vmax.f32 %v199, 0.0
  %v264 = vmax.f32 %v200, 0.0
  %v265 = vmax.f32 %v201, 0.0
  %v266 = vmax.f32 %v202, 0.0
  %v267 = vmax.f32 %v203, 0.0
  %v268 = vmax.f32 %v204, 0.0
  %v269 = vmax.f32 %v205, 0.0
  %v270 = vmax.f32 %v206, 0.0
  %v271 = vmax.f32 %v207, 0.0
  %v272 = vmax.f32 %v208, 0.0
  %v273 = vmax.f32 %v209, 0.0
  %v274 = vmax.f32 %v210, 0.0
  %v275 = vmax.f32 %v211, 0.0
  %v276 = vmax.f32 %v212, 0.0
  %v277 = vmax.f32 %v213, 0.0
  %278 = vst [vmem:[%s3] sm:$0xff] %v214
  %279 = vst [vmem:[%s3 + $0x8] sm:$0xff] %v215
  %280 = vst [vmem:[%s3 + $0x10] sm:$0xff] %v216
  %281 = vst [vmem:[%s3 + $0x18] sm:$0xff] %v217
  %282 = vst [vmem:[%s3 + $0x20] sm:$0xff] %v218
  %283 = vst [vmem:[%s3 + $0x28] sm:$0xff] %v219
  %284 = vst [vmem:[%s3 + $0x30] sm:$0xff] %v220
  %285 = vst [vmem:[%s3 + $0x38] sm:$0xff] %v221
  %286 = vst [vmem:[%s3 + $0x40] sm:$0xff] %v222
  %287 = vst [vmem:[%s3 + $0x48] sm:$0xff] %v223
  %288 = vst [vmem:[%s3 + $0x50] sm:$0xff] %v224
  %289 = vst [vmem:[%s3 + $0x58] sm:$0xff] %v225
  %290 = vst [vmem:[%s3 + $0x60] sm:$0xff] %v226
  %291 = vst [vmem:[%s3 + $0x68] sm:$0xff] %v227
  %292 = vst [vmem:[%s3 + $0x70] sm:$0xff] %v228
  %293 = vst [vmem:[%s3 + $0x78] sm:$0xff] %v229
  %294 = vst [vmem:[%s3 + $0x80] sm:$0xff] %v230
  %295 = vst [vmem:[%s3 + $0x88] sm:$0xff] %v231
  %296 = vst [vmem:[%s3 + $0x90] sm:$0xff] %v232
  %297 = vst [vmem:[%s3 + $0x98] sm:$0xff] %v233
  %298 = vst [vmem:[%s3 + $0xa0] sm:$0xff] %v234
  %299 = vst [vmem:[%s3 + $0xa8] sm:$0xff] %v235
  %300 = vst [vmem:[%s3 + $0xb0] sm:$0xff] %v236
  %301 = vst [vmem:[%s3 + $0xb8] sm:$0xff] %v237
  %302 = vst [vmem:[%s3 + $0xc0] sm:$0xff] %v238
  %303 = vst [vmem:[%s3 + $0xc8] sm:$0xff] %v239
  %304 = vst [vmem:[%s3 + $0xd0] sm:$0xff] %v240
  %305 = vst [vmem:[%s3 + $0xd8] sm:$0xff] %v241
  %306 = vst [vmem:[%s3 + $0xe0] sm:$0xff] %v242
  %307 = vst [vmem:[%s3 + $0xe8] sm:$0xff] %v243
  %308 = vst [vmem:[%s3 + $0xf0] sm:$0xff] %v244
  %309 = vst [vmem:[%s3 + $0xf8] sm:$0xff] %v245
  %310 = vst [vmem:[%s3 + $0x100] sm:$0xff] %v246
  %311 = vst [vmem:[%s3 + $0x108] sm:$0xff] %v247
  %312 = vst [vmem:[%s3 + $0x110] sm:$0xff] %v248
  %313 = vst [vmem:[%s3 + $0x118] sm:$0xff] %v249
  %314 = vst [vmem:[%s3 + $0x120] sm:$0xff] %v250
  %315 = vst [vmem:[%s3 + $0x128] sm:$0xff] %v251
  %316 = vst [vmem:[%s3 + $0x130] sm:$0xff] %v252
  %317 = vst [vmem:[%s3 + $0x138] sm:$0xff] %v253
  %318 = vst [vmem:[%s3 + $0x140] sm:$0xff] %v254
  %319 = vst [vmem:[%s3 + $0x148] sm:$0xff] %v255
  %320 = vst [vmem:[%s3 + $0x150] sm:$0xff] %v256
  %321 = vst [vmem:[%s3 + $0x158] sm:$0xff] %v257
  %322 = vst [vmem:[%s3 + $0x160] sm:$0xff] %v258
  %323 = vst [vmem:[%s3 + $0x168] sm:$0xff] %v259
  %324 = vst [vmem:[%s3 + $0x170] sm:$0xff] %v260
  %325 = vst [vmem:[%s3 + $0x178] sm:$0xff] %v261
  %326 = vst [vmem:[%s3 + $0x180] sm:$0xff] %v262
  %327 = vst [vmem:[%s3 + $0x188] sm:$0xff] %v263
  %328 = vst [vmem:[%s3 + $0x190] sm:$0xff] %v264
  %329 = vst [vmem:[%s3 + $0x198] sm:$0xff] %v265
  %330 = vst [vmem:[%s3 + $0x1a0] sm:$0xff] %v266
  %331 = vst [vmem:[%s3 + $0x1a8] sm:$0xff] %v267
  %332 = vst [vmem:[%s3 + $0x1b0] sm:$0xff] %v268
  %333 = vst [vmem:[%s3 + $0x1b8] sm:$0xff] %v269
  %334 = vst [vmem:[%s3 + $0x1c0] sm:$0xff] %v270
  %335 = vst [vmem:[%s3 + $0x1c8] sm:$0xff] %v271
  %336 = vst [vmem:[%s3 + $0x1d0] sm:$0xff] %v272
  %337 = vst [vmem:[%s3 + $0x1d8] sm:$0xff] %v273
  %338 = vst [vmem:[%s3 + $0x1e0] sm:$0xff] %v274
  %339 = vst [vmem:[%s3 + $0x1e8] sm:$0xff] %v275
  %340 = vst [vmem:[%s3 + $0x1f0] sm:$0xff] %v276
  %341 = vst [vmem:[%s3 + $0x1f8] sm:$0xff] %v277
  // Predicated region
  $region14: #{generator_forward.16} parent=0 // pred_check
    _
  $region15: #{generator_forward.16} parent=0 // pred_check_branch
    %343 = sbr.rel (0) target = $region17
  $region16: #{generator_forward.16} parent=0 // pred_region
    _
  $region17: #{generator_forward.16} parent=0 // pred_fallthru
    _
  // Predicated region
  $region18: #{generator_forward.16} parent=0 // pred_check
    _
  $region19: #{generator_forward.16} parent=0 // pred_check_branch
    %345 = sbr.rel (0) target = $region21
  $region20: #{generator_forward.16} parent=0 // pred_region
    _
  $region21: #{generator_forward.16} parent=0 // pred_fallthru
    _

// kernel: generator_forward.15
$region0: #{generator_forward.15}
  #allocation0 [shape = 'u32[]', space=smem, size = 0x4, offset = 0x4, fixed_abs, tag = 'smem constant byte address 0x4 - core index']
  #allocation1 [shape = 'u32[72,128]{1,0:T(1,128)}', space=vmem, size = 0x9000, scoped, tag = 'internal scratch']
  %s0 = inlined_call_operand.vmem [shape: bf16[512,144], index: 0, kind: input, shape index: {}]
  %s1 = inlined_call_operand.vmem [shape: bf16[144,128], index: 1, kind: input, shape index: {}]
  %s2 = inlined_call_operand.vmem [shape: f32[512,128], index: 2, kind: output, shape index: {0}]
  %s3 = inlined_call_operand.vmem [shape: f32[1,8,128], index: 3, kind: output, shape index: {1}]
  %s4 = inlined_call_operand.vmem [shape: f32[1,8,128], index: 4, kind: output, shape index: {2}]
  %5 = xla_tuple %s2, %s3, %s4
  %s6 = sld [smem:[#allocation0]]
  $region34: #{generator_forward.15} parent=0
    _
  %s8 = ssub.s32 1, %s6
  %s9 = scalar_select 0, %s8, %s6
  // Predicated region
  $region2: #{generator_forward.15} parent=0 // pred_check
    _
  $region3: #{generator_forward.15} parent=0 // pred_check_branch
    %11 = sbr.rel (0) target = $region5
  $region4: #{generator_forward.15} parent=0 // pred_region
    _
  $region5: #{generator_forward.15} parent=0 // pred_fallthru
    _
  // Predicated region
  $region6: #{generator_forward.15} parent=0 // pred_check
    _
  $region7: #{generator_forward.15} parent=0 // pred_check_branch
    %13 = sbr.rel (0) target = $region9
  $region8: #{generator_forward.15} parent=0 // pred_region
    _
  $region9: #{generator_forward.15} parent=0 // pred_fallthru
    _
  %v15 = vld [vmem:[%s0] sm:$0xff]
  %v16 = vld [vmem:[%s0 + $0x8] sm:$0xff]
  %v17 = vld [vmem:[%s0 + $0x10] sm:$0xff]
  %v18 = vld [vmem:[%s0 + $0x18] sm:$0xff]
  %v19 = vld [vmem:[%s0 + $0x20] sm:$0xff]
  %v20 = vld [vmem:[%s0 + $0x28] sm:$0xff]
  %v21 = vld [vmem:[%s0 + $0x30] sm:$0xff]
  %v22 = vld [vmem:[%s0 + $0x38] sm:$0xff]
  %v23 = vld [vmem:[%s0 + $0x40] sm:$0xff]
  %v24 = vld [vmem:[%s0 + $0x48] sm:$0xff]
  %v25 = vld [vmem:[%s0 + $0x50] sm:$0xff]
  %v26 = vld [vmem:[%s0 + $0x58] sm:$0xff]
  %v27 = vld [vmem:[%s0 + $0x60] sm:$0xff]
  %v28 = vld [vmem:[%s0 + $0x68] sm:$0xff]
  %v29 = vld [vmem:[%s0 + $0x70] sm:$0xff]
  %v30 = vld [vmem:[%s0 + $0x78] sm:$0xff]
  %v31 = vld [vmem:[%s0 + $0x80] sm:$0xff]
  %v32 = vld [vmem:[%s0 + $0x88] sm:$0xff]
  %v33 = vld [vmem:[%s0 + $0x90] sm:$0xff]
  %v34 = vld [vmem:[%s0 + $0x98] sm:$0xff]
  %v35 = vld [vmem:[%s0 + $0xa0] sm:$0xff]
  %v36 = vld [vmem:[%s0 + $0xa8] sm:$0xff]
  %v37 = vld [vmem:[%s0 + $0xb0] sm:$0xff]
  %v38 = vld [vmem:[%s0 + $0xb8] sm:$0xff]
  %v39 = vld [vmem:[%s0 + $0xc0] sm:$0xff]
  %v40 = vld [vmem:[%s0 + $0xc8] sm:$0xff]
  %v41 = vld [vmem:[%s0 + $0xd0] sm:$0xff]
  %v42 = vld [vmem:[%s0 + $0xd8] sm:$0xff]
  %v43 = vld [vmem:[%s0 + $0xe0] sm:$0xff]
  %v44 = vld [vmem:[%s0 + $0xe8] sm:$0xff]
  %v45 = vld [vmem:[%s0 + $0xf0] sm:$0xff]
  %v46 = vld [vmem:[%s0 + $0xf8] sm:$0xff]
  %v47 = vld [vmem:[%s0 + $0x100] sm:$0xff]
  %v48 = vld [vmem:[%s0 + $0x108] sm:$0xff]
  %v49 = vld [vmem:[%s0 + $0x110] sm:$0xff]
  %v50 = vld [vmem:[%s0 + $0x118] sm:$0xff]
  %v51 = vld [vmem:[%s0 + $0x120] sm:$0xff]
  %v52 = vld [vmem:[%s0 + $0x128] sm:$0xff]
  %v53 = vld [vmem:[%s0 + $0x130] sm:$0xff]
  %v54 = vld [vmem:[%s0 + $0x138] sm:$0xff]
  %v55 = vld [vmem:[%s0 + $0x140] sm:$0xff]
  %v56 = vld [vmem:[%s0 + $0x148] sm:$0xff]
  %v57 = vld [vmem:[%s0 + $0x150] sm:$0xff]
  %v58 = vld [vmem:[%s0 + $0x158] sm:$0xff]
  %v59 = vld [vmem:[%s0 + $0x160] sm:$0xff]
  %v60 = vld [vmem:[%s0 + $0x168] sm:$0xff]
  %v61 = vld [vmem:[%s0 + $0x170] sm:$0xff]
  %v62 = vld [vmem:[%s0 + $0x178] sm:$0xff]
  %v63 = vld [vmem:[%s0 + $0x180] sm:$0xff]
  %v64 = vld [vmem:[%s0 + $0x188] sm:$0xff]
  %v65 = vld [vmem:[%s0 + $0x190] sm:$0xff]
  %v66 = vld [vmem:[%s0 + $0x198] sm:$0xff]
  %v67 = vld [vmem:[%s0 + $0x1a0] sm:$0xff]
  %v68 = vld [vmem:[%s0 + $0x1a8] sm:$0xff]
  %v69 = vld [vmem:[%s0 + $0x1b0] sm:$0xff]
  %v70 = vld [vmem:[%s0 + $0x1b8] sm:$0xff]
  %v71 = vld [vmem:[%s0 + $0x1c0] sm:$0xff]
  %v72 = vld [vmem:[%s0 + $0x1c8] sm:$0xff]
  %v73 = vld [vmem:[%s0 + $0x1d0] sm:$0xff]
  %v74 = vld [vmem:[%s0 + $0x1d8] sm:$0xff]
  %v75 = vld [vmem:[%s0 + $0x1e0] sm:$0xff]
  %v76 = vld [vmem:[%s0 + $0x1e8] sm:$0xff]
  %v77 = vld [vmem:[%s0 + $0x1f0] sm:$0xff]
  %v78 = vld [vmem:[%s0 + $0x1f8] sm:$0xff]
  %v79 = vld [vmem:[%s1] sm:$0xf]
  %v80 = vld [vmem:[%s1 + $0x4] sm:$0xf]
  %v81 = vld [vmem:[%s1 + $0x8] sm:$0xf]
  %v82 = vld [vmem:[%s1 + $0xc] sm:$0xf]
  %v83 = vld [vmem:[%s1 + $0x10] sm:$0xf]
  %v84 = vld [vmem:[%s1 + $0x14] sm:$0xf]
  %v85 = vld [vmem:[%s1 + $0x18] sm:$0xf]
  %v86 = vld [vmem:[%s1 + $0x1c] sm:$0xf]
  %v87 = vld [vmem:[%s1 + $0x20] sm:$0xf]
  %v88 = vld [vmem:[%s1 + $0x24] sm:$0xf]
  %v89 = vld [vmem:[%s1 + $0x28] sm:$0xf]
  %v90 = vld [vmem:[%s1 + $0x2c] sm:$0xf]
  %v91 = vld [vmem:[%s1 + $0x30] sm:$0xf]
  %v92 = vld [vmem:[%s1 + $0x34] sm:$0xf]
  %v93 = vld [vmem:[%s1 + $0x38] sm:$0xf]
  %v94 = vld [vmem:[%s1 + $0x3c] sm:$0xf]
  %v95 = vld [vmem:[%s1 + $0x40] sm:$0xf]
  %v96 = vld [vmem:[%s1 + $0x44] sm:$0xf]
  %v161 = vunpack.c.l.b16 %v15
  %v162 = vunpack.c.h.b16 %v15
  %v163 = vunpack.c.l.b16 %v16
  %v164 = vunpack.c.h.b16 %v16
  %v165 = vunpack.c.l.b16 %v17
  %v166 = vunpack.c.h.b16 %v17
  %v167 = vunpack.c.l.b16 %v18
  %v168 = vunpack.c.h.b16 %v18
  %v169 = vunpack.c.l.b16 %v19
  %v170 = vunpack.c.h.b16 %v19
  %v171 = vunpack.c.l.b16 %v20
  %v172 = vunpack.c.h.b16 %v20
  %v173 = vunpack.c.l.b16 %v21
  %v174 = vunpack.c.h.b16 %v21
  %v175 = vunpack.c.l.b16 %v22
  %v176 = vunpack.c.h.b16 %v22
  %v177 = vunpack.c.l.b16 %v23
  %v178 = vunpack.c.h.b16 %v23
  %v179 = vunpack.c.l.b16 %v24
  %v180 = vunpack.c.h.b16 %v24
  %v181 = vunpack.c.l.b16 %v25
  %v182 = vunpack.c.h.b16 %v25
  %v183 = vunpack.c.l.b16 %v26
  %v184 = vunpack.c.h.b16 %v26
  %v185 = vunpack.c.l.b16 %v27
  %v186 = vunpack.c.h.b16 %v27
  %v187 = vunpack.c.l.b16 %v28
  %v188 = vunpack.c.h.b16 %v28
  %v189 = vunpack.c.l.b16 %v29
  %v190 = vunpack.c.h.b16 %v29
  %v191 = vunpack.c.l.b16 %v30
  %v192 = vunpack.c.h.b16 %v30
  %v193 = vunpack.c.l.b16 %v31
  %v194 = vunpack.c.h.b16 %v31
  %v195 = vunpack.c.l.b16 %v32
  %v196 = vunpack.c.h.b16 %v32
  %v197 = vunpack.c.l.b16 %v33
  %v198 = vunpack.c.h.b16 %v33
  %v199 = vunpack.c.l.b16 %v34
  %v200 = vunpack.c.h.b16 %v34
  %v201 = vunpack.c.l.b16 %v35
  %v202 = vunpack.c.h.b16 %v35
  %v203 = vunpack.c.l.b16 %v36
  %v204 = vunpack.c.h.b16 %v36
  %v205 = vunpack.c.l.b16 %v37
  %v206 = vunpack.c.h.b16 %v37
  %v207 = vunpack.c.l.b16 %v38
  %v208 = vunpack.c.h.b16 %v38
  %v209 = vunpack.c.l.b16 %v39
  %v210 = vunpack.c.h.b16 %v39
  %v211 = vunpack.c.l.b16 %v40
  %v212 = vunpack.c.h.b16 %v40
  %v213 = vunpack.c.l.b16 %v41
  %v214 = vunpack.c.h.b16 %v41
  %v215 = vunpack.c.l.b16 %v42
  %v216 = vunpack.c.h.b16 %v42
  %v217 = vunpack.c.l.b16 %v43
  %v218 = vunpack.c.h.b16 %v43
  %v219 = vunpack.c.l.b16 %v44
  %v220 = vunpack.c.h.b16 %v44
  %v221 = vunpack.c.l.b16 %v45
  %v222 = vunpack.c.h.b16 %v45
  %v223 = vunpack.c.l.b16 %v46
  %v224 = vunpack.c.h.b16 %v46
  %v225 = vunpack.c.l.b16 %v47
  %v226 = vunpack.c.h.b16 %v47
  %v227 = vunpack.c.l.b16 %v48
  %v228 = vunpack.c.h.b16 %v48
  %v229 = vunpack.c.l.b16 %v49
  %v230 = vunpack.c.h.b16 %v49
  %v231 = vunpack.c.l.b16 %v50
  %v232 = vunpack.c.h.b16 %v50
  %v233 = vunpack.c.l.b16 %v51
  %v234 = vunpack.c.h.b16 %v51
  %v235 = vunpack.c.l.b16 %v52
  %v236 = vunpack.c.h.b16 %v52
  %v237 = vunpack.c.l.b16 %v53
  %v238 = vunpack.c.h.b16 %v53
  %v239 = vunpack.c.l.b16 %v54
  %v240 = vunpack.c.h.b16 %v54
  %v241 = vunpack.c.l.b16 %v55
  %v242 = vunpack.c.h.b16 %v55
  %v243 = vunpack.c.l.b16 %v56
  %v244 = vunpack.c.h.b16 %v56
  %v245 = vunpack.c.l.b16 %v57
  %v246 = vunpack.c.h.b16 %v57
  %v247 = vunpack.c.l.b16 %v58
  %v248 = vunpack.c.h.b16 %v58
  %v249 = vunpack.c.l.b16 %v59
  %v250 = vunpack.c.h.b16 %v59
  %v251 = vunpack.c.l.b16 %v60
  %v252 = vunpack.c.h.b16 %v60
  %v253 = vunpack.c.l.b16 %v61
  %v254 = vunpack.c.h.b16 %v61
  %v255 = vunpack.c.l.b16 %v62
  %v256 = vunpack.c.h.b16 %v62
  %v257 = vunpack.c.l.b16 %v63
  %v258 = vunpack.c.h.b16 %v63
  %v259 = vunpack.c.l.b16 %v64
  %v260 = vunpack.c.h.b16 %v64
  %v261 = vunpack.c.l.b16 %v65
  %v262 = vunpack.c.h.b16 %v65
  %v263 = vunpack.c.l.b16 %v66
  %v264 = vunpack.c.h.b16 %v66
  %v265 = vunpack.c.l.b16 %v67
  %v266 = vunpack.c.h.b16 %v67
  %v267 = vunpack.c.l.b16 %v68
  %v268 = vunpack.c.h.b16 %v68
  %v269 = vunpack.c.l.b16 %v69
  %v270 = vunpack.c.h.b16 %v69
  %v271 = vunpack.c.l.b16 %v70
  %v272 = vunpack.c.h.b16 %v70
  %v273 = vunpack.c.l.b16 %v71
  %v274 = vunpack.c.h.b16 %v71
  %v275 = vunpack.c.l.b16 %v72
  %v276 = vunpack.c.h.b16 %v72
  %v277 = vunpack.c.l.b16 %v73
  %v278 = vunpack.c.h.b16 %v73
  %v279 = vunpack.c.l.b16 %v74
  %v280 = vunpack.c.h.b16 %v74
  %v281 = vunpack.c.l.b16 %v75
  %v282 = vunpack.c.h.b16 %v75
  %v283 = vunpack.c.l.b16 %v76
  %v284 = vunpack.c.h.b16 %v76
  %v285 = vunpack.c.l.b16 %v77
  %v286 = vunpack.c.h.b16 %v77
  %v287 = vunpack.c.l.b16 %v78
  %v288 = vunpack.c.h.b16 %v78
  %v289 = vpack.c.b16 %v163, %v161
  %v290 = vpack.c.b16 %v164, %v162
  %v291 = vpack.c.b16 %v167, %v165
  %v292 = vpack.c.b16 %v168, %v166
  %v293 = vpack.c.b16 %v171, %v169
  %v294 = vpack.c.b16 %v172, %v170
  %v295 = vpack.c.b16 %v175, %v173
  %v296 = vpack.c.b16 %v176, %v174
  %v297 = vpack.c.b16 %v179, %v177
  %v298 = vpack.c.b16 %v180, %v178
  %v299 = vpack.c.b16 %v183, %v181
  %v300 = vpack.c.b16 %v184, %v182
  %v301 = vpack.c.b16 %v187, %v185
  %v302 = vpack.c.b16 %v188, %v186
  %v303 = vpack.c.b16 %v191, %v189
  %v304 = vpack.c.b16 %v192, %v190
  %v305 = vpack.c.b16 %v195, %v193
  %v306 = vpack.c.b16 %v196, %v194
  %v307 = vpack.c.b16 %v199, %v197
  %v308 = vpack.c.b16 %v200, %v198
  %v309 = vpack.c.b16 %v203, %v201
  %v310 = vpack.c.b16 %v204, %v202
  %v311 = vpack.c.b16 %v207, %v205
  %v312 = vpack.c.b16 %v208, %v206
  %v313 = vpack.c.b16 %v211, %v209
  %v314 = vpack.c.b16 %v212, %v210
  %v315 = vpack.c.b16 %v215, %v213
  %v316 = vpack.c.b16 %v216, %v214
  %v317 = vpack.c.b16 %v219, %v217
  %v318 = vpack.c.b16 %v220, %v218
  %v319 = vpack.c.b16 %v223, %v221
  %v320 = vpack.c.b16 %v224, %v222
  %v321 = vpack.c.b16 %v227, %v225
  %v322 = vpack.c.b16 %v228, %v226
  %v323 = vpack.c.b16 %v231, %v229
  %v324 = vpack.c.b16 %v232, %v230
  %v325 = vpack.c.b16 %v235, %v233
  %v326 = vpack.c.b16 %v236, %v234
  %v327 = vpack.c.b16 %v239, %v237
  %v328 = vpack.c.b16 %v240, %v238
  %v329 = vpack.c.b16 %v243, %v241
  %v330 = vpack.c.b16 %v244, %v242
  %v331 = vpack.c.b16 %v247, %v245
  %v332 = vpack.c.b16 %v248, %v246
  %v333 = vpack.c.b16 %v251, %v249
  %v334 = vpack.c.b16 %v252, %v250
  %v335 = vpack.c.b16 %v255, %v253
  %v336 = vpack.c.b16 %v256, %v254
  %v337 = vpack.c.b16 %v259, %v257
  %v338 = vpack.c.b16 %v260, %v258
  %v339 = vpack.c.b16 %v263, %v261
  %v340 = vpack.c.b16 %v264, %v262
  %v341 = vpack.c.b16 %v267, %v265
  %v342 = vpack.c.b16 %v268, %v266
  %v343 = vpack.c.b16 %v271, %v269
  %v344 = vpack.c.b16 %v272, %v270
  %v345 = vpack.c.b16 %v275, %v273
  %v346 = vpack.c.b16 %v276, %v274
  %v347 = vpack.c.b16 %v279, %v277
  %v348 = vpack.c.b16 %v280, %v278
  %v349 = vpack.c.b16 %v283, %v281
  %v350 = vpack.c.b16 %v284, %v282
  %v351 = vpack.c.b16 %v287, %v285
  %v352 = vpack.c.b16 %v288, %v286
  %v403 = vunpack.c.l.b16 %v79
  %v404 = vunpack.c.l.b16 %v80
  %v405 = vunpack.c.l.b16 %v81
  %v406 = vunpack.c.l.b16 %v82
  %v407 = vunpack.c.l.b16 %v83
  %v408 = vunpack.c.l.b16 %v84
  %v409 = vunpack.c.l.b16 %v85
  %v410 = vunpack.c.l.b16 %v86
  %v411 = vunpack.c.l.b16 %v87
  %v412 = vunpack.c.l.b16 %v88
  %v413 = vunpack.c.l.b16 %v89
  %v414 = vunpack.c.l.b16 %v90
  %v415 = vunpack.c.l.b16 %v91
  %v416 = vunpack.c.l.b16 %v92
  %v417 = vunpack.c.l.b16 %v93
  %v418 = vunpack.c.l.b16 %v94
  %v419 = vunpack.c.l.b16 %v95
  %v420 = vunpack.c.l.b16 %v96
  %v421 = vpack.c.b16 %v404, %v403
  %v422 = vpack.c.b16 %v406, %v405
  %v423 = vpack.c.b16 %v408, %v407
  %v424 = vpack.c.b16 %v410, %v409
  %v425 = vpack.c.b16 %v412, %v411
  %v426 = vpack.c.b16 %v414, %v413
  %v427 = vpack.c.b16 %v416, %v415
  %v428 = vpack.c.b16 %v418, %v417
  %v429 = vpack.c.b16 %v420, %v419
  %vm439 = vcmask 130048
  %v441 = vsel %vm439, %v290, 0
  %v444 = vsel %vm439, %v292, 0
  %v447 = vsel %vm439, %v294, 0
  %v450 = vsel %vm439, %v296, 0
  %v453 = vsel %vm439, %v298, 0
  %v456 = vsel %vm439, %v300, 0
  %v459 = vsel %vm439, %v302, 0
  %v462 = vsel %vm439, %v304, 0
  %v465 = vsel %vm439, %v306, 0
  %v468 = vsel %vm439, %v308, 0
  %v471 = vsel %vm439, %v310, 0
  %v474 = vsel %vm439, %v312, 0
  %v477 = vsel %vm439, %v314, 0
  %v480 = vsel %vm439, %v316, 0
  %v483 = vsel %vm439, %v318, 0
  %v486 = vsel %vm439, %v320, 0
  %v489 = vsel %vm439, %v322, 0
  %v492 = vsel %vm439, %v324, 0
  %v495 = vsel %vm439, %v326, 0
  %v498 = vsel %vm439, %v328, 0
  %v501 = vsel %vm439, %v330, 0
  %v504 = vsel %vm439, %v332, 0
  %v507 = vsel %vm439, %v334, 0
  %v510 = vsel %vm439, %v336, 0
  %v513 = vsel %vm439, %v338, 0
  %v516 = vsel %vm439, %v340, 0
  %v519 = vsel %vm439, %v342, 0
  %v522 = vsel %vm439, %v344, 0
  %v525 = vsel %vm439, %v346, 0
  %v528 = vsel %vm439, %v348, 0
  %v531 = vsel %vm439, %v350, 0
  %v534 = vsel %vm439, %v352, 0
  %536 = vmatpush.bf16.msra.mxu0 %v428
  %537 = vmatpush.bf16.msra.mxu0 %v427
  %538 = vmatpush.bf16.msra.mxu0 %v426
  %539 = vmatpush.bf16.msra.mxu0 %v425
  %540 = vmatpush.bf16.msra.mxu0 %v424
  %541 = vmatpush.bf16.msra.mxu0 %v423
  %542 = vmatpush.bf16.msra.mxu0 %v422
  %543 = vmatpush.bf16.msra.mxu0 %v421
  %544 = vmatmul.bf16.gmra.mxu0 %v289
  %v545 = vpop.f32.mrf.mxu0
  %v546 = vadd.f32 0.0, %v545
  %v547 = vpop.f32.mrf.mxu0
  %v548 = vadd.f32 0.0, %v547
  %549 = vmatmul.bf16.gmra.mxu0 %v291
  %v550 = vpop.f32.mrf.mxu0
  %v551 = vadd.f32 0.0, %v550
  %v552 = vpop.f32.mrf.mxu0
  %v553 = vadd.f32 0.0, %v552
  %554 = vmatmul.bf16.gmra.mxu0 %v293
  %v555 = vpop.f32.mrf.mxu0
  %v556 = vadd.f32 0.0, %v555
  %v557 = vpop.f32.mrf.mxu0
  %v558 = vadd.f32 0.0, %v557
  %559 = vmatmul.bf16.gmra.mxu0 %v295
  %v560 = vpop.f32.mrf.mxu0
  %v561 = vadd.f32 0.0, %v560
  %v562 = vpop.f32.mrf.mxu0
  %v563 = vadd.f32 0.0, %v562
  %564 = vmatmul.bf16.gmra.mxu0 %v297
  %v565 = vpop.f32.mrf.mxu0
  %v566 = vadd.f32 0.0, %v565
  %v567 = vpop.f32.mrf.mxu0
  %v568 = vadd.f32 0.0, %v567
  %569 = vmatmul.bf16.gmra.mxu0 %v299
  %v570 = vpop.f32.mrf.mxu0
  %v571 = vadd.f32 0.0, %v570
  %v572 = vpop.f32.mrf.mxu0
  %v573 = vadd.f32 0.0, %v572
  %574 = vmatmul.bf16.gmra.mxu0 %v301
  %v575 = vpop.f32.mrf.mxu0
  %v576 = vadd.f32 0.0, %v575
  %v577 = vpop.f32.mrf.mxu0
  %v578 = vadd.f32 0.0, %v577
  %579 = vmatmul.bf16.gmra.mxu0 %v303
  %v580 = vpop.f32.mrf.mxu0
  %v581 = vadd.f32 0.0, %v580
  %v582 = vpop.f32.mrf.mxu0
  %v583 = vadd.f32 0.0, %v582
  %584 = vmatmul.bf16.gmra.mxu0 %v305
  %v585 = vpop.f32.mrf.mxu0
  %v586 = vadd.f32 0.0, %v585
  %v587 = vpop.f32.mrf.mxu0
  %v588 = vadd.f32 0.0, %v587
  %589 = vmatmul.bf16.gmra.mxu0 %v307
  %v590 = vpop.f32.mrf.mxu0
  %v591 = vadd.f32 0.0, %v590
  %v592 = vpop.f32.mrf.mxu0
  %v593 = vadd.f32 0.0, %v592
  %594 = vmatmul.bf16.gmra.mxu0 %v309
  %v595 = vpop.f32.mrf.mxu0
  %v596 = vadd.f32 0.0, %v595
  %v597 = vpop.f32.mrf.mxu0
  %v598 = vadd.f32 0.0, %v597
  %599 = vmatmul.bf16.gmra.mxu0 %v311
  %v600 = vpop.f32.mrf.mxu0
  %v601 = vadd.f32 0.0, %v600
  %v602 = vpop.f32.mrf.mxu0
  %v603 = vadd.f32 0.0, %v602
  %604 = vmatmul.bf16.gmra.mxu0 %v313
  %v605 = vpop.f32.mrf.mxu0
  %v606 = vadd.f32 0.0, %v605
  %v607 = vpop.f32.mrf.mxu0
  %v608 = vadd.f32 0.0, %v607
  %609 = vmatmul.bf16.gmra.mxu0 %v315
  %v610 = vpop.f32.mrf.mxu0
  %v611 = vadd.f32 0.0, %v610
  %v612 = vpop.f32.mrf.mxu0
  %v613 = vadd.f32 0.0, %v612
  %614 = vmatmul.bf16.gmra.mxu0 %v317
  %v615 = vpop.f32.mrf.mxu0
  %v616 = vadd.f32 0.0, %v615
  %v617 = vpop.f32.mrf.mxu0
  %v618 = vadd.f32 0.0, %v617
  %619 = vmatmul.bf16.gmra.mxu0 %v319
  %v620 = vpop.f32.mrf.mxu0
  %v621 = vadd.f32 0.0, %v620
  %v622 = vpop.f32.mrf.mxu0
  %v623 = vadd.f32 0.0, %v622
  %624 = vmatmul.bf16.gmra.mxu0 %v321
  %v625 = vpop.f32.mrf.mxu0
  %v626 = vadd.f32 0.0, %v625
  %v627 = vpop.f32.mrf.mxu0
  %v628 = vadd.f32 0.0, %v627
  %629 = vmatmul.bf16.gmra.mxu0 %v323
  %v630 = vpop.f32.mrf.mxu0
  %v631 = vadd.f32 0.0, %v630
  %v632 = vpop.f32.mrf.mxu0
  %v633 = vadd.f32 0.0, %v632
  %634 = vmatmul.bf16.gmra.mxu0 %v325
  %v635 = vpop.f32.mrf.mxu0
  %v636 = vadd.f32 0.0, %v635
  %v637 = vpop.f32.mrf.mxu0
  %v638 = vadd.f32 0.0, %v637
  %639 = vmatmul.bf16.gmra.mxu0 %v327
  %v640 = vpop.f32.mrf.mxu0
  %v641 = vadd.f32 0.0, %v640
  %v642 = vpop.f32.mrf.mxu0
  %v643 = vadd.f32 0.0, %v642
  %644 = vmatmul.bf16.gmra.mxu0 %v329
  %v645 = vpop.f32.mrf.mxu0
  %v646 = vadd.f32 0.0, %v645
  %v647 = vpop.f32.mrf.mxu0
  %v648 = vadd.f32 0.0, %v647
  %649 = vmatmul.bf16.gmra.mxu0 %v331
  %v650 = vpop.f32.mrf.mxu0
  %v651 = vadd.f32 0.0, %v650
  %v652 = vpop.f32.mrf.mxu0
  %v653 = vadd.f32 0.0, %v652
  %654 = vmatmul.bf16.gmra.mxu0 %v333
  %v655 = vpop.f32.mrf.mxu0
  %v656 = vadd.f32 0.0, %v655
  %v657 = vpop.f32.mrf.mxu0
  %v658 = vadd.f32 0.0, %v657
  %659 = vmatmul.bf16.gmra.mxu0 %v335
  %v660 = vpop.f32.mrf.mxu0
  %v661 = vadd.f32 0.0, %v660
  %v662 = vpop.f32.mrf.mxu0
  %v663 = vadd.f32 0.0, %v662
  %664 = vmatmul.bf16.gmra.mxu0 %v337
  %v665 = vpop.f32.mrf.mxu0
  %v666 = vadd.f32 0.0, %v665
  %v667 = vpop.f32.mrf.mxu0
  %v668 = vadd.f32 0.0, %v667
  %669 = vmatmul.bf16.gmra.mxu0 %v339
  %v670 = vpop.f32.mrf.mxu0
  %v671 = vadd.f32 0.0, %v670
  %v672 = vpop.f32.mrf.mxu0
  %v673 = vadd.f32 0.0, %v672
  %674 = vmatmul.bf16.gmra.mxu0 %v341
  %v675 = vpop.f32.mrf.mxu0
  %v676 = vadd.f32 0.0, %v675
  %v677 = vpop.f32.mrf.mxu0
  %v678 = vadd.f32 0.0, %v677
  %679 = vmatmul.bf16.gmra.mxu0 %v343
  %v680 = vpop.f32.mrf.mxu0
  %v681 = vadd.f32 0.0, %v680
  %v682 = vpop.f32.mrf.mxu0
  %v683 = vadd.f32 0.0, %v682
  %684 = vmatmul.bf16.gmra.mxu0 %v345
  %v685 = vpop.f32.mrf.mxu0
  %v686 = vadd.f32 0.0, %v685
  %v687 = vpop.f32.mrf.mxu0
  %v688 = vadd.f32 0.0, %v687
  %689 = vmatmul.bf16.gmra.mxu0 %v347
  %v690 = vpop.f32.mrf.mxu0
  %v691 = vadd.f32 0.0, %v690
  %v692 = vpop.f32.mrf.mxu0
  %v693 = vadd.f32 0.0, %v692
  %694 = vmatmul.bf16.gmra.mxu0 %v349
  %v695 = vpop.f32.mrf.mxu0
  %v696 = vadd.f32 0.0, %v695
  %v697 = vpop.f32.mrf.mxu0
  %v698 = vadd.f32 0.0, %v697
  %699 = vmatmul.bf16.gmra.mxu0 %v351
  %v700 = vpop.f32.mrf.mxu0
  %v701 = vadd.f32 0.0, %v700
  %v702 = vpop.f32.mrf.mxu0
  %v703 = vadd.f32 0.0, %v702
  %704 = vdwg.mxu0
  %705 = vmatpush.bf16.msra.mxu0 0
  %706 = vmatpush.bf16.msra.mxu0 0
  %707 = vmatpush.bf16.msra.mxu0 0
  %708 = vmatpush.bf16.msra.mxu0 0
  %709 = vmatpush.bf16.msra.mxu0 0
  %710 = vmatpush.bf16.msra.mxu0 0
  %711 = vmatpush.bf16.msra.mxu0 0
  %712 = vmatpush.bf16.msra.mxu0 %v429
  %713 = vmatmul.bf16.gmra.mxu0 %v441
  %v714 = vpop.f32.mrf.mxu0
  %v715 = vadd.f32 %v546, %v714
  %v716 = vpop.f32.mrf.mxu0
  %v717 = vadd.f32 %v548, %v716
  %718 = vmatmul.bf16.gmra.mxu0 %v444
  %v719 = vpop.f32.mrf.mxu0
  %v720 = vadd.f32 %v551, %v719
  %v721 = vpop.f32.mrf.mxu0
  %v722 = vadd.f32 %v553, %v721
  %723 = vmatmul.bf16.gmra.mxu0 %v447
  %v724 = vpop.f32.mrf.mxu0
  %v725 = vadd.f32 %v556, %v724
  %v726 = vpop.f32.mrf.mxu0
  %v727 = vadd.f32 %v558, %v726
  %728 = vmatmul.bf16.gmra.mxu0 %v450
  %v729 = vpop.f32.mrf.mxu0
  %v730 = vadd.f32 %v561, %v729
  %v731 = vpop.f32.mrf.mxu0
  %v732 = vadd.f32 %v563, %v731
  %733 = vmatmul.bf16.gmra.mxu0 %v453
  %v734 = vpop.f32.mrf.mxu0
  %v735 = vadd.f32 %v566, %v734
  %v736 = vpop.f32.mrf.mxu0
  %v737 = vadd.f32 %v568, %v736
  %738 = vmatmul.bf16.gmra.mxu0 %v456
  %v739 = vpop.f32.mrf.mxu0
  %v740 = vadd.f32 %v571, %v739
  %v741 = vpop.f32.mrf.mxu0
  %v742 = vadd.f32 %v573, %v741
  %743 = vmatmul.bf16.gmra.mxu0 %v459
  %v744 = vpop.f32.mrf.mxu0
  %v745 = vadd.f32 %v576, %v744
  %v746 = vpop.f32.mrf.mxu0
  %v747 = vadd.f32 %v578, %v746
  %748 = vmatmul.bf16.gmra.mxu0 %v462
  %v749 = vpop.f32.mrf.mxu0
  %v750 = vadd.f32 %v581, %v749
  %v751 = vpop.f32.mrf.mxu0
  %v752 = vadd.f32 %v583, %v751
  %753 = vmatmul.bf16.gmra.mxu0 %v465
  %v754 = vpop.f32.mrf.mxu0
  %v755 = vadd.f32 %v586, %v754
  %v756 = vpop.f32.mrf.mxu0
  %v757 = vadd.f32 %v588, %v756
  %758 = vmatmul.bf16.gmra.mxu0 %v468
  %v759 = vpop.f32.mrf.mxu0
  %v760 = vadd.f32 %v591, %v759
  %v761 = vpop.f32.mrf.mxu0
  %v762 = vadd.f32 %v593, %v761
  %763 = vmatmul.bf16.gmra.mxu0 %v471
  %v764 = vpop.f32.mrf.mxu0
  %v765 = vadd.f32 %v596, %v764
  %v766 = vpop.f32.mrf.mxu0
  %v767 = vadd.f32 %v598, %v766
  %768 = vmatmul.bf16.gmra.mxu0 %v474
  %v769 = vpop.f32.mrf.mxu0
  %v770 = vadd.f32 %v601, %v769
  %v771 = vpop.f32.mrf.mxu0
  %v772 = vadd.f32 %v603, %v771
  %773 = vmatmul.bf16.gmra.mxu0 %v477
  %v774 = vpop.f32.mrf.mxu0
  %v775 = vadd.f32 %v606, %v774
  %v776 = vpop.f32.mrf.mxu0
  %v777 = vadd.f32 %v608, %v776
  %778 = vmatmul.bf16.gmra.mxu0 %v480
  %v779 = vpop.f32.mrf.mxu0
  %v780 = vadd.f32 %v611, %v779
  %v781 = vpop.f32.mrf.mxu0
  %v782 = vadd.f32 %v613, %v781
  %783 = vmatmul.bf16.gmra.mxu0 %v483
  %v784 = vpop.f32.mrf.mxu0
  %v785 = vadd.f32 %v616, %v784
  %v786 = vpop.f32.mrf.mxu0
  %v787 = vadd.f32 %v618, %v786
  %788 = vmatmul.bf16.gmra.mxu0 %v486
  %v789 = vpop.f32.mrf.mxu0
  %v790 = vadd.f32 %v621, %v789
  %v791 = vpop.f32.mrf.mxu0
  %v792 = vadd.f32 %v623, %v791
  %793 = vmatmul.bf16.gmra.mxu0 %v489
  %v794 = vpop.f32.mrf.mxu0
  %v795 = vadd.f32 %v626, %v794
  %v796 = vpop.f32.mrf.mxu0
  %v797 = vadd.f32 %v628, %v796
  %798 = vmatmul.bf16.gmra.mxu0 %v492
  %v799 = vpop.f32.mrf.mxu0
  %v800 = vadd.f32 %v631, %v799
  %v801 = vpop.f32.mrf.mxu0
  %v802 = vadd.f32 %v633, %v801
  %803 = vmatmul.bf16.gmra.mxu0 %v495
  %v804 = vpop.f32.mrf.mxu0
  %v805 = vadd.f32 %v636, %v804
  %v806 = vpop.f32.mrf.mxu0
  %v807 = vadd.f32 %v638, %v806
  %808 = vmatmul.bf16.gmra.mxu0 %v498
  %v809 = vpop.f32.mrf.mxu0
  %v810 = vadd.f32 %v641, %v809
  %v811 = vpop.f32.mrf.mxu0
  %v812 = vadd.f32 %v643, %v811
  %813 = vmatmul.bf16.gmra.mxu0 %v501
  %v814 = vpop.f32.mrf.mxu0
  %v815 = vadd.f32 %v646, %v814
  %v816 = vpop.f32.mrf.mxu0
  %v817 = vadd.f32 %v648, %v816
  %818 = vmatmul.bf16.gmra.mxu0 %v504
  %v819 = vpop.f32.mrf.mxu0
  %v820 = vadd.f32 %v651, %v819
  %v821 = vpop.f32.mrf.mxu0
  %v822 = vadd.f32 %v653, %v821
  %823 = vmatmul.bf16.gmra.mxu0 %v507
  %v824 = vpop.f32.mrf.mxu0
  %v825 = vadd.f32 %v656, %v824
  %v826 = vpop.f32.mrf.mxu0
  %v827 = vadd.f32 %v658, %v826
  %828 = vmatmul.bf16.gmra.mxu0 %v510
  %v829 = vpop.f32.mrf.mxu0
  %v830 = vadd.f32 %v661, %v829
  %v831 = vpop.f32.mrf.mxu0
  %v832 = vadd.f32 %v663, %v831
  %833 = vmatmul.bf16.gmra.mxu0 %v513
  %v834 = vpop.f32.mrf.mxu0
  %v835 = vadd.f32 %v666, %v834
  %v836 = vpop.f32.mrf.mxu0
  %v837 = vadd.f32 %v668, %v836
  %838 = vmatmul.bf16.gmra.mxu0 %v516
  %v839 = vpop.f32.mrf.mxu0
  %v840 = vadd.f32 %v671, %v839
  %v841 = vpop.f32.mrf.mxu0
  %v842 = vadd.f32 %v673, %v841
  %843 = vmatmul.bf16.gmra.mxu0 %v519
  %v844 = vpop.f32.mrf.mxu0
  %v845 = vadd.f32 %v676, %v844
  %v846 = vpop.f32.mrf.mxu0
  %v847 = vadd.f32 %v678, %v846
  %848 = vmatmul.bf16.gmra.mxu0 %v522
  %v849 = vpop.f32.mrf.mxu0
  %v850 = vadd.f32 %v681, %v849
  %v851 = vpop.f32.mrf.mxu0
  %v852 = vadd.f32 %v683, %v851
  %853 = vmatmul.bf16.gmra.mxu0 %v525
  %v854 = vpop.f32.mrf.mxu0
  %v855 = vadd.f32 %v686, %v854
  %v856 = vpop.f32.mrf.mxu0
  %v857 = vadd.f32 %v688, %v856
  %858 = vmatmul.bf16.gmra.mxu0 %v528
  %v859 = vpop.f32.mrf.mxu0
  %v860 = vadd.f32 %v691, %v859
  %v861 = vpop.f32.mrf.mxu0
  %v862 = vadd.f32 %v693, %v861
  %863 = vmatmul.bf16.gmra.mxu0 %v531
  %v864 = vpop.f32.mrf.mxu0
  %v865 = vadd.f32 %v696, %v864
  %v866 = vpop.f32.mrf.mxu0
  %v867 = vadd.f32 %v698, %v866
  %868 = vmatmul.bf16.gmra.mxu0 %v534
  %v869 = vpop.f32.mrf.mxu0
  %v870 = vadd.f32 %v701, %v869
  %v871 = vpop.f32.mrf.mxu0
  %v872 = vadd.f32 %v703, %v871
  %873 = vdwg.mxu0
  %874 = vst [vmem:[%s2] sm:$0xff] %v715
  %875 = vst [vmem:[%s2 + $0x8] sm:$0xff] %v717
  %876 = vst [vmem:[%s2 + $0x10] sm:$0xff] %v720
  %877 = vst [vmem:[%s2 + $0x18] sm:$0xff] %v722
  %878 = vst [vmem:[%s2 + $0x20] sm:$0xff] %v725
  %879 = vst [vmem:[%s2 + $0x28] sm:$0xff] %v727
  %880 = vst [vmem:[%s2 + $0x30] sm:$0xff] %v730
  %881 = vst [vmem:[%s2 + $0x38] sm:$0xff] %v732
  %882 = vst [vmem:[%s2 + $0x40] sm:$0xff] %v735
  %883 = vst [vmem:[%s2 + $0x48] sm:$0xff] %v737
  %884 = vst [vmem:[%s2 + $0x50] sm:$0xff] %v740
  %885 = vst [vmem:[%s2 + $0x58] sm:$0xff] %v742
  %886 = vst [vmem:[%s2 + $0x60] sm:$0xff] %v745
  %887 = vst [vmem:[%s2 + $0x68] sm:$0xff] %v747
  %888 = vst [vmem:[%s2 + $0x70] sm:$0xff] %v750
  %889 = vst [vmem:[%s2 + $0x78] sm:$0xff] %v752
  %890 = vst [vmem:[%s2 + $0x80] sm:$0xff] %v755
  %891 = vst [vmem:[%s2 + $0x88] sm:$0xff] %v757
  %892 = vst [vmem:[%s2 + $0x90] sm:$0xff] %v760
  %893 = vst [vmem:[%s2 + $0x98] sm:$0xff] %v762
  %894 = vst [vmem:[%s2 + $0xa0] sm:$0xff] %v765
  %895 = vst [vmem:[%s2 + $0xa8] sm:$0xff] %v767
  %896 = vst [vmem:[%s2 + $0xb0] sm:$0xff] %v770
  %897 = vst [vmem:[%s2 + $0xb8] sm:$0xff] %v772
  %898 = vst [vmem:[%s2 + $0xc0] sm:$0xff] %v775
  %899 = vst [vmem:[%s2 + $0xc8] sm:$0xff] %v777
  %900 = vst [vmem:[%s2 + $0xd0] sm:$0xff] %v780
  %901 = vst [vmem:[%s2 + $0xd8] sm:$0xff] %v782
  %902 = vst [vmem:[%s2 + $0xe0] sm:$0xff] %v785
  %903 = vst [vmem:[%s2 + $0xe8] sm:$0xff] %v787
  %904 = vst [vmem:[%s2 + $0xf0] sm:$0xff] %v790
  %905 = vst [vmem:[%s2 + $0xf8] sm:$0xff] %v792
  %906 = vst [vmem:[%s2 + $0x100] sm:$0xff] %v795
  %907 = vst [vmem:[%s2 + $0x108] sm:$0xff] %v797
  %908 = vst [vmem:[%s2 + $0x110] sm:$0xff] %v800
  %909 = vst [vmem:[%s2 + $0x118] sm:$0xff] %v802
  %910 = vst [vmem:[%s2 + $0x120] sm:$0xff] %v805
  %911 = vst [vmem:[%s2 + $0x128] sm:$0xff] %v807
  %912 = vst [vmem:[%s2 + $0x130] sm:$0xff] %v810
  %913 = vst [vmem:[%s2 + $0x138] sm:$0xff] %v812
  %914 = vst [vmem:[%s2 + $0x140] sm:$0xff] %v815
  %915 = vst [vmem:[%s2 + $0x148] sm:$0xff] %v817
  %916 = vst [vmem:[%s2 + $0x150] sm:$0xff] %v820
  %917 = vst [vmem:[%s2 + $0x158] sm:$0xff] %v822
  %918 = vst [vmem:[%s2 + $0x160] sm:$0xff] %v825
  %919 = vst [vmem:[%s2 + $0x168] sm:$0xff] %v827
  %920 = vst [vmem:[%s2 + $0x170] sm:$0xff] %v830
  %921 = vst [vmem:[%s2 + $0x178] sm:$0xff] %v832
  %922 = vst [vmem:[%s2 + $0x180] sm:$0xff] %v835
  %923 = vst [vmem:[%s2 + $0x188] sm:$0xff] %v837
  %924 = vst [vmem:[%s2 + $0x190] sm:$0xff] %v840
  %925 = vst [vmem:[%s2 + $0x198] sm:$0xff] %v842
  %926 = vst [vmem:[%s2 + $0x1a0] sm:$0xff] %v845
  %927 = vst [vmem:[%s2 + $0x1a8] sm:$0xff] %v847
  %928 = vst [vmem:[%s2 + $0x1b0] sm:$0xff] %v850
  %929 = vst [vmem:[%s2 + $0x1b8] sm:$0xff] %v852
  %930 = vst [vmem:[%s2 + $0x1c0] sm:$0xff] %v855
  %931 = vst [vmem:[%s2 + $0x1c8] sm:$0xff] %v857
  %932 = vst [vmem:[%s2 + $0x1d0] sm:$0xff] %v860
  %933 = vst [vmem:[%s2 + $0x1d8] sm:$0xff] %v862
  %934 = vst [vmem:[%s2 + $0x1e0] sm:$0xff] %v865
  %935 = vst [vmem:[%s2 + $0x1e8] sm:$0xff] %v867
  %936 = vst [vmem:[%s2 + $0x1f0] sm:$0xff] %v870
  %937 = vst [vmem:[%s2 + $0x1f8] sm:$0xff] %v872
  %v938 = vadd.f32 %v715, %v717
  %v939 = vadd.f32 %v938, %v720
  %v940 = vadd.f32 %v939, %v722
  %v941 = vadd.f32 %v940, %v725
  %v942 = vadd.f32 %v941, %v727
  %v943 = vadd.f32 %v942, %v730
  %v944 = vadd.f32 %v943, %v732
  %v945 = vadd.f32 %v944, %v735
  %v946 = vadd.f32 %v945, %v737
  %v947 = vadd.f32 %v946, %v740
  %v948 = vadd.f32 %v947, %v742
  %v949 = vadd.f32 %v948, %v745
  %v950 = vadd.f32 %v949, %v747
  %v951 = vadd.f32 %v950, %v750
  %v952 = vadd.f32 %v951, %v752
  %v953 = vadd.f32 %v952, %v755
  %v954 = vadd.f32 %v953, %v757
  %v955 = vadd.f32 %v954, %v760
  %v956 = vadd.f32 %v955, %v762
  %v957 = vadd.f32 %v956, %v765
  %v958 = vadd.f32 %v957, %v767
  %v959 = vadd.f32 %v958, %v770
  %v960 = vadd.f32 %v959, %v772
  %v961 = vadd.f32 %v960, %v775
  %v962 = vadd.f32 %v961, %v777
  %v963 = vadd.f32 %v962, %v780
  %v964 = vadd.f32 %v963, %v782
  %v965 = vadd.f32 %v964, %v785
  %v966 = vadd.f32 %v965, %v787
  %v967 = vadd.f32 %v966, %v790
  %v968 = vadd.f32 %v967, %v792
  %v969 = vadd.f32 %v968, %v795
  %v970 = vadd.f32 %v969, %v797
  %v971 = vadd.f32 %v970, %v800
  %v972 = vadd.f32 %v971, %v802
  %v973 = vadd.f32 %v972, %v805
  %v974 = vadd.f32 %v973, %v807
  %v975 = vadd.f32 %v974, %v810
  %v976 = vadd.f32 %v975, %v812
  %v977 = vadd.f32 %v976, %v815
  %v978 = vadd.f32 %v977, %v817
  %v979 = vadd.f32 %v978, %v820
  %v980 = vadd.f32 %v979, %v822
  %v981 = vadd.f32 %v980, %v825
  %v982 = vadd.f32 %v981, %v827
  %v983 = vadd.f32 %v982, %v830
  %v984 = vadd.f32 %v983, %v832
  %v985 = vadd.f32 %v984, %v835
  %v986 = vadd.f32 %v985, %v837
  %v987 = vadd.f32 %v986, %v840
  %v988 = vadd.f32 %v987, %v842
  %v989 = vadd.f32 %v988, %v845
  %v990 = vadd.f32 %v989, %v847
  %v991 = vadd.f32 %v990, %v850
  %v992 = vadd.f32 %v991, %v852
  %v993 = vadd.f32 %v992, %v855
  %v994 = vadd.f32 %v993, %v857
  %v995 = vadd.f32 %v994, %v860
  %v996 = vadd.f32 %v995, %v862
  %v997 = vadd.f32 %v996, %v865
  %v998 = vadd.f32 %v997, %v867
  %v999 = vadd.f32 %v998, %v870
  %v1000 = vadd.f32 %v999, %v872
  %v1001 = vrot.slane %v1000, 4
  %v1002 = vadd.f32 %v1000, %v1001
  %v1003 = vrot.slane %v1002, 2
  %v1004 = vadd.f32 %v1002, %v1003
  %v1005 = vrot.slane %v1004, 1
  %v1006 = vadd.f32 %v1004, %v1005
  %v1007 = vmul.f32 %v715, %v715
  %v1008 = vmul.f32 %v717, %v717
  %v1009 = vmul.f32 %v720, %v720
  %v1010 = vmul.f32 %v722, %v722
  %v1011 = vmul.f32 %v725, %v725
  %v1012 = vmul.f32 %v727, %v727
  %v1013 = vmul.f32 %v730, %v730
  %v1014 = vmul.f32 %v732, %v732
  %v1015 = vmul.f32 %v735, %v735
  %v1016 = vmul.f32 %v737, %v737
  %v1017 = vmul.f32 %v740, %v740
  %v1018 = vmul.f32 %v742, %v742
  %v1019 = vmul.f32 %v745, %v745
  %v1020 = vmul.f32 %v747, %v747
  %v1021 = vmul.f32 %v750, %v750
  %v1022 = vmul.f32 %v752, %v752
  %v1023 = vmul.f32 %v755, %v755
  %v1024 = vmul.f32 %v757, %v757
  %v1025 = vmul.f32 %v760, %v760
  %v1026 = vmul.f32 %v762, %v762
  %v1027 = vmul.f32 %v765, %v765
  %v1028 = vmul.f32 %v767, %v767
  %v1029 = vmul.f32 %v770, %v770
  %v1030 = vmul.f32 %v772, %v772
  %v1031 = vmul.f32 %v775, %v775
  %v1032 = vmul.f32 %v777, %v777
  %v1033 = vmul.f32 %v780, %v780
  %v1034 = vmul.f32 %v782, %v782
  %v1035 = vmul.f32 %v785, %v785
  %v1036 = vmul.f32 %v787, %v787
  %v1037 = vmul.f32 %v790, %v790
  %v1038 = vmul.f32 %v792, %v792
  %v1039 = vmul.f32 %v795, %v795
  %v1040 = vmul.f32 %v797, %v797
  %v1041 = vmul.f32 %v800, %v800
  %v1042 = vmul.f32 %v802, %v802
  %v1043 = vmul.f32 %v805, %v805
  %v1044 = vmul.f32 %v807, %v807
  %v1045 = vmul.f32 %v810, %v810
  %v1046 = vmul.f32 %v812, %v812
  %v1047 = vmul.f32 %v815, %v815
  %v1048 = vmul.f32 %v817, %v817
  %v1049 = vmul.f32 %v820, %v820
  %v1050 = vmul.f32 %v822, %v822
  %v1051 = vmul.f32 %v825, %v825
  %v1052 = vmul.f32 %v827, %v827
  %v1053 = vmul.f32 %v830, %v830
  %v1054 = vmul.f32 %v832, %v832
  %v1055 = vmul.f32 %v835, %v835
  %v1056 = vmul.f32 %v837, %v837
  %v1057 = vmul.f32 %v840, %v840
  %v1058 = vmul.f32 %v842, %v842
  %v1059 = vmul.f32 %v845, %v845
  %v1060 = vmul.f32 %v847, %v847
  %v1061 = vmul.f32 %v850, %v850
  %v1062 = vmul.f32 %v852, %v852
  %v1063 = vmul.f32 %v855, %v855
  %v1064 = vmul.f32 %v857, %v857
  %v1065 = vmul.f32 %v860, %v860
  %v1066 = vmul.f32 %v862, %v862
  %v1067 = vmul.f32 %v865, %v865
  %v1068 = vmul.f32 %v867, %v867
  %v1069 = vmul.f32 %v870, %v870
  %v1070 = vmul.f32 %v872, %v872
  %v1071 = vadd.f32 %v1007, %v1008
  %v1072 = vadd.f32 %v1071, %v1009
  %v1073 = vadd.f32 %v1072, %v1010
  %v1074 = vadd.f32 %v1073, %v1011
  %v1075 = vadd.f32 %v1074, %v1012
  %v1076 = vadd.f32 %v1075, %v1013
  %v1077 = vadd.f32 %v1076, %v1014
  %v1078 = vadd.f32 %v1077, %v1015
  %v1079 = vadd.f32 %v1078, %v1016
  %v1080 = vadd.f32 %v1079, %v1017
  %v1081 = vadd.f32 %v1080, %v1018
  %v1082 = vadd.f32 %v1081, %v1019
  %v1083 = vadd.f32 %v1082, %v1020
  %v1084 = vadd.f32 %v1083, %v1021
  %v1085 = vadd.f32 %v1084, %v1022
  %v1086 = vadd.f32 %v1085, %v1023
  %v1087 = vadd.f32 %v1086, %v1024
  %v1088 = vadd.f32 %v1087, %v1025
  %v1089 = vadd.f32 %v1088, %v1026
  %v1090 = vadd.f32 %v1089, %v1027
  %v1091 = vadd.f32 %v1090, %v1028
  %v1092 = vadd.f32 %v1091, %v1029
  %v1093 = vadd.f32 %v1092, %v1030
  %v1094 = vadd.f32 %v1093, %v1031
  %v1095 = vadd.f32 %v1094, %v1032
  %v1096 = vadd.f32 %v1095, %v1033
  %v1097 = vadd.f32 %v1096, %v1034
  %v1098 = vadd.f32 %v1097, %v1035
  %v1099 = vadd.f32 %v1098, %v1036
  %v1100 = vadd.f32 %v1099, %v1037
  %v1101 = vadd.f32 %v1100, %v1038
  %v1102 = vadd.f32 %v1101, %v1039
  %v1103 = vadd.f32 %v1102, %v1040
  %v1104 = vadd.f32 %v1103, %v1041
  %v1105 = vadd.f32 %v1104, %v1042
  %v1106 = vadd.f32 %v1105, %v1043
  %v1107 = vadd.f32 %v1106, %v1044
  %v1108 = vadd.f32 %v1107, %v1045
  %v1109 = vadd.f32 %v1108, %v1046
  %v1110 = vadd.f32 %v1109, %v1047
  %v1111 = vadd.f32 %v1110, %v1048
  %v1112 = vadd.f32 %v1111, %v1049
  %v1113 = vadd.f32 %v1112, %v1050
  %v1114 = vadd.f32 %v1113, %v1051
  %v1115 = vadd.f32 %v1114, %v1052
  %v1116 = vadd.f32 %v1115, %v1053
  %v1117 = vadd.f32 %v1116, %v1054
  %v1118 = vadd.f32 %v1117, %v1055
  %v1119 = vadd.f32 %v1118, %v1056
  %v1120 = vadd.f32 %v1119, %v1057
  %v1121 = vadd.f32 %v1120, %v1058
  %v1122 = vadd.f32 %v1121, %v1059
  %v1123 = vadd.f32 %v1122, %v1060
  %v1124 = vadd.f32 %v1123, %v1061
  %v1125 = vadd.f32 %v1124, %v1062
  %v1126 = vadd.f32 %v1125, %v1063
  %v1127 = vadd.f32 %v1126, %v1064
  %v1128 = vadd.f32 %v1127, %v1065
  %v1129 = vadd.f32 %v1128, %v1066
  %v1130 = vadd.f32 %v1129, %v1067
  %v1131 = vadd.f32 %v1130, %v1068
  %v1132 = vadd.f32 %v1131, %v1069
  %v1133 = vadd.f32 %v1132, %v1070
  %v1134 = vrot.slane %v1133, 4
  %v1135 = vadd.f32 %v1133, %v1134
  %v1136 = vrot.slane %v1135, 2
  %v1137 = vadd.f32 %v1135, %v1136
  %v1138 = vrot.slane %v1137, 1
  %v1139 = vadd.f32 %v1137, %v1138
  %1140 = vst [vmem:[%s3] sm:$0xff] %v1006
  %1141 = vst [vmem:[%s4] sm:$0xff] %v1139
  // Predicated region
  $region10: #{generator_forward.15} parent=0 // pred_check
    _
  $region11: #{generator_forward.15} parent=0 // pred_check_branch
    %1143 = sbr.rel (0) target = $region13
  $region12: #{generator_forward.15} parent=0 // pred_region
    _
  $region13: #{generator_forward.15} parent=0 // pred_fallthru
    _
  // Predicated region
  $region14: #{generator_forward.15} parent=0 // pred_check
    _
  $region15: #{generator_forward.15} parent=0 // pred_check_branch
    %1145 = sbr.rel (0) target = $region17
  $region16: #{generator_forward.15} parent=0 // pred_region
    _
  $region17: #{generator_forward.15} parent=0 // pred_fallthru
    _
  // Predicated region
  $region18: #{generator_forward.15} parent=0 // pred_check
    _
  $region19: #{generator_forward.15} parent=0 // pred_check_branch
    %1147 = sbr.rel (0) target = $region21
  $region20: #{generator_forward.15} parent=0 // pred_region
    _
  $region21: #{generator_forward.15} parent=0 // pred_fallthru
    _
  // Predicated region
  $region22: #{generator_forward.15} parent=0 // pred_check
    _
  $region23: #{generator_forward.15} parent=0 // pred_check_branch
    %1149 = sbr.rel (0) target = $region25
  $region24: #{generator_forward.15} parent=0 // pred_region
    _
  $region25: #{generator_forward.15} parent=0 // pred_fallthru
    _
  // Predicated region
  $region26: #{generator_forward.15} parent=0 // pred_check
    _
  $region27: #{generator_forward.15} parent=0 // pred_check_branch
    %1151 = sbr.rel (0) target = $region29
  $region28: #{generator_forward.15} parent=0 // pred_region
    _
  $region29: #{generator_forward.15} parent=0 // pred_fallthru
    _
  // Predicated region
  $region30: #{generator_forward.15} parent=0 // pred_check
    _
  $region31: #{generator_forward.15} parent=0 // pred_check_branch
    %1153 = sbr.rel (0) target = $region33
  $region32: #{generator_forward.15} parent=0 // pred_region
    _
  $region33: #{generator_forward.15} parent=0 // pred_fallthru
    _

// kernel: generator_forward.17
$region0: #{generator_forward.17}
  #allocation0 [shape = 'u32[]', space=smem, size = 0x4, offset = 0x4, fixed_abs, tag = 'smem constant byte address 0x4 - core index']
  #allocation1 [shape = 'u32[72,128]{1,0:T(1,128)}', space=vmem, size = 0x9000, scoped, tag = 'internal scratch']
  %s0 = inlined_call_operand.vmem [shape: bf16[2048,72], index: 0, kind: input, shape index: {}]
  %s1 = inlined_call_operand.vmem [shape: bf16[72,128], index: 1, kind: input, shape index: {}]
  %s2 = inlined_call_operand.vmem [shape: f32[2048,128], index: 2, kind: output, shape index: {}]
  %s3 = sld [smem:[#allocation0]]
  $region41: #{generator_forward.17} parent=0
    _
  %s5 = ssub.s32 1, %s3
  %s6 = scalar_select 0, %s5, %s3
  loop: start=0, step=1, limit=6
  $region2: #{generator_forward.17} parent=0 // loop_pre_header
    _
  $region3: #{generator_forward.17} parent=0 // loop_header
    %s8 = sphi 0, %s12
    %p9 = scmp.ge.s32.totalorder %s8, 6
    %s18 = sphi 0, %s20
    %s21 = sphi 0, %s18
    %s22 = sphi 0, %s21
    %s38 = sphi 0, %s22
    %s42 = sphi 0, %s42
    %s44 = sphi 0, %s42
    %s45 = sphi 0, %s44
    %s59 = sphi 0, %s45
    %s65 = sphi 0, %s67
    %s68 = sphi 0, %s65
    %s69 = sphi 0, %s68
    %s85 = sphi 0, %s69
  $region4: #{generator_forward.17} parent=0 // loop_header_branch
    %11 = sbr.rel (%p9) target = $region8
  $region5: #{generator_forward.17} parent=0 // loop_body
    %s13 = ssub.s32 %s8, 1
    %s14 = ssub.s32 %s8, 2
    %s15 = sadd.s32 %s8, 1
    %s16 = ssub.s32 %s8, %s15
    %p17 = scmp.eq.s32.totalorder %s16, 0
    %s19 = sadd.s32 %s18, 1
    %s20 = scalar_select %p17, %s18, %s19
    %p23 = pneg %p17
    %p24 = scmp.eq.s32.totalorder %s8, 3
    %p25 = por %p23, %p24
    %p26 = scmp.ne.s32.totalorder %s18, %s21
    %p27 = scmp.eq.s32.totalorder %s8, 0
    %p28 = por %p26, %p27
    %p29 = scmp.ne.s32.totalorder %s18, %s21
    %p30 = scmp.eq.s32.totalorder %s13, 3
    %p31 = por %p29, %p30
    %p32 = scmp.ne.s32.totalorder %s21, %s22
    %p33 = scmp.eq.s32.totalorder %s13, 0
    %p34 = por %p32, %p33
    %p35 = scmp.ne.s32.totalorder %s21, %s22
    %p36 = scmp.eq.s32.totalorder %s14, 3
    %p37 = por %p35, %p36
    %p39 = scmp.ne.s32.totalorder %s22, %s38
    %p40 = scmp.eq.s32.totalorder %s14, 0
    %p41 = por %p39, %p40
    %s43 = sadd.s32 %s42, 1
    %p46 = scmp.eq.s32.totalorder %s8, 3
    %p47 = scmp.ne.s32.totalorder %s42, %s44
    %p48 = scmp.eq.s32.totalorder %s8, 0
    %p49 = por %p47, %p48
    %p50 = scmp.ne.s32.totalorder %s42, %s44
    %p51 = scmp.eq.s32.totalorder %s13, 3
    %p52 = por %p50, %p51
    %p53 = scmp.ne.s32.totalorder %s44, %s45
    %p54 = scmp.eq.s32.totalorder %s13, 0
    %p55 = por %p53, %p54
    %p56 = scmp.ne.s32.totalorder %s44, %s45
    %p57 = scmp.eq.s32.totalorder %s14, 3
    %p58 = por %p56, %p57
    %p60 = scmp.ne.s32.totalorder %s45, %s59
    %p61 = scmp.eq.s32.totalorder %s14, 0
    %p62 = por %p60, %p61
    %s63 = ssub.s32 %s8, %s15
    %p64 = scmp.eq.s32.totalorder %s63, 0
    %s66 = sadd.s32 %s65, 1
    %s67 = scalar_select %p64, %s65, %s66
    %p70 = pneg %p64
    %p71 = scmp.eq.s32.totalorder %s8, 3
    %p72 = por %p70, %p71
    %p73 = scmp.ne.s32.totalorder %s65, %s68
    %p74 = scmp.eq.s32.totalorder %s8, 0
    %p75 = por %p73, %p74
    %p76 = scmp.ne.s32.totalorder %s65, %s68
    %p77 = scmp.eq.s32.totalorder %s13, 3
    %p78 = por %p76, %p77
    %p79 = scmp.ne.s32.totalorder %s68, %s69
    %p80 = scmp.eq.s32.totalorder %s13, 0
    %p81 = por %p79, %p80
    %p82 = scmp.ne.s32.totalorder %s68, %s69
    %p83 = scmp.eq.s32.totalorder %s14, 3
    %p84 = por %p82, %p83
    %p86 = scmp.ne.s32.totalorder %s69, %s85
    %p87 = scmp.eq.s32.totalorder %s14, 0
    %p88 = por %p86, %p87
    %p89 = scmp.le.s32.totalorder 1, %s8
    %p90 = scmp.lt.s32.totalorder %s8, 5
    %p91 = pnand %p89, %p90
    %p92 = pneg %p91
    // Predicated region
    $region9: #{generator_forward.17} parent=5 // pred_check
      _
    $region10: #{generator_forward.17} parent=5 // pred_check_branch
      %94 = sbr.rel (%p91) target = $region12
    $region11: #{generator_forward.17} parent=5 // pred_region
      %s95 = ssub.s32 %s8, 1
      // Predicated region
      $region13: #{generator_forward.17} parent=11 // pred_check
        %p96 = pneg %p55
      $region14: #{generator_forward.17} parent=11 // pred_check_branch
        %98 = sbr.rel (%p96) target = $region16
      $region15: #{generator_forward.17} parent=11 // pred_region
        _
      $region16: #{generator_forward.17} parent=11 // pred_fallthru
        _
    $region12: #{generator_forward.17} parent=5 // pred_fallthru
      _
    %p99 = scmp.lt.s32.totalorder %s8, 4
    // Predicated region
    $region17: #{generator_forward.17} parent=5 // pred_check
      %p100 = pneg %p99
    $region18: #{generator_forward.17} parent=5 // pred_check_branch
      %102 = sbr.rel (%p100) target = $region20
    $region19: #{generator_forward.17} parent=5 // pred_region
      // Predicated region
      $region21: #{generator_forward.17} parent=19 // pred_check
        %p103 = pneg %p28
      $region22: #{generator_forward.17} parent=19 // pred_check_branch
        %105 = sbr.rel (%p103) target = $region24
      $region23: #{generator_forward.17} parent=19 // pred_region
        %s106 = smul.u32 64, %s8
        %p107 = scmp.lt.s32.totalorder %s106, 255
        %s108 = scalar_select %p107, %s106, 255
        %s109 = smul.addr %s108, 4
        %s110 = scalar_lea.vmem %s0, %s109
        %s111 = smul.u32 64, %s8
      $region24: #{generator_forward.17} parent=19 // pred_fallthru
        _
    $region20: #{generator_forward.17} parent=5 // pred_fallthru
      _
    %p112 = scmp.le.s32.totalorder 1, %s8
    %p113 = scmp.lt.s32.totalorder %s8, 5
    %p114 = pnand %p112, %p113
    %p115 = pneg %p114
    // Predicated region
    $region25: #{generator_forward.17} parent=5 // pred_check
      _
    $region26: #{generator_forward.17} parent=5 // pred_check_branch
      %117 = sbr.rel (%p114) target = $region28
    $region27: #{generator_forward.17} parent=5 // pred_region
      %s118 = ssub.s32 %s8, 1
      %s119 = smul.u32 64, %s13
      %p120 = scmp.lt.s32.totalorder %s119, 255
      %s121 = scalar_select %p120, %s119, 255
      %s122 = smul.addr %s121, 4
      %s123 = scalar_lea.vmem %s0, %s122
      %p124 = pneg %p34
      %p125 = pneg %p31
      %p126 = pneg %p55
      %p127 = pneg %p52
      %p128 = pneg %p81
      %p129 = pneg %p78
      %s130 = smul.u32 64, %s13
      %p131 = scmp.lt.s32.totalorder %s130, 255
      %s132 = scalar_select %p131, %s130, 255
      %s133 = smul.addr %s132, 8
      %s134 = scalar_lea.vmem %s2, %s133
      %s135 = smul.u32 64, %s13
      %p136 = scmp.lt.s32.totalorder %s135, 255
      %s137 = scalar_select %p136, %s135, 255
      %s138 = smul.addr %s137, 4
      %s139 = scalar_lea.vmem %s0, %s138
      %s140 = smul.u32 64, %s13
      %s141 = smul.u32 64, %s13
      %p142 = scmp.lt.s32.totalorder %s141, 255
      %s143 = scalar_select %p142, %s141, 255
      %s144 = smul.addr %s143, 8
      %s145 = scalar_lea.vmem %s2, %s144
      %s146 = smul.u32 64, %s13
      %v148 = vld [vmem:[%s139] sm:$0xf]
      %v149 = vld [vmem:[%s139 + $0x4] sm:$0xf]
      %v150 = vld [vmem:[%s139 + $0x8] sm:$0xf]
      %v151 = vld [vmem:[%s139 + $0xc] sm:$0xf]
      %v152 = vld [vmem:[%s139 + $0x10] sm:$0xf]
      %v153 = vld [vmem:[%s139 + $0x14] sm:$0xf]
      %v154 = vld [vmem:[%s139 + $0x18] sm:$0xf]
      %v155 = vld [vmem:[%s139 + $0x1c] sm:$0xf]
      %v156 = vld [vmem:[%s139 + $0x20] sm:$0xf]
      %v157 = vld [vmem:[%s139 + $0x24] sm:$0xf]
      %v158 = vld [vmem:[%s139 + $0x28] sm:$0xf]
      %v159 = vld [vmem:[%s139 + $0x2c] sm:$0xf]
      %v160 = vld [vmem:[%s139 + $0x30] sm:$0xf]
      %v161 = vld [vmem:[%s139 + $0x34] sm:$0xf]
      %v162 = vld [vmem:[%s139 + $0x38] sm:$0xf]
      %v163 = vld [vmem:[%s139 + $0x3c] sm:$0xf]
      %v164 = vld [vmem:[%s139 + $0x40] sm:$0xf]
      %v165 = vld [vmem:[%s139 + $0x44] sm:$0xf]
      %v166 = vld [vmem:[%s139 + $0x48] sm:$0xf]
      %v167 = vld [vmem:[%s139 + $0x4c] sm:$0xf]
      %v168 = vld [vmem:[%s139 + $0x50] sm:$0xf]
      %v169 = vld [vmem:[%s139 + $0x54] sm:$0xf]
      %v170 = vld [vmem:[%s139 + $0x58] sm:$0xf]
      %v171 = vld [vmem:[%s139 + $0x5c] sm:$0xf]
      %v172 = vld [vmem:[%s139 + $0x60] sm:$0xf]
      %v173 = vld [vmem:[%s139 + $0x64] sm:$0xf]
      %v174 = vld [vmem:[%s139 + $0x68] sm:$0xf]
      %v175 = vld [vmem:[%s139 + $0x6c] sm:$0xf]
      %v176 = vld [vmem:[%s139 + $0x70] sm:$0xf]
      %v177 = vld [vmem:[%s139 + $0x74] sm:$0xf]
      %v178 = vld [vmem:[%s139 + $0x78] sm:$0xf]
      %v179 = vld [vmem:[%s139 + $0x7c] sm:$0xf]
      %v180 = vld [vmem:[%s139 + $0x80] sm:$0xf]
      %v181 = vld [vmem:[%s139 + $0x84] sm:$0xf]
      %v182 = vld [vmem:[%s139 + $0x88] sm:$0xf]
      %v183 = vld [vmem:[%s139 + $0x8c] sm:$0xf]
      %v184 = vld [vmem:[%s139 + $0x90] sm:$0xf]
      %v185 = vld [vmem:[%s139 + $0x94] sm:$0xf]
      %v186 = vld [vmem:[%s139 + $0x98] sm:$0xf]
      %v187 = vld [vmem:[%s139 + $0x9c] sm:$0xf]
      %v188 = vld [vmem:[%s139 + $0xa0] sm:$0xf]
      %v189 = vld [vmem:[%s139 + $0xa4] sm:$0xf]
      %v190 = vld [vmem:[%s139 + $0xa8] sm:$0xf]
      %v191 = vld [vmem:[%s139 + $0xac] sm:$0xf]
      %v192 = vld [vmem:[%s139 + $0xb0] sm:$0xf]
      %v193 = vld [vmem:[%s139 + $0xb4] sm:$0xf]
      %v194 = vld [vmem:[%s139 + $0xb8] sm:$0xf]
      %v195 = vld [vmem:[%s139 + $0xbc] sm:$0xf]
      %v196 = vld [vmem:[%s139 + $0xc0] sm:$0xf]
      %v197 = vld [vmem:[%s139 + $0xc4] sm:$0xf]
      %v198 = vld [vmem:[%s139 + $0xc8] sm:$0xf]
      %v199 = vld [vmem:[%s139 + $0xcc] sm:$0xf]
      %v200 = vld [vmem:[%s139 + $0xd0] sm:$0xf]
      %v201 = vld [vmem:[%s139 + $0xd4] sm:$0xf]
      %v202 = vld [vmem:[%s139 + $0xd8] sm:$0xf]
      %v203 = vld [vmem:[%s139 + $0xdc] sm:$0xf]
      %v204 = vld [vmem:[%s139 + $0xe0] sm:$0xf]
      %v205 = vld [vmem:[%s139 + $0xe4] sm:$0xf]
      %v206 = vld [vmem:[%s139 + $0xe8] sm:$0xf]
      %v207 = vld [vmem:[%s139 + $0xec] sm:$0xf]
      %v208 = vld [vmem:[%s139 + $0xf0] sm:$0xf]
      %v209 = vld [vmem:[%s139 + $0xf4] sm:$0xf]
      %v210 = vld [vmem:[%s139 + $0xf8] sm:$0xf]
      %v211 = vld [vmem:[%s139 + $0xfc] sm:$0xf]
      %v212 = vld [vmem:[%s1] sm:$0xf]
      %v213 = vld [vmem:[%s1 + $0x4] sm:$0xf]
      %v214 = vld [vmem:[%s1 + $0x8] sm:$0xf]
      %v215 = vld [vmem:[%s1 + $0xc] sm:$0xf]
      %v216 = vld [vmem:[%s1 + $0x10] sm:$0xf]
      %v217 = vld [vmem:[%s1 + $0x14] sm:$0xf]
      %v218 = vld [vmem:[%s1 + $0x18] sm:$0xf]
      %v219 = vld [vmem:[%s1 + $0x1c] sm:$0xf]
      %v220 = vld [vmem:[%s1 + $0x20] sm:$0xf]
      %v285 = vunpack.c.l.b16 %v148
      %v286 = vunpack.c.l.b16 %v149
      %v287 = vunpack.c.l.b16 %v150
      %v288 = vunpack.c.l.b16 %v151
      %v289 = vunpack.c.l.b16 %v152
      %v290 = vunpack.c.l.b16 %v153
      %v291 = vunpack.c.l.b16 %v154
      %v292 = vunpack.c.l.b16 %v155
      %v293 = vunpack.c.l.b16 %v156
      %v294 = vunpack.c.l.b16 %v157
      %v295 = vunpack.c.l.b16 %v158
      %v296 = vunpack.c.l.b16 %v159
      %v297 = vunpack.c.l.b16 %v160
      %v298 = vunpack.c.l.b16 %v161
      %v299 = vunpack.c.l.b16 %v162
      %v300 = vunpack.c.l.b16 %v163
      %v301 = vunpack.c.l.b16 %v164
      %v302 = vunpack.c.l.b16 %v165
      %v303 = vunpack.c.l.b16 %v166
      %v304 = vunpack.c.l.b16 %v167
      %v305 = vunpack.c.l.b16 %v168
      %v306 = vunpack.c.l.b16 %v169
      %v307 = vunpack.c.l.b16 %v170
      %v308 = vunpack.c.l.b16 %v171
      %v309 = vunpack.c.l.b16 %v172
      %v310 = vunpack.c.l.b16 %v173
      %v311 = vunpack.c.l.b16 %v174
      %v312 = vunpack.c.l.b16 %v175
      %v313 = vunpack.c.l.b16 %v176
      %v314 = vunpack.c.l.b16 %v177
      %v315 = vunpack.c.l.b16 %v178
      %v316 = vunpack.c.l.b16 %v179
      %v317 = vunpack.c.l.b16 %v180
      %v318 = vunpack.c.l.b16 %v181
      %v319 = vunpack.c.l.b16 %v182
      %v320 = vunpack.c.l.b16 %v183
      %v321 = vunpack.c.l.b16 %v184
      %v322 = vunpack.c.l.b16 %v185
      %v323 = vunpack.c.l.b16 %v186
      %v324 = vunpack.c.l.b16 %v187
      %v325 = vunpack.c.l.b16 %v188
      %v326 = vunpack.c.l.b16 %v189
      %v327 = vunpack.c.l.b16 %v190
      %v328 = vunpack.c.l.b16 %v191
      %v329 = vunpack.c.l.b16 %v192
      %v330 = vunpack.c.l.b16 %v193
      %v331 = vunpack.c.l.b16 %v194
      %v332 = vunpack.c.l.b16 %v195
      %v333 = vunpack.c.l.b16 %v196
      %v334 = vunpack.c.l.b16 %v197
      %v335 = vunpack.c.l.b16 %v198
      %v336 = vunpack.c.l.b16 %v199
      %v337 = vunpack.c.l.b16 %v200
      %v338 = vunpack.c.l.b16 %v201
      %v339 = vunpack.c.l.b16 %v202
      %v340 = vunpack.c.l.b16 %v203
      %v341 = vunpack.c.l.b16 %v204
      %v342 = vunpack.c.l.b16 %v205
      %v343 = vunpack.c.l.b16 %v206
      %v344 = vunpack.c.l.b16 %v207
      %v345 = vunpack.c.l.b16 %v208
      %v346 = vunpack.c.l.b16 %v209
      %v347 = vunpack.c.l.b16 %v210
      %v348 = vunpack.c.l.b16 %v211
      %v349 = vpack.c.b16 %v286, %v285
      %v350 = vpack.c.b16 %v288, %v287
      %v351 = vpack.c.b16 %v290, %v289
      %v352 = vpack.c.b16 %v292, %v291
      %v353 = vpack.c.b16 %v294, %v293
      %v354 = vpack.c.b16 %v296, %v295
      %v355 = vpack.c.b16 %v298, %v297
      %v356 = vpack.c.b16 %v300, %v299
      %v357 = vpack.c.b16 %v302, %v301
      %v358 = vpack.c.b16 %v304, %v303
      %v359 = vpack.c.b16 %v306, %v305
      %v360 = vpack.c.b16 %v308, %v307
      %v361 = vpack.c.b16 %v310, %v309
      %v362 = vpack.c.b16 %v312, %v311
      %v363 = vpack.c.b16 %v314, %v313
      %v364 = vpack.c.b16 %v316, %v315
      %v365 = vpack.c.b16 %v318, %v317
      %v366 = vpack.c.b16 %v320, %v319
      %v367 = vpack.c.b16 %v322, %v321
      %v368 = vpack.c.b16 %v324, %v323
      %v369 = vpack.c.b16 %v326, %v325
      %v370 = vpack.c.b16 %v328, %v327
      %v371 = vpack.c.b16 %v330, %v329
      %v372 = vpack.c.b16 %v332, %v331
      %v373 = vpack.c.b16 %v334, %v333
      %v374 = vpack.c.b16 %v336, %v335
      %v375 = vpack.c.b16 %v338, %v337
      %v376 = vpack.c.b16 %v340, %v339
      %v377 = vpack.c.b16 %v342, %v341
      %v378 = vpack.c.b16 %v344, %v343
      %v379 = vpack.c.b16 %v346, %v345
      %v380 = vpack.c.b16 %v348, %v347
      %v390 = vunpack.c.l.b16 %v212
      %v391 = vunpack.c.l.b16 %v213
      %v392 = vunpack.c.l.b16 %v214
      %v393 = vunpack.c.l.b16 %v215
      %v394 = vunpack.c.l.b16 %v216
      %v395 = vunpack.c.l.b16 %v217
      %v396 = vunpack.c.l.b16 %v218
      %v397 = vunpack.c.l.b16 %v219
      %v398 = vunpack.c.l.b16 %v220
      %v399 = vpack.c.b16 %v391, %v390
      %v400 = vpack.c.b16 %v393, %v392
      %v401 = vpack.c.b16 %v395, %v394
      %v402 = vpack.c.b16 %v397, %v396
      %v403 = vpack.c.b16 %v398, %v398
      %vm408 = vcmask 588800
      %v410 = vsel %vm408, %v349, 0
      %v413 = vsel %vm408, %v350, 0
      %v416 = vsel %vm408, %v351, 0
      %v419 = vsel %vm408, %v352, 0
      %v422 = vsel %vm408, %v353, 0
      %v425 = vsel %vm408, %v354, 0
      %v428 = vsel %vm408, %v355, 0
      %v431 = vsel %vm408, %v356, 0
      %v434 = vsel %vm408, %v357, 0
      %v437 = vsel %vm408, %v358, 0
      %v440 = vsel %vm408, %v359, 0
      %v443 = vsel %vm408, %v360, 0
      %v446 = vsel %vm408, %v361, 0
      %v449 = vsel %vm408, %v362, 0
      %v452 = vsel %vm408, %v363, 0
      %v455 = vsel %vm408, %v364, 0
      %v458 = vsel %vm408, %v365, 0
      %v461 = vsel %vm408, %v366, 0
      %v464 = vsel %vm408, %v367, 0
      %v467 = vsel %vm408, %v368, 0
      %v470 = vsel %vm408, %v369, 0
      %v473 = vsel %vm408, %v370, 0
      %v476 = vsel %vm408, %v371, 0
      %v479 = vsel %vm408, %v372, 0
      %v482 = vsel %vm408, %v373, 0
      %v485 = vsel %vm408, %v374, 0
      %v488 = vsel %vm408, %v375, 0
      %v491 = vsel %vm408, %v376, 0
      %v494 = vsel %vm408, %v377, 0
      %v497 = vsel %vm408, %v378, 0
      %v500 = vsel %vm408, %v379, 0
      %v503 = vsel %vm408, %v380, 0
      %vm505 = vcmask 1043456
      %v507 = vsel %vm505, %v403, 0
      %509 = vmatpush.bf16.msra.mxu0 0
      %510 = vmatpush.bf16.msra.mxu0 0
      %511 = vmatpush.bf16.msra.mxu0 0
      %512 = vmatpush.bf16.msra.mxu0 %v507
      %513 = vmatpush.bf16.msra.mxu0 %v402
      %514 = vmatpush.bf16.msra.mxu0 %v401
      %515 = vmatpush.bf16.msra.mxu0 %v400
      %516 = vmatpush.bf16.msra.mxu0 %v399
      %517 = vmatmul.bf16.gmra.mxu0 %v410
      %v518 = vpop.f32.mrf.mxu0
      %v519 = vadd.f32 0.0, %v518
      %v520 = vpop.f32.mrf.mxu0
      %v521 = vadd.f32 0.0, %v520
      %522 = vmatmul.bf16.gmra.mxu0 %v413
      %v523 = vpop.f32.mrf.mxu0
      %v524 = vadd.f32 0.0, %v523
      %v525 = vpop.f32.mrf.mxu0
      %v526 = vadd.f32 0.0, %v525
      %527 = vmatmul.bf16.gmra.mxu0 %v416
      %v528 = vpop.f32.mrf.mxu0
      %v529 = vadd.f32 0.0, %v528
      %v530 = vpop.f32.mrf.mxu0
      %v531 = vadd.f32 0.0, %v530
      %532 = vmatmul.bf16.gmra.mxu0 %v419
      %v533 = vpop.f32.mrf.mxu0
      %v534 = vadd.f32 0.0, %v533
      %v535 = vpop.f32.mrf.mxu0
      %v536 = vadd.f32 0.0, %v535
      %537 = vmatmul.bf16.gmra.mxu0 %v422
      %v538 = vpop.f32.mrf.mxu0
      %v539 = vadd.f32 0.0, %v538
      %v540 = vpop.f32.mrf.mxu0
      %v541 = vadd.f32 0.0, %v540
      %542 = vmatmul.bf16.gmra.mxu0 %v425
      %v543 = vpop.f32.mrf.mxu0
      %v544 = vadd.f32 0.0, %v543
      %v545 = vpop.f32.mrf.mxu0
      %v546 = vadd.f32 0.0, %v545
      %547 = vmatmul.bf16.gmra.mxu0 %v428
      %v548 = vpop.f32.mrf.mxu0
      %v549 = vadd.f32 0.0, %v548
      %v550 = vpop.f32.mrf.mxu0
      %v551 = vadd.f32 0.0, %v550
      %552 = vmatmul.bf16.gmra.mxu0 %v431
      %v553 = vpop.f32.mrf.mxu0
      %v554 = vadd.f32 0.0, %v553
      %v555 = vpop.f32.mrf.mxu0
      %v556 = vadd.f32 0.0, %v555
      %557 = vmatmul.bf16.gmra.mxu0 %v434
      %v558 = vpop.f32.mrf.mxu0
      %v559 = vadd.f32 0.0, %v558
      %v560 = vpop.f32.mrf.mxu0
      %v561 = vadd.f32 0.0, %v560
      %562 = vmatmul.bf16.gmra.mxu0 %v437
      %v563 = vpop.f32.mrf.mxu0
      %v564 = vadd.f32 0.0, %v563
      %v565 = vpop.f32.mrf.mxu0
      %v566 = vadd.f32 0.0, %v565
      %567 = vmatmul.bf16.gmra.mxu0 %v440
      %v568 = vpop.f32.mrf.mxu0
      %v569 = vadd.f32 0.0, %v568
      %v570 = vpop.f32.mrf.mxu0
      %v571 = vadd.f32 0.0, %v570
      %572 = vmatmul.bf16.gmra.mxu0 %v443
      %v573 = vpop.f32.mrf.mxu0
      %v574 = vadd.f32 0.0, %v573
      %v575 = vpop.f32.mrf.mxu0
      %v576 = vadd.f32 0.0, %v575
      %577 = vmatmul.bf16.gmra.mxu0 %v446
      %v578 = vpop.f32.mrf.mxu0
      %v579 = vadd.f32 0.0, %v578
      %v580 = vpop.f32.mrf.mxu0
      %v581 = vadd.f32 0.0, %v580
      %582 = vmatmul.bf16.gmra.mxu0 %v449
      %v583 = vpop.f32.mrf.mxu0
      %v584 = vadd.f32 0.0, %v583
      %v585 = vpop.f32.mrf.mxu0
      %v586 = vadd.f32 0.0, %v585
      %587 = vmatmul.bf16.gmra.mxu0 %v452
      %v588 = vpop.f32.mrf.mxu0
      %v589 = vadd.f32 0.0, %v588
      %v590 = vpop.f32.mrf.mxu0
      %v591 = vadd.f32 0.0, %v590
      %592 = vmatmul.bf16.gmra.mxu0 %v455
      %v593 = vpop.f32.mrf.mxu0
      %v594 = vadd.f32 0.0, %v593
      %v595 = vpop.f32.mrf.mxu0
      %v596 = vadd.f32 0.0, %v595
      %597 = vmatmul.bf16.gmra.mxu0 %v458
      %v598 = vpop.f32.mrf.mxu0
      %v599 = vadd.f32 0.0, %v598
      %v600 = vpop.f32.mrf.mxu0
      %v601 = vadd.f32 0.0, %v600
      %602 = vmatmul.bf16.gmra.mxu0 %v461
      %v603 = vpop.f32.mrf.mxu0
      %v604 = vadd.f32 0.0, %v603
      %v605 = vpop.f32.mrf.mxu0
      %v606 = vadd.f32 0.0, %v605
      %607 = vmatmul.bf16.gmra.mxu0 %v464
      %v608 = vpop.f32.mrf.mxu0
      %v609 = vadd.f32 0.0, %v608
      %v610 = vpop.f32.mrf.mxu0
      %v611 = vadd.f32 0.0, %v610
      %612 = vmatmul.bf16.gmra.mxu0 %v467
      %v613 = vpop.f32.mrf.mxu0
      %v614 = vadd.f32 0.0, %v613
      %v615 = vpop.f32.mrf.mxu0
      %v616 = vadd.f32 0.0, %v615
      %617 = vmatmul.bf16.gmra.mxu0 %v470
      %v618 = vpop.f32.mrf.mxu0
      %v619 = vadd.f32 0.0, %v618
      %v620 = vpop.f32.mrf.mxu0
      %v621 = vadd.f32 0.0, %v620
      %622 = vmatmul.bf16.gmra.mxu0 %v473
      %v623 = vpop.f32.mrf.mxu0
      %v624 = vadd.f32 0.0, %v623
      %v625 = vpop.f32.mrf.mxu0
      %v626 = vadd.f32 0.0, %v625
      %627 = vmatmul.bf16.gmra.mxu0 %v476
      %v628 = vpop.f32.mrf.mxu0
      %v629 = vadd.f32 0.0, %v628
      %v630 = vpop.f32.mrf.mxu0
      %v631 = vadd.f32 0.0, %v630
      %632 = vmatmul.bf16.gmra.mxu0 %v479
      %v633 = vpop.f32.mrf.mxu0
      %v634 = vadd.f32 0.0, %v633
      %v635 = vpop.f32.mrf.mxu0
      %v636 = vadd.f32 0.0, %v635
      %637 = vmatmul.bf16.gmra.mxu0 %v482
      %v638 = vpop.f32.mrf.mxu0
      %v639 = vadd.f32 0.0, %v638
      %v640 = vpop.f32.mrf.mxu0
      %v641 = vadd.f32 0.0, %v640
      %642 = vmatmul.bf16.gmra.mxu0 %v485
      %v643 = vpop.f32.mrf.mxu0
      %v644 = vadd.f32 0.0, %v643
      %v645 = vpop.f32.mrf.mxu0
      %v646 = vadd.f32 0.0, %v645
      %647 = vmatmul.bf16.gmra.mxu0 %v488
      %v648 = vpop.f32.mrf.mxu0
      %v649 = vadd.f32 0.0, %v648
      %v650 = vpop.f32.mrf.mxu0
      %v651 = vadd.f32 0.0, %v650
      %652 = vmatmul.bf16.gmra.mxu0 %v491
      %v653 = vpop.f32.mrf.mxu0
      %v654 = vadd.f32 0.0, %v653
      %v655 = vpop.f32.mrf.mxu0
      %v656 = vadd.f32 0.0, %v655
      %657 = vmatmul.bf16.gmra.mxu0 %v494
      %v658 = vpop.f32.mrf.mxu0
      %v659 = vadd.f32 0.0, %v658
      %v660 = vpop.f32.mrf.mxu0
      %v661 = vadd.f32 0.0, %v660
      %662 = vmatmul.bf16.gmra.mxu0 %v497
      %v663 = vpop.f32.mrf.mxu0
      %v664 = vadd.f32 0.0, %v663
      %v665 = vpop.f32.mrf.mxu0
      %v666 = vadd.f32 0.0, %v665
      %667 = vmatmul.bf16.gmra.mxu0 %v500
      %v668 = vpop.f32.mrf.mxu0
      %v669 = vadd.f32 0.0, %v668
      %v670 = vpop.f32.mrf.mxu0
      %v671 = vadd.f32 0.0, %v670
      %672 = vmatmul.bf16.gmra.mxu0 %v503
      %v673 = vpop.f32.mrf.mxu0
      %v674 = vadd.f32 0.0, %v673
      %v675 = vpop.f32.mrf.mxu0
      %v676 = vadd.f32 0.0, %v675
      %677 = vdwg.mxu0
      %v678 = vtanh.pop %v519
      %v679 = vtanh.pop %v521
      %v680 = vtanh.pop %v524
      %v681 = vtanh.pop %v526
      %v682 = vtanh.pop %v529
      %v683 = vtanh.pop %v531
      %v684 = vtanh.pop %v534
      %v685 = vtanh.pop %v536
      %v686 = vtanh.pop %v539
      %v687 = vtanh.pop %v541
      %v688 = vtanh.pop %v544
      %v689 = vtanh.pop %v546
      %v690 = vtanh.pop %v549
      %v691 = vtanh.pop %v551
      %v692 = vtanh.pop %v554
      %v693 = vtanh.pop %v556
      %v694 = vtanh.pop %v559
      %v695 = vtanh.pop %v561
      %v696 = vtanh.pop %v564
      %v697 = vtanh.pop %v566
      %v698 = vtanh.pop %v569
      %v699 = vtanh.pop %v571
      %v700 = vtanh.pop %v574
      %v701 = vtanh.pop %v576
      %v702 = vtanh.pop %v579
      %v703 = vtanh.pop %v581
      %v704 = vtanh.pop %v584
      %v705 = vtanh.pop %v586
      %v706 = vtanh.pop %v589
      %v707 = vtanh.pop %v591
      %v708 = vtanh.pop %v594
      %v709 = vtanh.pop %v596
      %v710 = vtanh.pop %v599
      %v711 = vtanh.pop %v601
      %v712 = vtanh.pop %v604
      %v713 = vtanh.pop %v606
      %v714 = vtanh.pop %v609
      %v715 = vtanh.pop %v611
      %v716 = vtanh.pop %v614
      %v717 = vtanh.pop %v616
      %v718 = vtanh.pop %v619
      %v719 = vtanh.pop %v621
      %v720 = vtanh.pop %v624
      %v721 = vtanh.pop %v626
      %v722 = vtanh.pop %v629
      %v723 = vtanh.pop %v631
      %v724 = vtanh.pop %v634
      %v725 = vtanh.pop %v636
      %v726 = vtanh.pop %v639
      %v727 = vtanh.pop %v641
      %v728 = vtanh.pop %v644
      %v729 = vtanh.pop %v646
      %v730 = vtanh.pop %v649
      %v731 = vtanh.pop %v651
      %v732 = vtanh.pop %v654
      %v733 = vtanh.pop %v656
      %v734 = vtanh.pop %v659
      %v735 = vtanh.pop %v661
      %v736 = vtanh.pop %v664
      %v737 = vtanh.pop %v666
      %v738 = vtanh.pop %v669
      %v739 = vtanh.pop %v671
      %v740 = vtanh.pop %v674
      %v741 = vtanh.pop %v676
      %742 = vst [vmem:[%s145] sm:$0xff] %v678
      %743 = vst [vmem:[%s145 + $0x8] sm:$0xff] %v679
      %744 = vst [vmem:[%s145 + $0x10] sm:$0xff] %v680
      %745 = vst [vmem:[%s145 + $0x18] sm:$0xff] %v681
      %746 = vst [vmem:[%s145 + $0x20] sm:$0xff] %v682
      %747 = vst [vmem:[%s145 + $0x28] sm:$0xff] %v683
      %748 = vst [vmem:[%s145 + $0x30] sm:$0xff] %v684
      %749 = vst [vmem:[%s145 + $0x38] sm:$0xff] %v685
      %750 = vst [vmem:[%s145 + $0x40] sm:$0xff] %v686
      %751 = vst [vmem:[%s145 + $0x48] sm:$0xff] %v687
      %752 = vst [vmem:[%s145 + $0x50] sm:$0xff] %v688
      %753 = vst [vmem:[%s145 + $0x58] sm:$0xff] %v689
      %754 = vst [vmem:[%s145 + $0x60] sm:$0xff] %v690
      %755 = vst [vmem:[%s145 + $0x68] sm:$0xff] %v691
      %756 = vst [vmem:[%s145 + $0x70] sm:$0xff] %v692
      %757 = vst [vmem:[%s145 + $0x78] sm:$0xff] %v693
      %758 = vst [vmem:[%s145 + $0x80] sm:$0xff] %v694
      %759 = vst [vmem:[%s145 + $0x88] sm:$0xff] %v695
      %760 = vst [vmem:[%s145 + $0x90] sm:$0xff] %v696
      %761 = vst [vmem:[%s145 + $0x98] sm:$0xff] %v697
      %762 = vst [vmem:[%s145 + $0xa0] sm:$0xff] %v698
      %763 = vst [vmem:[%s145 + $0xa8] sm:$0xff] %v699
      %764 = vst [vmem:[%s145 + $0xb0] sm:$0xff] %v700
      %765 = vst [vmem:[%s145 + $0xb8] sm:$0xff] %v701
      %766 = vst [vmem:[%s145 + $0xc0] sm:$0xff] %v702
      %767 = vst [vmem:[%s145 + $0xc8] sm:$0xff] %v703
      %768 = vst [vmem:[%s145 + $0xd0] sm:$0xff] %v704
      %769 = vst [vmem:[%s145 + $0xd8] sm:$0xff] %v705
      %770 = vst [vmem:[%s145 + $0xe0] sm:$0xff] %v706
      %771 = vst [vmem:[%s145 + $0xe8] sm:$0xff] %v707
      %772 = vst [vmem:[%s145 + $0xf0] sm:$0xff] %v708
      %773 = vst [vmem:[%s145 + $0xf8] sm:$0xff] %v709
      %774 = vst [vmem:[%s145 + $0x100] sm:$0xff] %v710
      %775 = vst [vmem:[%s145 + $0x108] sm:$0xff] %v711
      %776 = vst [vmem:[%s145 + $0x110] sm:$0xff] %v712
      %777 = vst [vmem:[%s145 + $0x118] sm:$0xff] %v713
      %778 = vst [vmem:[%s145 + $0x120] sm:$0xff] %v714
      %779 = vst [vmem:[%s145 + $0x128] sm:$0xff] %v715
      %780 = vst [vmem:[%s145 + $0x130] sm:$0xff] %v716
      %781 = vst [vmem:[%s145 + $0x138] sm:$0xff] %v717
      %782 = vst [vmem:[%s145 + $0x140] sm:$0xff] %v718
      %783 = vst [vmem:[%s145 + $0x148] sm:$0xff] %v719
      %784 = vst [vmem:[%s145 + $0x150] sm:$0xff] %v720
      %785 = vst [vmem:[%s145 + $0x158] sm:$0xff] %v721
      %786 = vst [vmem:[%s145 + $0x160] sm:$0xff] %v722
      %787 = vst [vmem:[%s145 + $0x168] sm:$0xff] %v723
      %788 = vst [vmem:[%s145 + $0x170] sm:$0xff] %v724
      %789 = vst [vmem:[%s145 + $0x178] sm:$0xff] %v725
      %790 = vst [vmem:[%s145 + $0x180] sm:$0xff] %v726
      %791 = vst [vmem:[%s145 + $0x188] sm:$0xff] %v727
      %792 = vst [vmem:[%s145 + $0x190] sm:$0xff] %v728
      %793 = vst [vmem:[%s145 + $0x198] sm:$0xff] %v729
      %794 = vst [vmem:[%s145 + $0x1a0] sm:$0xff] %v730
      %795 = vst [vmem:[%s145 + $0x1a8] sm:$0xff] %v731
      %796 = vst [vmem:[%s145 + $0x1b0] sm:$0xff] %v732
      %797 = vst [vmem:[%s145 + $0x1b8] sm:$0xff] %v733
      %798 = vst [vmem:[%s145 + $0x1c0] sm:$0xff] %v734
      %799 = vst [vmem:[%s145 + $0x1c8] sm:$0xff] %v735
      %800 = vst [vmem:[%s145 + $0x1d0] sm:$0xff] %v736
      %801 = vst [vmem:[%s145 + $0x1d8] sm:$0xff] %v737
      %802 = vst [vmem:[%s145 + $0x1e0] sm:$0xff] %v738
      %803 = vst [vmem:[%s145 + $0x1e8] sm:$0xff] %v739
      %804 = vst [vmem:[%s145 + $0x1f0] sm:$0xff] %v740
      %805 = vst [vmem:[%s145 + $0x1f8] sm:$0xff] %v741
      %s806 = smul.u32 64, %s13
      %p807 = scmp.lt.s32.totalorder %s806, 255
      %s808 = scalar_select %p807, %s806, 255
      %s809 = smul.addr %s808, 8
      %s810 = scalar_lea.vmem %s2, %s809
      // Predicated region
      $region29: #{generator_forward.17} parent=27 // pred_check
        %p811 = pneg %p78
      $region30: #{generator_forward.17} parent=27 // pred_check_branch
        %813 = sbr.rel (%p811) target = $region32
      $region31: #{generator_forward.17} parent=27 // pred_region
        %s814 = smul.u32 64, %s13
      $region32: #{generator_forward.17} parent=27 // pred_fallthru
        _
    $region28: #{generator_forward.17} parent=5 // pred_fallthru
      _
    %p815 = scmp.le.s32.totalorder 2, %s8
    // Predicated region
    $region33: #{generator_forward.17} parent=5 // pred_check
      %p816 = pneg %p815
    $region34: #{generator_forward.17} parent=5 // pred_check_branch
      %818 = sbr.rel (%p816) target = $region36
    $region35: #{generator_forward.17} parent=5 // pred_region
      %s819 = ssub.s32 %s8, 2
      // Predicated region
      $region37: #{generator_forward.17} parent=35 // pred_check
        %p820 = pneg %p84
      $region38: #{generator_forward.17} parent=35 // pred_check_branch
        %822 = sbr.rel (%p820) target = $region40
      $region39: #{generator_forward.17} parent=35 // pred_region
        %s823 = smul.u32 64, %s14
        %p824 = scmp.lt.s32.totalorder %s823, 255
        %s825 = scalar_select %p824, %s823, 255
        %s826 = smul.addr %s825, 8
        %s827 = scalar_lea.vmem %s2, %s826
      $region40: #{generator_forward.17} parent=35 // pred_fallthru
        _
    $region36: #{generator_forward.17} parent=5 // pred_fallthru
      _
  $region6: #{generator_forward.17} parent=0 // loop_footer
    %s12 = sadd.s32 1, %s8
  $region7: #{generator_forward.17} parent=0 // loop_footer_branch
    %7 = sbr.rel target = $region3
  $region8: #{generator_forward.17} parent=0 // loop_exit
    _

</llo_original>
